<compile_context>
chip_gen: v7x
topology: tpu7x:2x2x1
jax: 0.10.0
libtpu: 0.0.40
codegen_flags: <defaults>
</compile_context>

<pallas_src>
import functools
import math

import jax
import jax.numpy as jnp
from jax.experimental import pallas as pl
from jax.experimental.pallas import tpu as pltpu


# ----------------------------------------------------------------------------
# Layer specs (mirror the PyTorch SSRN nn.Sequential)
# ----------------------------------------------------------------------------

def ssrn_layer_specs(f, c, fp):
    return [
        ("conv", f, c, 1, 1),
        ("hc", c, 3, 1),
        ("hc", c, 3, 3),
        ("deconv", c, c),
        ("hc", c, 3, 1),
        ("hc", c, 3, 3),
        ("deconv", c, c),
        ("hc", c, 3, 1),
        ("hc", c, 3, 3),
        ("conv", c, 2 * c, 1, 1),
        ("hc", 2 * c, 3, 1),
        ("hc", 2 * c, 3, 1),
        ("conv", 2 * c, fp, 1, 1),
        ("hc", fp, 1, 1),
        ("conv_sigmoid", fp, fp, 1, 1),
    ]


def _layer_geometry(specs, f, T):
    """(max channel count, max halo pad, final time length) over the stack."""
    c_max, pad_max, t_cur = f, 0, T
    for spec in specs:
        kind = spec[0]
        if kind == "deconv":
            co = spec[2]
            t_cur *= 2
        elif kind == "hc":
            _, d, k, dil = spec
            co = d
            pad_max = max(pad_max, (k - 1) * dil // 2)
        else:  # conv / conv_sigmoid
            _, _ci, co, k, dil = spec
            pad_max = max(pad_max, (k - 1) * dil // 2)
        c_max = max(c_max, co)
    return c_max, pad_max, t_cur


# ----------------------------------------------------------------------------
# Fused Pallas kernel: the entire SSRN forward for one batch element
# ----------------------------------------------------------------------------

def _ssrn_fused_kernel(*refs, specs, T, lpad):
    n = len(specs)
    x_ref = refs[0]
    wb = refs[1:1 + 2 * n]                       # (w0, b0, w1, b1, ...)
    zl_ref, z_ref = refs[1 + 2 * n], refs[2 + 2 * n]
    bufs = [refs[3 + 2 * n], refs[4 + 2 * n]]    # VMEM ping-pong activations

    # Zero both scratch buffers so the halo margins act as 'same' zero padding.
    # Re-done every grid step because scratch persists across steps/cores.
    # (Margin correctness relies on T being non-decreasing through the stack,
    #  which holds for SSRN: deconvs only ever double T.)
    bufs[0][...] = jnp.zeros_like(bufs[0])
    bufs[1][...] = jnp.zeros_like(bufs[1])

    f_in = x_ref.shape[1]
    bufs[0][0:f_in, lpad:lpad + T] = x_ref[0]    # stage the input mel

    src, dst = 0, 1
    t_cur = T
    for li, spec in enumerate(specs):
        w = wb[2 * li][...]                      # bf16 (O, k*Ci)
        b = wb[2 * li + 1][...]                  # f32  (O, 1)
        kind = spec[0]

        if kind == "deconv":                     # ConvTranspose1d(k=2, s=2)
            _, ci, co = spec
            xv = bufs[src][0:ci, lpad:lpad + t_cur].astype(w.dtype)
            y0 = jnp.dot(w[:, 0:ci], xv, preferred_element_type=jnp.float32)
            y1 = jnp.dot(w[:, ci:2 * ci], xv, preferred_element_type=jnp.float32)
            # MXU-side tap interleave: out[:, 2t + j] = y_j[:, t].
            row = jax.lax.broadcasted_iota(jnp.int32, (t_cur, 2 * t_cur), 0)
            col = jax.lax.broadcasted_iota(jnp.int32, (t_cur, 2 * t_cur), 1)
            s0 = (col == 2 * row).astype(jnp.float32)
            s1 = (col == 2 * row + 1).astype(jnp.float32)
            out = (jnp.dot(y0, s0, preferred_element_type=jnp.float32)
                   + jnp.dot(y1, s1, preferred_element_type=jnp.float32)) + b
            t_cur = 2 * t_cur
            bufs[dst][0:co, lpad:lpad + t_cur] = out
            src, dst = dst, src
            continue

        if kind == "hc":
            _, d, k, dil = spec
            ci, co = d, 2 * d
        else:  # conv / conv_sigmoid
            _, ci, co, k, dil = spec
        hpad = (k - 1) * dil // 2

        # im2col-style stack of the k dilated taps -> one (O,k*Ci)x(k*Ci,T)
        # MXU matmul instead of k tiny ones; halo taps read pre-zeroed margin.
        taps = [bufs[src][0:ci,
                          lpad - hpad + j * dil:lpad - hpad + j * dil + t_cur]
                for j in range(k)]
        xs = taps[0] if k == 1 else jnp.concatenate(taps, axis=0)
        y = jnp.dot(w, xs.astype(w.dtype),
                    preferred_element_type=jnp.float32) + b

        if kind == "hc":
            xin = bufs[src][0:d, lpad:lpad + t_cur]
            g = jax.nn.sigmoid(y[0:d, :])
            # g*H2 + (1-g)*x  ==  x + g*(H2 - x)   (one fewer VPU pass)
            bufs[dst][0:d, lpad:lpad + t_cur] = xin + g * (y[d:2 * d, :] - xin)
        elif kind == "conv":
            bufs[dst][0:co, lpad:lpad + t_cur] = y
        else:  # conv_sigmoid: final layer writes the network outputs
            zl_ref[0] = y
            z_ref[0] = jax.nn.sigmoid(y)
        src, dst = dst, src


# ----------------------------------------------------------------------------
# Parameters (deterministic synthetic init; weight_norm is a no-op here)
# ----------------------------------------------------------------------------

def _init_conv(key, k, out_c, in_c):
    std = 1.0 / math.sqrt(in_c * k)
    w = std * jax.random.normal(key, (k, out_c, in_c), jnp.float32)
    # flatten taps into the contraction axis: w_flat[o, j*in_c + i] = w[j, o, i]
    w_flat = jnp.transpose(w, (1, 0, 2)).reshape(out_c, k * in_c)
    return {"w": w_flat.astype(jnp.bfloat16),     # bf16 weights, f32 accumulate
            "b": jnp.zeros((out_c, 1), jnp.float32)}


def init_ssrn_params(key, f, c, fp):
    specs = ssrn_layer_specs(f, c, fp)
    keys = jax.random.split(key, len(specs))
    params = []
    for kk, spec in zip(keys, specs):
        kind = spec[0]
        if kind in ("conv", "conv_sigmoid"):
            _, ci, co, k, _dil = spec
            params.append(_init_conv(kk, k, co, ci))
        elif kind == "hc":
            _, d, k, _dil = spec
            params.append(_init_conv(kk, k, 2 * d, d))
        else:  # deconv (ConvTranspose1d, kernel=2, stride=2)
            _, ci, co = spec
            params.append(_init_conv(kk, 2, co, ci))
    return params


# ----------------------------------------------------------------------------
# pallas_call wrapper
# ----------------------------------------------------------------------------

def _cost_estimate(specs, B, T, x_nbytes, w_nbytes, out_nbytes):
    flops, transc, t_cur = 0, 0, T
    for spec in specs:
        kind = spec[0]
        if kind == "deconv":
            _, ci, co = spec
            flops += B * (2 * co * (2 * ci) * t_cur            # tap matmuls
                          + 2 * 2 * co * t_cur * (2 * t_cur))  # spread matmuls
            t_cur *= 2
        elif kind == "hc":
            _, d, k, _dil = spec
            flops += B * (2 * (2 * d) * (k * d) * t_cur + 4 * d * t_cur)
            transc += B * d * t_cur
        else:
            _, ci, co, k, _dil = spec
            flops += B * 2 * co * (k * ci) * t_cur
            if kind == "conv_sigmoid":
                transc += B * co * t_cur
    return pl.CostEstimate(flops=flops, transcendentals=transc,
                           bytes_accessed=x_nbytes + w_nbytes + out_nbytes)


def ssrn_forward(params, x, f, c, fp):
    specs = ssrn_layer_specs(f, c, fp)
    B, f_in, T = x.shape
    assert f_in == f
    c_max, pad_max, t_out = _layer_geometry(specs, f, T)

    lpad = 128                       # lane-tile-aligned activation start
    assert lpad >= pad_max
    buf_w = lpad + t_out + pad_max   # left halo + max T + right halo

    flat_inputs = [x]
    in_specs = [pl.BlockSpec((1, f, T), lambda bb: (bb, 0, 0))]
    for p in params:
        flat_inputs += [p["w"], p["b"]]
        in_specs.append(pl.BlockSpec(p["w"].shape, lambda bb: (0, 0)))
        in_specs.append(pl.BlockSpec(p["b"].shape, lambda bb: (0, 0)))

    out_shape = (jax.ShapeDtypeStruct((B, fp, t_out), jnp.float32),
                 jax.ShapeDtypeStruct((B, fp, t_out), jnp.float32))
    out_specs = (pl.BlockSpec((1, fp, t_out), lambda bb: (bb, 0, 0)),
                 pl.BlockSpec((1, fp, t_out), lambda bb: (bb, 0, 0)))

    scratch = [pltpu.VMEM((c_max, buf_w), jnp.float32),
               pltpu.VMEM((c_max, buf_w), jnp.float32)]

    w_nbytes = sum(int(p["w"].nbytes) + int(p["b"].nbytes) for p in params)
    cost = _cost_estimate(specs, B, T, int(x.nbytes), w_nbytes,
                          2 * B * fp * t_out * 4)

    kernel = functools.partial(_ssrn_fused_kernel, specs=tuple(specs),
                               T=T, lpad=lpad)
    return pl.pallas_call(
        kernel,
        out_shape=out_shape,
        grid=(B,),
        in_specs=in_specs,
        out_specs=out_specs,
        scratch_shapes=scratch,
        compiler_params=pltpu.CompilerParams(
            dimension_semantics=("parallel",)),
        cost_estimate=cost,
    )(*flat_inputs)


# ----------------------------------------------------------------------------

if __name__ == "__main__":
    # small synthetic shapes: B=2, n_mels f=16, SSRN width c=32, f_prime=64, T=16
    B, f, c, fp, T = 2, 16, 32, 64, 16

    key_x, key_p = jax.random.split(jax.random.PRNGKey(0))
    x = jax.random.normal(key_x, (B, f, T), jnp.float32)
    params = init_ssrn_params(key_p, f=f, c=c, fp=fp)

    Z_logit, Z = ssrn_forward(params, x, f=f, c=c, fp=fp)
    jax.block_until_ready((Z_logit, Z))

    assert Z_logit.shape == (B, fp, 4 * T), Z_logit.shape
    assert Z.shape == (B, fp, 4 * T), Z.shape
    assert bool(jnp.all(jnp.isfinite(Z_logit))) and bool(jnp.all(jnp.isfinite(Z)))
    assert bool(jnp.all(Z >= 0.0)) and bool(jnp.all(Z <= 1.0))
    print("KERNEL_OK")
</pallas_src>

<mosaic_0001>
module attributes {stable_mosaic.version = 11 : i64} {
  func.func @_ssrn_fused_kernel(%arg0: i32, %arg1: memref<1x16x16xf32, #tpu.memory_space<vmem>>, %arg2: memref<32x16xbf16, #tpu.memory_space<vmem>>, %arg3: memref<32x1xf32, #tpu.memory_space<vmem>>, %arg4: memref<64x96xbf16, #tpu.memory_space<vmem>>, %arg5: memref<64x1xf32, #tpu.memory_space<vmem>>, %arg6: memref<64x96xbf16, #tpu.memory_space<vmem>>, %arg7: memref<64x1xf32, #tpu.memory_space<vmem>>, %arg8: memref<32x64xbf16, #tpu.memory_space<vmem>>, %arg9: memref<32x1xf32, #tpu.memory_space<vmem>>, %arg10: memref<64x96xbf16, #tpu.memory_space<vmem>>, %arg11: memref<64x1xf32, #tpu.memory_space<vmem>>, %arg12: memref<64x96xbf16, #tpu.memory_space<vmem>>, %arg13: memref<64x1xf32, #tpu.memory_space<vmem>>, %arg14: memref<32x64xbf16, #tpu.memory_space<vmem>>, %arg15: memref<32x1xf32, #tpu.memory_space<vmem>>, %arg16: memref<64x96xbf16, #tpu.memory_space<vmem>>, %arg17: memref<64x1xf32, #tpu.memory_space<vmem>>, %arg18: memref<64x96xbf16, #tpu.memory_space<vmem>>, %arg19: memref<64x1xf32, #tpu.memory_space<vmem>>, %arg20: memref<64x32xbf16, #tpu.memory_space<vmem>>, %arg21: memref<64x1xf32, #tpu.memory_space<vmem>>, %arg22: memref<128x192xbf16, #tpu.memory_space<vmem>>, %arg23: memref<128x1xf32, #tpu.memory_space<vmem>>, %arg24: memref<128x192xbf16, #tpu.memory_space<vmem>>, %arg25: memref<128x1xf32, #tpu.memory_space<vmem>>, %arg26: memref<64x64xbf16, #tpu.memory_space<vmem>>, %arg27: memref<64x1xf32, #tpu.memory_space<vmem>>, %arg28: memref<128x64xbf16, #tpu.memory_space<vmem>>, %arg29: memref<128x1xf32, #tpu.memory_space<vmem>>, %arg30: memref<64x64xbf16, #tpu.memory_space<vmem>>, %arg31: memref<64x1xf32, #tpu.memory_space<vmem>>, %arg32: memref<1x64x64xf32, #tpu.memory_space<vmem>>, %arg33: memref<1x64x64xf32, #tpu.memory_space<vmem>>, %arg34: memref<64x195xf32, #tpu.memory_space<vmem>>, %arg35: memref<64x195xf32, #tpu.memory_space<vmem>>) attributes {dimension_semantics = [#tpu.dimension_semantics<parallel>], iteration_bounds = array<i64: 2>, scalar_prefetch = 0 : i64, scratch_operands = 2 : i64, tpu.core_type = #tpu.core_type<tc>, window_params = [{transform_indices = @transform_0, window_bounds = array<i64: 1, 16, 16>}, {pipeline_mode = #tpu.pipeline_mode<synchronous>, transform_indices = @transform_1, window_bounds = array<i64: 32, 16>}, {pipeline_mode = #tpu.pipeline_mode<synchronous>, transform_indices = @transform_2, window_bounds = array<i64: 32, 1>}, {pipeline_mode = #tpu.pipeline_mode<synchronous>, transform_indices = @transform_3, window_bounds = array<i64: 64, 96>}, {pipeline_mode = #tpu.pipeline_mode<synchronous>, transform_indices = @transform_4, window_bounds = array<i64: 64, 1>}, {pipeline_mode = #tpu.pipeline_mode<synchronous>, transform_indices = @transform_5, window_bounds = array<i64: 64, 96>}, {pipeline_mode = #tpu.pipeline_mode<synchronous>, transform_indices = @transform_6, window_bounds = array<i64: 64, 1>}, {pipeline_mode = #tpu.pipeline_mode<synchronous>, transform_indices = @transform_7, window_bounds = array<i64: 32, 64>}, {pipeline_mode = #tpu.pipeline_mode<synchronous>, transform_indices = @transform_8, window_bounds = array<i64: 32, 1>}, {pipeline_mode = #tpu.pipeline_mode<synchronous>, transform_indices = @transform_9, window_bounds = array<i64: 64, 96>}, {pipeline_mode = #tpu.pipeline_mode<synchronous>, transform_indices = @transform_10, window_bounds = array<i64: 64, 1>}, {pipeline_mode = #tpu.pipeline_mode<synchronous>, transform_indices = @transform_11, window_bounds = array<i64: 64, 96>}, {pipeline_mode = #tpu.pipeline_mode<synchronous>, transform_indices = @transform_12, window_bounds = array<i64: 64, 1>}, {pipeline_mode = #tpu.pipeline_mode<synchronous>, transform_indices = @transform_13, window_bounds = array<i64: 32, 64>}, {pipeline_mode = #tpu.pipeline_mode<synchronous>, transform_indices = @transform_14, window_bounds = array<i64: 32, 1>}, {pipeline_mode = #tpu.pipeline_mode<synchronous>, transform_indices = @transform_15, window_bounds = array<i64: 64, 96>}, {pipeline_mode = #tpu.pipeline_mode<synchronous>, transform_indices = @transform_16, window_bounds = array<i64: 64, 1>}, {pipeline_mode = #tpu.pipeline_mode<synchronous>, transform_indices = @transform_17, window_bounds = array<i64: 64, 96>}, {pipeline_mode = #tpu.pipeline_mode<synchronous>, transform_indices = @transform_18, window_bounds = array<i64: 64, 1>}, {pipeline_mode = #tpu.pipeline_mode<synchronous>, transform_indices = @transform_19, window_bounds = array<i64: 64, 32>}, {pipeline_mode = #tpu.pipeline_mode<synchronous>, transform_indices = @transform_20, window_bounds = array<i64: 64, 1>}, {pipeline_mode = #tpu.pipeline_mode<synchronous>, transform_indices = @transform_21, window_bounds = array<i64: 128, 192>}, {pipeline_mode = #tpu.pipeline_mode<synchronous>, transform_indices = @transform_22, window_bounds = array<i64: 128, 1>}, {pipeline_mode = #tpu.pipeline_mode<synchronous>, transform_indices = @transform_23, window_bounds = array<i64: 128, 192>}, {pipeline_mode = #tpu.pipeline_mode<synchronous>, transform_indices = @transform_24, window_bounds = array<i64: 128, 1>}, {pipeline_mode = #tpu.pipeline_mode<synchronous>, transform_indices = @transform_25, window_bounds = array<i64: 64, 64>}, {pipeline_mode = #tpu.pipeline_mode<synchronous>, transform_indices = @transform_26, window_bounds = array<i64: 64, 1>}, {pipeline_mode = #tpu.pipeline_mode<synchronous>, transform_indices = @transform_27, window_bounds = array<i64: 128, 64>}, {pipeline_mode = #tpu.pipeline_mode<synchronous>, transform_indices = @transform_28, window_bounds = array<i64: 128, 1>}, {pipeline_mode = #tpu.pipeline_mode<synchronous>, transform_indices = @transform_29, window_bounds = array<i64: 64, 64>}, {pipeline_mode = #tpu.pipeline_mode<synchronous>, transform_indices = @transform_30, window_bounds = array<i64: 64, 1>}, {transform_indices = @transform_31, window_bounds = array<i64: 1, 64, 64>}, {transform_indices = @transform_32, window_bounds = array<i64: 1, 64, 64>}]} {
    %cst = arith.constant 0.000000e+00 : f32
    %0 = vector.broadcast %cst : f32 to vector<64x195xf32>
    %c0 = arith.constant 0 : index
    %c0_0 = arith.constant 0 : index
    %1 = vector.load %arg34[%c0, %c0_0] : memref<64x195xf32, #tpu.memory_space<vmem>>, vector<64x195xf32>
    tpu.vector_store %arg34[%c0, %c0_0], %0 {strides = array<i32>} : memref<64x195xf32, #tpu.memory_space<vmem>>, vector<64x195xf32>,
    %cst_1 = arith.constant 0.000000e+00 : f32
    %2 = vector.broadcast %cst_1 : f32 to vector<64x195xf32>
    %c0_2 = arith.constant 0 : index
    %c0_3 = arith.constant 0 : index
    %3 = vector.load %arg35[%c0_2, %c0_3] : memref<64x195xf32, #tpu.memory_space<vmem>>, vector<64x195xf32>
    tpu.vector_store %arg35[%c0_2, %c0_3], %2 {strides = array<i32>} : memref<64x195xf32, #tpu.memory_space<vmem>>, vector<64x195xf32>,
    %c0_4 = arith.constant 0 : index
    %c0_5 = arith.constant 0 : index
    %c0_6 = arith.constant 0 : index
    %4 = vector.load %arg1[%c0_4, %c0_5, %c0_6] : memref<1x16x16xf32, #tpu.memory_space<vmem>>, vector<1x16x16xf32>
    %5 = vector.shape_cast %4 : vector<1x16x16xf32> to vector<16x16xf32>
    %c0_7 = arith.constant 0 : index
    %c128 = arith.constant 128 : index
    %6 = vector.load %arg34[%c0_7, %c128] : memref<64x195xf32, #tpu.memory_space<vmem>>, vector<16x16xf32>
    tpu.vector_store %arg34[%c0_7, %c128], %5 {strides = array<i32>} : memref<64x195xf32, #tpu.memory_space<vmem>>, vector<16x16xf32>,
    %c0_8 = arith.constant 0 : index
    %c0_9 = arith.constant 0 : index
    %7 = vector.load %arg2[%c0_8, %c0_9] : memref<32x16xbf16, #tpu.memory_space<vmem>>, vector<32x16xbf16>
    %c0_10 = arith.constant 0 : index
    %c0_11 = arith.constant 0 : index
    %8 = vector.load %arg3[%c0_10, %c0_11] : memref<32x1xf32, #tpu.memory_space<vmem>>, vector<32x1xf32>
    %c0_12 = arith.constant 0 : index
    %c128_13 = arith.constant 128 : index
    %9 = vector.load %arg34[%c0_12, %c128_13] : memref<64x195xf32, #tpu.memory_space<vmem>>, vector<16x16xf32>
    %10 = arith.truncf %9 : vector<16x16xf32> to vector<16x16xbf16>
    %cst_14 = arith.constant dense<0.000000e+00> : vector<32x16xf32>
    %11 = tpu.matmul %7, %10, %cst_14 {dimension_numbers = #tpu.dot_dimension_numbers<[1], [0], [0], [1], [0, 0, 1, 1], [], []>} : vector<32x16xbf16>, vector<16x16xbf16>, vector<32x16xf32> -> vector<32x16xf32>
    %12 = vector.broadcast %8 : vector<32x1xf32> to vector<32x16xf32>
    %13 = arith.addf %11, %12 : vector<32x16xf32>
    %c0_15 = arith.constant 0 : index
    %c128_16 = arith.constant 128 : index
    %14 = vector.load %arg35[%c0_15, %c128_16] : memref<64x195xf32, #tpu.memory_space<vmem>>, vector<32x16xf32>
    tpu.vector_store %arg35[%c0_15, %c128_16], %13 {strides = array<i32>} : memref<64x195xf32, #tpu.memory_space<vmem>>, vector<32x16xf32>,
    %c0_17 = arith.constant 0 : index
    %c0_18 = arith.constant 0 : index
    %15 = vector.load %arg4[%c0_17, %c0_18] : memref<64x96xbf16, #tpu.memory_space<vmem>>, vector<64x96xbf16>
    %c0_19 = arith.constant 0 : index
    %c0_20 = arith.constant 0 : index
    %16 = vector.load %arg5[%c0_19, %c0_20] : memref<64x1xf32, #tpu.memory_space<vmem>>, vector<64x1xf32>
    %c0_21 = arith.constant 0 : index
    %c127 = arith.constant 127 : index
    %17 = vector.load %arg35[%c0_21, %c127] : memref<64x195xf32, #tpu.memory_space<vmem>>, vector<32x16xf32>
    %c0_22 = arith.constant 0 : index
    %c128_23 = arith.constant 128 : index
    %18 = vector.load %arg35[%c0_22, %c128_23] : memref<64x195xf32, #tpu.memory_space<vmem>>, vector<32x16xf32>
    %c0_24 = arith.constant 0 : index
    %c129 = arith.constant 129 : index
    %19 = vector.load %arg35[%c0_24, %c129] : memref<64x195xf32, #tpu.memory_space<vmem>>, vector<32x16xf32>
    %20 = tpu.concatenate %17, %18, %19 in 0 : vector<32x16xf32>, vector<32x16xf32>, vector<32x16xf32> -> vector<96x16xf32>
    %21 = arith.truncf %20 : vector<96x16xf32> to vector<96x16xbf16>
    %cst_25 = arith.constant dense<0.000000e+00> : vector<64x16xf32>
    %22 = tpu.matmul %15, %21, %cst_25 {dimension_numbers = #tpu.dot_dimension_numbers<[1], [0], [0], [1], [0, 0, 1, 1], [], []>} : vector<64x96xbf16>, vector<96x16xbf16>, vector<64x16xf32> -> vector<64x16xf32>
    %23 = vector.broadcast %16 : vector<64x1xf32> to vector<64x16xf32>
    %24 = arith.addf %22, %23 : vector<64x16xf32>
    %c0_26 = arith.constant 0 : index
    %c128_27 = arith.constant 128 : index
    %25 = vector.load %arg35[%c0_26, %c128_27] : memref<64x195xf32, #tpu.memory_space<vmem>>, vector<32x16xf32>
    %26 = vector.extract_strided_slice %24 {offsets = [0, 0], sizes = [32, 16], strides = [1, 1]} : vector<64x16xf32> to vector<32x16xf32>
    %27 = arith.negf %26 : vector<32x16xf32>
    %28 = math.exp %27 : vector<32x16xf32>
    %cst_28 = arith.constant 1.000000e+00 : f32
    %29 = vector.broadcast %cst_28 : f32 to vector<32x16xf32>
    %30 = arith.addf %29, %28 : vector<32x16xf32>
    %31 = arith.divf %29, %30 : vector<32x16xf32>
    %32 = vector.extract_strided_slice %24 {offsets = [32, 0], sizes = [32, 16], strides = [1, 1]} : vector<64x16xf32> to vector<32x16xf32>
    %33 = arith.subf %32, %25 : vector<32x16xf32>
    %34 = arith.mulf %31, %33 : vector<32x16xf32>
    %35 = arith.addf %25, %34 : vector<32x16xf32>
    %c0_29 = arith.constant 0 : index
    %c128_30 = arith.constant 128 : index
    %36 = vector.load %arg34[%c0_29, %c128_30] : memref<64x195xf32, #tpu.memory_space<vmem>>, vector<32x16xf32>
    tpu.vector_store %arg34[%c0_29, %c128_30], %35 {strides = array<i32>} : memref<64x195xf32, #tpu.memory_space<vmem>>, vector<32x16xf32>,
    %c0_31 = arith.constant 0 : index
    %c0_32 = arith.constant 0 : index
    %37 = vector.load %arg6[%c0_31, %c0_32] : memref<64x96xbf16, #tpu.memory_space<vmem>>, vector<64x96xbf16>
    %c0_33 = arith.constant 0 : index
    %c0_34 = arith.constant 0 : index
    %38 = vector.load %arg7[%c0_33, %c0_34] : memref<64x1xf32, #tpu.memory_space<vmem>>, vector<64x1xf32>
    %c0_35 = arith.constant 0 : index
    %c125 = arith.constant 125 : index
    %39 = vector.load %arg34[%c0_35, %c125] : memref<64x195xf32, #tpu.memory_space<vmem>>, vector<32x16xf32>
    %c0_36 = arith.constant 0 : index
    %c128_37 = arith.constant 128 : index
    %40 = vector.load %arg34[%c0_36, %c128_37] : memref<64x195xf32, #tpu.memory_space<vmem>>, vector<32x16xf32>
    %c0_38 = arith.constant 0 : index
    %c131 = arith.constant 131 : index
    %41 = vector.load %arg34[%c0_38, %c131] : memref<64x195xf32, #tpu.memory_space<vmem>>, vector<32x16xf32>
    %42 = tpu.concatenate %39, %40, %41 in 0 : vector<32x16xf32>, vector<32x16xf32>, vector<32x16xf32> -> vector<96x16xf32>
    %43 = arith.truncf %42 : vector<96x16xf32> to vector<96x16xbf16>
    %cst_39 = arith.constant dense<0.000000e+00> : vector<64x16xf32>
    %44 = tpu.matmul %37, %43, %cst_39 {dimension_numbers = #tpu.dot_dimension_numbers<[1], [0], [0], [1], [0, 0, 1, 1], [], []>} : vector<64x96xbf16>, vector<96x16xbf16>, vector<64x16xf32> -> vector<64x16xf32>
    %45 = vector.broadcast %38 : vector<64x1xf32> to vector<64x16xf32>
    %46 = arith.addf %44, %45 : vector<64x16xf32>
    %c0_40 = arith.constant 0 : index
    %c128_41 = arith.constant 128 : index
    %47 = vector.load %arg34[%c0_40, %c128_41] : memref<64x195xf32, #tpu.memory_space<vmem>>, vector<32x16xf32>
    %48 = vector.extract_strided_slice %46 {offsets = [0, 0], sizes = [32, 16], strides = [1, 1]} : vector<64x16xf32> to vector<32x16xf32>
    %49 = arith.negf %48 : vector<32x16xf32>
    %50 = math.exp %49 : vector<32x16xf32>
    %cst_42 = arith.constant 1.000000e+00 : f32
    %51 = vector.broadcast %cst_42 : f32 to vector<32x16xf32>
    %52 = arith.addf %51, %50 : vector<32x16xf32>
    %53 = arith.divf %51, %52 : vector<32x16xf32>
    %54 = vector.extract_strided_slice %46 {offsets = [32, 0], sizes = [32, 16], strides = [1, 1]} : vector<64x16xf32> to vector<32x16xf32>
    %55 = arith.subf %54, %47 : vector<32x16xf32>
    %56 = arith.mulf %53, %55 : vector<32x16xf32>
    %57 = arith.addf %47, %56 : vector<32x16xf32>
    %c0_43 = arith.constant 0 : index
    %c128_44 = arith.constant 128 : index
    %58 = vector.load %arg35[%c0_43, %c128_44] : memref<64x195xf32, #tpu.memory_space<vmem>>, vector<32x16xf32>
    tpu.vector_store %arg35[%c0_43, %c128_44], %57 {strides = array<i32>} : memref<64x195xf32, #tpu.memory_space<vmem>>, vector<32x16xf32>,
    %c0_45 = arith.constant 0 : index
    %c0_46 = arith.constant 0 : index
    %59 = vector.load %arg8[%c0_45, %c0_46] : memref<32x64xbf16, #tpu.memory_space<vmem>>, vector<32x64xbf16>
    %c0_47 = arith.constant 0 : index
    %c0_48 = arith.constant 0 : index
    %60 = vector.load %arg9[%c0_47, %c0_48] : memref<32x1xf32, #tpu.memory_space<vmem>>, vector<32x1xf32>
    %c0_49 = arith.constant 0 : index
    %c128_50 = arith.constant 128 : index
    %61 = vector.load %arg35[%c0_49, %c128_50] : memref<64x195xf32, #tpu.memory_space<vmem>>, vector<32x16xf32>
    %62 = arith.truncf %61 : vector<32x16xf32> to vector<32x16xbf16>
    %63 = vector.extract_strided_slice %59 {offsets = [0, 0], sizes = [32, 32], strides = [1, 1]} : vector<32x64xbf16> to vector<32x32xbf16>
    %cst_51 = arith.constant dense<0.000000e+00> : vector<32x16xf32>
    %64 = tpu.matmul %63, %62, %cst_51 {dimension_numbers = #tpu.dot_dimension_numbers<[1], [0], [0], [1], [0, 0, 1, 1], [], []>} : vector<32x32xbf16>, vector<32x16xbf16>, vector<32x16xf32> -> vector<32x16xf32>
    %65 = vector.extract_strided_slice %59 {offsets = [0, 32], sizes = [32, 32], strides = [1, 1]} : vector<32x64xbf16> to vector<32x32xbf16>
    %cst_52 = arith.constant dense<0.000000e+00> : vector<32x16xf32>
    %66 = tpu.matmul %65, %62, %cst_52 {dimension_numbers = #tpu.dot_dimension_numbers<[1], [0], [0], [1], [0, 0, 1, 1], [], []>} : vector<32x32xbf16>, vector<32x16xbf16>, vector<32x16xf32> -> vector<32x16xf32>
    %67 = tpu.iota {dimensions = array<i32: 0>} : vector<16x32xi32>
    %68 = tpu.iota {dimensions = array<i32: 1>} : vector<16x32xi32>
    %c2_i32 = arith.constant 2 : i32
    %69 = vector.broadcast %c2_i32 : i32 to vector<16x32xi32>
    %70 = arith.muli %69, %67 : vector<16x32xi32>
    %71 = arith.cmpi eq, %68, %70 : vector<16x32xi32>
    %72 = arith.extui %71 : vector<16x32xi1> to vector<16x32xi32>
    %73 = arith.sitofp %72 : vector<16x32xi32> to vector<16x32xf32>
    %c2_i32_53 = arith.constant 2 : i32
    %74 = vector.broadcast %c2_i32_53 : i32 to vector<16x32xi32>
    %75 = arith.muli %74, %67 : vector<16x32xi32>
    %c1_i32 = arith.constant 1 : i32
    %76 = vector.broadcast %c1_i32 : i32 to vector<16x32xi32>
    %77 = arith.addi %75, %76 : vector<16x32xi32>
    %78 = arith.cmpi eq, %68, %77 : vector<16x32xi32>
    %79 = arith.extui %78 : vector<16x32xi1> to vector<16x32xi32>
    %80 = arith.sitofp %79 : vector<16x32xi32> to vector<16x32xf32>
    %cst_54 = arith.constant dense<0.000000e+00> : vector<32x32xf32>
    %81 = tpu.matmul %64, %73, %cst_54 {dimension_numbers = #tpu.dot_dimension_numbers<[1], [0], [0], [1], [0, 0, 1, 1], [], []>} : vector<32x16xf32>, vector<16x32xf32>, vector<32x32xf32> -> vector<32x32xf32>
    %cst_55 = arith.constant dense<0.000000e+00> : vector<32x32xf32>
    %82 = tpu.matmul %66, %80, %cst_55 {dimension_numbers = #tpu.dot_dimension_numbers<[1], [0], [0], [1], [0, 0, 1, 1], [], []>} : vector<32x16xf32>, vector<16x32xf32>, vector<32x32xf32> -> vector<32x32xf32>
    %83 = arith.addf %81, %82 : vector<32x32xf32>
    %84 = vector.broadcast %60 : vector<32x1xf32> to vector<32x32xf32>
    %85 = arith.addf %83, %84 : vector<32x32xf32>
    %c0_56 = arith.constant 0 : index
    %c128_57 = arith.constant 128 : index
    %86 = vector.load %arg34[%c0_56, %c128_57] : memref<64x195xf32, #tpu.memory_space<vmem>>, vector<32x32xf32>
    tpu.vector_store %arg34[%c0_56, %c128_57], %85 {strides = array<i32>} : memref<64x195xf32, #tpu.memory_space<vmem>>, vector<32x32xf32>,
    %c0_58 = arith.constant 0 : index
    %c0_59 = arith.constant 0 : index
    %87 = vector.load %arg10[%c0_58, %c0_59] : memref<64x96xbf16, #tpu.memory_space<vmem>>, vector<64x96xbf16>
    %c0_60 = arith.constant 0 : index
    %c0_61 = arith.constant 0 : index
    %88 = vector.load %arg11[%c0_60, %c0_61] : memref<64x1xf32, #tpu.memory_space<vmem>>, vector<64x1xf32>
    %c0_62 = arith.constant 0 : index
    %c127_63 = arith.constant 127 : index
    %89 = vector.load %arg34[%c0_62, %c127_63] : memref<64x195xf32, #tpu.memory_space<vmem>>, vector<32x32xf32>
    %c0_64 = arith.constant 0 : index
    %c128_65 = arith.constant 128 : index
    %90 = vector.load %arg34[%c0_64, %c128_65] : memref<64x195xf32, #tpu.memory_space<vmem>>, vector<32x32xf32>
    %c0_66 = arith.constant 0 : index
    %c129_67 = arith.constant 129 : index
    %91 = vector.load %arg34[%c0_66, %c129_67] : memref<64x195xf32, #tpu.memory_space<vmem>>, vector<32x32xf32>
    %92 = tpu.concatenate %89, %90, %91 in 0 : vector<32x32xf32>, vector<32x32xf32>, vector<32x32xf32> -> vector<96x32xf32>
    %93 = arith.truncf %92 : vector<96x32xf32> to vector<96x32xbf16>
    %cst_68 = arith.constant dense<0.000000e+00> : vector<64x32xf32>
    %94 = tpu.matmul %87, %93, %cst_68 {dimension_numbers = #tpu.dot_dimension_numbers<[1], [0], [0], [1], [0, 0, 1, 1], [], []>} : vector<64x96xbf16>, vector<96x32xbf16>, vector<64x32xf32> -> vector<64x32xf32>
    %95 = vector.broadcast %88 : vector<64x1xf32> to vector<64x32xf32>
    %96 = arith.addf %94, %95 : vector<64x32xf32>
    %c0_69 = arith.constant 0 : index
    %c128_70 = arith.constant 128 : index
    %97 = vector.load %arg34[%c0_69, %c128_70] : memref<64x195xf32, #tpu.memory_space<vmem>>, vector<32x32xf32>
    %98 = vector.extract_strided_slice %96 {offsets = [0, 0], sizes = [32, 32], strides = [1, 1]} : vector<64x32xf32> to vector<32x32xf32>
    %99 = arith.negf %98 : vector<32x32xf32>
    %100 = math.exp %99 : vector<32x32xf32>
    %cst_71 = arith.constant 1.000000e+00 : f32
    %101 = vector.broadcast %cst_71 : f32 to vector<32x32xf32>
    %102 = arith.addf %101, %100 : vector<32x32xf32>
    %103 = arith.divf %101, %102 : vector<32x32xf32>
    %104 = vector.extract_strided_slice %96 {offsets = [32, 0], sizes = [32, 32], strides = [1, 1]} : vector<64x32xf32> to vector<32x32xf32>
    %105 = arith.subf %104, %97 : vector<32x32xf32>
    %106 = arith.mulf %103, %105 : vector<32x32xf32>
    %107 = arith.addf %97, %106 : vector<32x32xf32>
    %c0_72 = arith.constant 0 : index
    %c128_73 = arith.constant 128 : index
    %108 = vector.load %arg35[%c0_72, %c128_73] : memref<64x195xf32, #tpu.memory_space<vmem>>, vector<32x32xf32>
    tpu.vector_store %arg35[%c0_72, %c128_73], %107 {strides = array<i32>} : memref<64x195xf32, #tpu.memory_space<vmem>>, vector<32x32xf32>,
    %c0_74 = arith.constant 0 : index
    %c0_75 = arith.constant 0 : index
    %109 = vector.load %arg12[%c0_74, %c0_75] : memref<64x96xbf16, #tpu.memory_space<vmem>>, vector<64x96xbf16>
    %c0_76 = arith.constant 0 : index
    %c0_77 = arith.constant 0 : index
    %110 = vector.load %arg13[%c0_76, %c0_77] : memref<64x1xf32, #tpu.memory_space<vmem>>, vector<64x1xf32>
    %c0_78 = arith.constant 0 : index
    %c125_79 = arith.constant 125 : index
    %111 = vector.load %arg35[%c0_78, %c125_79] : memref<64x195xf32, #tpu.memory_space<vmem>>, vector<32x32xf32>
    %c0_80 = arith.constant 0 : index
    %c128_81 = arith.constant 128 : index
    %112 = vector.load %arg35[%c0_80, %c128_81] : memref<64x195xf32, #tpu.memory_space<vmem>>, vector<32x32xf32>
    %c0_82 = arith.constant 0 : index
    %c131_83 = arith.constant 131 : index
    %113 = vector.load %arg35[%c0_82, %c131_83] : memref<64x195xf32, #tpu.memory_space<vmem>>, vector<32x32xf32>
    %114 = tpu.concatenate %111, %112, %113 in 0 : vector<32x32xf32>, vector<32x32xf32>, vector<32x32xf32> -> vector<96x32xf32>
    %115 = arith.truncf %114 : vector<96x32xf32> to vector<96x32xbf16>
    %cst_84 = arith.constant dense<0.000000e+00> : vector<64x32xf32>
    %116 = tpu.matmul %109, %115, %cst_84 {dimension_numbers = #tpu.dot_dimension_numbers<[1], [0], [0], [1], [0, 0, 1, 1], [], []>} : vector<64x96xbf16>, vector<96x32xbf16>, vector<64x32xf32> -> vector<64x32xf32>
    %117 = vector.broadcast %110 : vector<64x1xf32> to vector<64x32xf32>
    %118 = arith.addf %116, %117 : vector<64x32xf32>
    %c0_85 = arith.constant 0 : index
    %c128_86 = arith.constant 128 : index
    %119 = vector.load %arg35[%c0_85, %c128_86] : memref<64x195xf32, #tpu.memory_space<vmem>>, vector<32x32xf32>
    %120 = vector.extract_strided_slice %118 {offsets = [0, 0], sizes = [32, 32], strides = [1, 1]} : vector<64x32xf32> to vector<32x32xf32>
    %121 = arith.negf %120 : vector<32x32xf32>
    %122 = math.exp %121 : vector<32x32xf32>
    %cst_87 = arith.constant 1.000000e+00 : f32
    %123 = vector.broadcast %cst_87 : f32 to vector<32x32xf32>
    %124 = arith.addf %123, %122 : vector<32x32xf32>
    %125 = arith.divf %123, %124 : vector<32x32xf32>
    %126 = vector.extract_strided_slice %118 {offsets = [32, 0], sizes = [32, 32], strides = [1, 1]} : vector<64x32xf32> to vector<32x32xf32>
    %127 = arith.subf %126, %119 : vector<32x32xf32>
    %128 = arith.mulf %125, %127 : vector<32x32xf32>
    %129 = arith.addf %119, %128 : vector<32x32xf32>
    %c0_88 = arith.constant 0 : index
    %c128_89 = arith.constant 128 : index
    %130 = vector.load %arg34[%c0_88, %c128_89] : memref<64x195xf32, #tpu.memory_space<vmem>>, vector<32x32xf32>
    tpu.vector_store %arg34[%c0_88, %c128_89], %129 {strides = array<i32>} : memref<64x195xf32, #tpu.memory_space<vmem>>, vector<32x32xf32>,
    %c0_90 = arith.constant 0 : index
    %c0_91 = arith.constant 0 : index
    %131 = vector.load %arg14[%c0_90, %c0_91] : memref<32x64xbf16, #tpu.memory_space<vmem>>, vector<32x64xbf16>
    %c0_92 = arith.constant 0 : index
    %c0_93 = arith.constant 0 : index
    %132 = vector.load %arg15[%c0_92, %c0_93] : memref<32x1xf32, #tpu.memory_space<vmem>>, vector<32x1xf32>
    %c0_94 = arith.constant 0 : index
    %c128_95 = arith.constant 128 : index
    %133 = vector.load %arg34[%c0_94, %c128_95] : memref<64x195xf32, #tpu.memory_space<vmem>>, vector<32x32xf32>
    %134 = arith.truncf %133 : vector<32x32xf32> to vector<32x32xbf16>
    %135 = vector.extract_strided_slice %131 {offsets = [0, 0], sizes = [32, 32], strides = [1, 1]} : vector<32x64xbf16> to vector<32x32xbf16>
    %cst_96 = arith.constant dense<0.000000e+00> : vector<32x32xf32>
    %136 = tpu.matmul %135, %134, %cst_96 {dimension_numbers = #tpu.dot_dimension_numbers<[1], [0], [0], [1], [0, 0, 1, 1], [], []>} : vector<32x32xbf16>, vector<32x32xbf16>, vector<32x32xf32> -> vector<32x32xf32>
    %137 = vector.extract_strided_slice %131 {offsets = [0, 32], sizes = [32, 32], strides = [1, 1]} : vector<32x64xbf16> to vector<32x32xbf16>
    %cst_97 = arith.constant dense<0.000000e+00> : vector<32x32xf32>
    %138 = tpu.matmul %137, %134, %cst_97 {dimension_numbers = #tpu.dot_dimension_numbers<[1], [0], [0], [1], [0, 0, 1, 1], [], []>} : vector<32x32xbf16>, vector<32x32xbf16>, vector<32x32xf32> -> vector<32x32xf32>
    %139 = tpu.iota {dimensions = array<i32: 0>} : vector<32x64xi32>
    %140 = tpu.iota {dimensions = array<i32: 1>} : vector<32x64xi32>
    %c2_i32_98 = arith.constant 2 : i32
    %141 = vector.broadcast %c2_i32_98 : i32 to vector<32x64xi32>
    %142 = arith.muli %141, %139 : vector<32x64xi32>
    %143 = arith.cmpi eq, %140, %142 : vector<32x64xi32>
    %144 = arith.extui %143 : vector<32x64xi1> to vector<32x64xi32>
    %145 = arith.sitofp %144 : vector<32x64xi32> to vector<32x64xf32>
    %c2_i32_99 = arith.constant 2 : i32
    %146 = vector.broadcast %c2_i32_99 : i32 to vector<32x64xi32>
    %147 = arith.muli %146, %139 : vector<32x64xi32>
    %c1_i32_100 = arith.constant 1 : i32
    %148 = vector.broadcast %c1_i32_100 : i32 to vector<32x64xi32>
    %149 = arith.addi %147, %148 : vector<32x64xi32>
    %150 = arith.cmpi eq, %140, %149 : vector<32x64xi32>
    %151 = arith.extui %150 : vector<32x64xi1> to vector<32x64xi32>
    %152 = arith.sitofp %151 : vector<32x64xi32> to vector<32x64xf32>
    %cst_101 = arith.constant dense<0.000000e+00> : vector<32x64xf32>
    %153 = tpu.matmul %136, %145, %cst_101 {dimension_numbers = #tpu.dot_dimension_numbers<[1], [0], [0], [1], [0, 0, 1, 1], [], []>} : vector<32x32xf32>, vector<32x64xf32>, vector<32x64xf32> -> vector<32x64xf32>
    %cst_102 = arith.constant dense<0.000000e+00> : vector<32x64xf32>
    %154 = tpu.matmul %138, %152, %cst_102 {dimension_numbers = #tpu.dot_dimension_numbers<[1], [0], [0], [1], [0, 0, 1, 1], [], []>} : vector<32x32xf32>, vector<32x64xf32>, vector<32x64xf32> -> vector<32x64xf32>
    %155 = arith.addf %153, %154 : vector<32x64xf32>
    %156 = vector.broadcast %132 : vector<32x1xf32> to vector<32x64xf32>
    %157 = arith.addf %155, %156 : vector<32x64xf32>
    %c0_103 = arith.constant 0 : index
    %c128_104 = arith.constant 128 : index
    %158 = vector.load %arg35[%c0_103, %c128_104] : memref<64x195xf32, #tpu.memory_space<vmem>>, vector<32x64xf32>
    tpu.vector_store %arg35[%c0_103, %c128_104], %157 {strides = array<i32>} : memref<64x195xf32, #tpu.memory_space<vmem>>, vector<32x64xf32>,
    %c0_105 = arith.constant 0 : index
    %c0_106 = arith.constant 0 : index
    %159 = vector.load %arg16[%c0_105, %c0_106] : memref<64x96xbf16, #tpu.memory_space<vmem>>, vector<64x96xbf16>
    %c0_107 = arith.constant 0 : index
    %c0_108 = arith.constant 0 : index
    %160 = vector.load %arg17[%c0_107, %c0_108] : memref<64x1xf32, #tpu.memory_space<vmem>>, vector<64x1xf32>
    %c0_109 = arith.constant 0 : index
    %c127_110 = arith.constant 127 : index
    %161 = vector.load %arg35[%c0_109, %c127_110] : memref<64x195xf32, #tpu.memory_space<vmem>>, vector<32x64xf32>
    %c0_111 = arith.constant 0 : index
    %c128_112 = arith.constant 128 : index
    %162 = vector.load %arg35[%c0_111, %c128_112] : memref<64x195xf32, #tpu.memory_space<vmem>>, vector<32x64xf32>
    %c0_113 = arith.constant 0 : index
    %c129_114 = arith.constant 129 : index
    %163 = vector.load %arg35[%c0_113, %c129_114] : memref<64x195xf32, #tpu.memory_space<vmem>>, vector<32x64xf32>
    %164 = tpu.concatenate %161, %162, %163 in 0 : vector<32x64xf32>, vector<32x64xf32>, vector<32x64xf32> -> vector<96x64xf32>
    %165 = arith.truncf %164 : vector<96x64xf32> to vector<96x64xbf16>
    %cst_115 = arith.constant dense<0.000000e+00> : vector<64x64xf32>
    %166 = tpu.matmul %159, %165, %cst_115 {dimension_numbers = #tpu.dot_dimension_numbers<[1], [0], [0], [1], [0, 0, 1, 1], [], []>} : vector<64x96xbf16>, vector<96x64xbf16>, vector<64x64xf32> -> vector<64x64xf32>
    %167 = vector.broadcast %160 : vector<64x1xf32> to vector<64x64xf32>
    %168 = arith.addf %166, %167 : vector<64x64xf32>
    %c0_116 = arith.constant 0 : index
    %c128_117 = arith.constant 128 : index
    %169 = vector.load %arg35[%c0_116, %c128_117] : memref<64x195xf32, #tpu.memory_space<vmem>>, vector<32x64xf32>
    %170 = vector.extract_strided_slice %168 {offsets = [0, 0], sizes = [32, 64], strides = [1, 1]} : vector<64x64xf32> to vector<32x64xf32>
    %171 = arith.negf %170 : vector<32x64xf32>
    %172 = math.exp %171 : vector<32x64xf32>
    %cst_118 = arith.constant 1.000000e+00 : f32
    %173 = vector.broadcast %cst_118 : f32 to vector<32x64xf32>
    %174 = arith.addf %173, %172 : vector<32x64xf32>
    %175 = arith.divf %173, %174 : vector<32x64xf32>
    %176 = vector.extract_strided_slice %168 {offsets = [32, 0], sizes = [32, 64], strides = [1, 1]} : vector<64x64xf32> to vector<32x64xf32>
    %177 = arith.subf %176, %169 : vector<32x64xf32>
    %178 = arith.mulf %175, %177 : vector<32x64xf32>
    %179 = arith.addf %169, %178 : vector<32x64xf32>
    %c0_119 = arith.constant 0 : index
    %c128_120 = arith.constant 128 : index
    %180 = vector.load %arg34[%c0_119, %c128_120] : memref<64x195xf32, #tpu.memory_space<vmem>>, vector<32x64xf32>
    tpu.vector_store %arg34[%c0_119, %c128_120], %179 {strides = array<i32>} : memref<64x195xf32, #tpu.memory_space<vmem>>, vector<32x64xf32>,
    %c0_121 = arith.constant 0 : index
    %c0_122 = arith.constant 0 : index
    %181 = vector.load %arg18[%c0_121, %c0_122] : memref<64x96xbf16, #tpu.memory_space<vmem>>, vector<64x96xbf16>
    %c0_123 = arith.constant 0 : index
    %c0_124 = arith.constant 0 : index
    %182 = vector.load %arg19[%c0_123, %c0_124] : memref<64x1xf32, #tpu.memory_space<vmem>>, vector<64x1xf32>
    %c0_125 = arith.constant 0 : index
    %c125_126 = arith.constant 125 : index
    %183 = vector.load %arg34[%c0_125, %c125_126] : memref<64x195xf32, #tpu.memory_space<vmem>>, vector<32x64xf32>
    %c0_127 = arith.constant 0 : index
    %c128_128 = arith.constant 128 : index
    %184 = vector.load %arg34[%c0_127, %c128_128] : memref<64x195xf32, #tpu.memory_space<vmem>>, vector<32x64xf32>
    %c0_129 = arith.constant 0 : index
    %c131_130 = arith.constant 131 : index
    %185 = vector.load %arg34[%c0_129, %c131_130] : memref<64x195xf32, #tpu.memory_space<vmem>>, vector<32x64xf32>
    %186 = tpu.concatenate %183, %184, %185 in 0 : vector<32x64xf32>, vector<32x64xf32>, vector<32x64xf32> -> vector<96x64xf32>
    %187 = arith.truncf %186 : vector<96x64xf32> to vector<96x64xbf16>
    %cst_131 = arith.constant dense<0.000000e+00> : vector<64x64xf32>
    %188 = tpu.matmul %181, %187, %cst_131 {dimension_numbers = #tpu.dot_dimension_numbers<[1], [0], [0], [1], [0, 0, 1, 1], [], []>} : vector<64x96xbf16>, vector<96x64xbf16>, vector<64x64xf32> -> vector<64x64xf32>
    %189 = vector.broadcast %182 : vector<64x1xf32> to vector<64x64xf32>
    %190 = arith.addf %188, %189 : vector<64x64xf32>
    %c0_132 = arith.constant 0 : index
    %c128_133 = arith.constant 128 : index
    %191 = vector.load %arg34[%c0_132, %c128_133] : memref<64x195xf32, #tpu.memory_space<vmem>>, vector<32x64xf32>
    %192 = vector.extract_strided_slice %190 {offsets = [0, 0], sizes = [32, 64], strides = [1, 1]} : vector<64x64xf32> to vector<32x64xf32>
    %193 = arith.negf %192 : vector<32x64xf32>
    %194 = math.exp %193 : vector<32x64xf32>
    %cst_134 = arith.constant 1.000000e+00 : f32
    %195 = vector.broadcast %cst_134 : f32 to vector<32x64xf32>
    %196 = arith.addf %195, %194 : vector<32x64xf32>
    %197 = arith.divf %195, %196 : vector<32x64xf32>
    %198 = vector.extract_strided_slice %190 {offsets = [32, 0], sizes = [32, 64], strides = [1, 1]} : vector<64x64xf32> to vector<32x64xf32>
    %199 = arith.subf %198, %191 : vector<32x64xf32>
    %200 = arith.mulf %197, %199 : vector<32x64xf32>
    %201 = arith.addf %191, %200 : vector<32x64xf32>
    %c0_135 = arith.constant 0 : index
    %c128_136 = arith.constant 128 : index
    %202 = vector.load %arg35[%c0_135, %c128_136] : memref<64x195xf32, #tpu.memory_space<vmem>>, vector<32x64xf32>
    tpu.vector_store %arg35[%c0_135, %c128_136], %201 {strides = array<i32>} : memref<64x195xf32, #tpu.memory_space<vmem>>, vector<32x64xf32>,
    %c0_137 = arith.constant 0 : index
    %c0_138 = arith.constant 0 : index
    %203 = vector.load %arg20[%c0_137, %c0_138] : memref<64x32xbf16, #tpu.memory_space<vmem>>, vector<64x32xbf16>
    %c0_139 = arith.constant 0 : index
    %c0_140 = arith.constant 0 : index
    %204 = vector.load %arg21[%c0_139, %c0_140] : memref<64x1xf32, #tpu.memory_space<vmem>>, vector<64x1xf32>
    %c0_141 = arith.constant 0 : index
    %c128_142 = arith.constant 128 : index
    %205 = vector.load %arg35[%c0_141, %c128_142] : memref<64x195xf32, #tpu.memory_space<vmem>>, vector<32x64xf32>
    %206 = arith.truncf %205 : vector<32x64xf32> to vector<32x64xbf16>
    %cst_143 = arith.constant dense<0.000000e+00> : vector<64x64xf32>
    %207 = tpu.matmul %203, %206, %cst_143 {dimension_numbers = #tpu.dot_dimension_numbers<[1], [0], [0], [1], [0, 0, 1, 1], [], []>} : vector<64x32xbf16>, vector<32x64xbf16>, vector<64x64xf32> -> vector<64x64xf32>
    %208 = vector.broadcast %204 : vector<64x1xf32> to vector<64x64xf32>
    %209 = arith.addf %207, %208 : vector<64x64xf32>
    %c0_144 = arith.constant 0 : index
    %c128_145 = arith.constant 128 : index
    %210 = vector.load %arg34[%c0_144, %c128_145] : memref<64x195xf32, #tpu.memory_space<vmem>>, vector<64x64xf32>
    tpu.vector_store %arg34[%c0_144, %c128_145], %209 {strides = array<i32>} : memref<64x195xf32, #tpu.memory_space<vmem>>, vector<64x64xf32>,
    %c0_146 = arith.constant 0 : index
    %c0_147 = arith.constant 0 : index
    %211 = vector.load %arg22[%c0_146, %c0_147] : memref<128x192xbf16, #tpu.memory_space<vmem>>, vector<128x192xbf16>
    %c0_148 = arith.constant 0 : index
    %c0_149 = arith.constant 0 : index
    %212 = vector.load %arg23[%c0_148, %c0_149] : memref<128x1xf32, #tpu.memory_space<vmem>>, vector<128x1xf32>
    %c0_150 = arith.constant 0 : index
    %c127_151 = arith.constant 127 : index
    %213 = vector.load %arg34[%c0_150, %c127_151] : memref<64x195xf32, #tpu.memory_space<vmem>>, vector<64x64xf32>
    %c0_152 = arith.constant 0 : index
    %c128_153 = arith.constant 128 : index
    %214 = vector.load %arg34[%c0_152, %c128_153] : memref<64x195xf32, #tpu.memory_space<vmem>>, vector<64x64xf32>
    %c0_154 = arith.constant 0 : index
    %c129_155 = arith.constant 129 : index
    %215 = vector.load %arg34[%c0_154, %c129_155] : memref<64x195xf32, #tpu.memory_space<vmem>>, vector<64x64xf32>
    %216 = tpu.concatenate %213, %214, %215 in 0 : vector<64x64xf32>, vector<64x64xf32>, vector<64x64xf32> -> vector<192x64xf32>
    %217 = arith.truncf %216 : vector<192x64xf32> to vector<192x64xbf16>
    %cst_156 = arith.constant dense<0.000000e+00> : vector<128x64xf32>
    %218 = tpu.matmul %211, %217, %cst_156 {dimension_numbers = #tpu.dot_dimension_numbers<[1], [0], [0], [1], [0, 0, 1, 1], [], []>} : vector<128x192xbf16>, vector<192x64xbf16>, vector<128x64xf32> -> vector<128x64xf32>
    %219 = vector.broadcast %212 : vector<128x1xf32> to vector<128x64xf32>
    %220 = arith.addf %218, %219 : vector<128x64xf32>
    %c0_157 = arith.constant 0 : index
    %c128_158 = arith.constant 128 : index
    %221 = vector.load %arg34[%c0_157, %c128_158] : memref<64x195xf32, #tpu.memory_space<vmem>>, vector<64x64xf32>
    %222 = vector.extract_strided_slice %220 {offsets = [0, 0], sizes = [64, 64], strides = [1, 1]} : vector<128x64xf32> to vector<64x64xf32>
    %223 = arith.negf %222 : vector<64x64xf32>
    %224 = math.exp %223 : vector<64x64xf32>
    %cst_159 = arith.constant 1.000000e+00 : f32
    %225 = vector.broadcast %cst_159 : f32 to vector<64x64xf32>
    %226 = arith.addf %225, %224 : vector<64x64xf32>
    %227 = arith.divf %225, %226 : vector<64x64xf32>
    %228 = vector.extract_strided_slice %220 {offsets = [64, 0], sizes = [64, 64], strides = [1, 1]} : vector<128x64xf32> to vector<64x64xf32>
    %229 = arith.subf %228, %221 : vector<64x64xf32>
    %230 = arith.mulf %227, %229 : vector<64x64xf32>
    %231 = arith.addf %221, %230 : vector<64x64xf32>
    %c0_160 = arith.constant 0 : index
    %c128_161 = arith.constant 128 : index
    %232 = vector.load %arg35[%c0_160, %c128_161] : memref<64x195xf32, #tpu.memory_space<vmem>>, vector<64x64xf32>
    tpu.vector_store %arg35[%c0_160, %c128_161], %231 {strides = array<i32>} : memref<64x195xf32, #tpu.memory_space<vmem>>, vector<64x64xf32>,
    %c0_162 = arith.constant 0 : index
    %c0_163 = arith.constant 0 : index
    %233 = vector.load %arg24[%c0_162, %c0_163] : memref<128x192xbf16, #tpu.memory_space<vmem>>, vector<128x192xbf16>
    %c0_164 = arith.constant 0 : index
    %c0_165 = arith.constant 0 : index
    %234 = vector.load %arg25[%c0_164, %c0_165] : memref<128x1xf32, #tpu.memory_space<vmem>>, vector<128x1xf32>
    %c0_166 = arith.constant 0 : index
    %c127_167 = arith.constant 127 : index
    %235 = vector.load %arg35[%c0_166, %c127_167] : memref<64x195xf32, #tpu.memory_space<vmem>>, vector<64x64xf32>
    %c0_168 = arith.constant 0 : index
    %c128_169 = arith.constant 128 : index
    %236 = vector.load %arg35[%c0_168, %c128_169] : memref<64x195xf32, #tpu.memory_space<vmem>>, vector<64x64xf32>
    %c0_170 = arith.constant 0 : index
    %c129_171 = arith.constant 129 : index
    %237 = vector.load %arg35[%c0_170, %c129_171] : memref<64x195xf32, #tpu.memory_space<vmem>>, vector<64x64xf32>
    %238 = tpu.concatenate %235, %236, %237 in 0 : vector<64x64xf32>, vector<64x64xf32>, vector<64x64xf32> -> vector<192x64xf32>
    %239 = arith.truncf %238 : vector<192x64xf32> to vector<192x64xbf16>
    %cst_172 = arith.constant dense<0.000000e+00> : vector<128x64xf32>
    %240 = tpu.matmul %233, %239, %cst_172 {dimension_numbers = #tpu.dot_dimension_numbers<[1], [0], [0], [1], [0, 0, 1, 1], [], []>} : vector<128x192xbf16>, vector<192x64xbf16>, vector<128x64xf32> -> vector<128x64xf32>
    %241 = vector.broadcast %234 : vector<128x1xf32> to vector<128x64xf32>
    %242 = arith.addf %240, %241 : vector<128x64xf32>
    %c0_173 = arith.constant 0 : index
    %c128_174 = arith.constant 128 : index
    %243 = vector.load %arg35[%c0_173, %c128_174] : memref<64x195xf32, #tpu.memory_space<vmem>>, vector<64x64xf32>
    %244 = vector.extract_strided_slice %242 {offsets = [0, 0], sizes = [64, 64], strides = [1, 1]} : vector<128x64xf32> to vector<64x64xf32>
    %245 = arith.negf %244 : vector<64x64xf32>
    %246 = math.exp %245 : vector<64x64xf32>
    %cst_175 = arith.constant 1.000000e+00 : f32
    %247 = vector.broadcast %cst_175 : f32 to vector<64x64xf32>
    %248 = arith.addf %247, %246 : vector<64x64xf32>
    %249 = arith.divf %247, %248 : vector<64x64xf32>
    %250 = vector.extract_strided_slice %242 {offsets = [64, 0], sizes = [64, 64], strides = [1, 1]} : vector<128x64xf32> to vector<64x64xf32>
    %251 = arith.subf %250, %243 : vector<64x64xf32>
    %252 = arith.mulf %249, %251 : vector<64x64xf32>
    %253 = arith.addf %243, %252 : vector<64x64xf32>
    %c0_176 = arith.constant 0 : index
    %c128_177 = arith.constant 128 : index
    %254 = vector.load %arg34[%c0_176, %c128_177] : memref<64x195xf32, #tpu.memory_space<vmem>>, vector<64x64xf32>
    tpu.vector_store %arg34[%c0_176, %c128_177], %253 {strides = array<i32>} : memref<64x195xf32, #tpu.memory_space<vmem>>, vector<64x64xf32>,
    %c0_178 = arith.constant 0 : index
    %c0_179 = arith.constant 0 : index
    %255 = vector.load %arg26[%c0_178, %c0_179] : memref<64x64xbf16, #tpu.memory_space<vmem>>, vector<64x64xbf16>
    %c0_180 = arith.constant 0 : index
    %c0_181 = arith.constant 0 : index
    %256 = vector.load %arg27[%c0_180, %c0_181] : memref<64x1xf32, #tpu.memory_space<vmem>>, vector<64x1xf32>
    %c0_182 = arith.constant 0 : index
    %c128_183 = arith.constant 128 : index
    %257 = vector.load %arg34[%c0_182, %c128_183] : memref<64x195xf32, #tpu.memory_space<vmem>>, vector<64x64xf32>
    %258 = arith.truncf %257 : vector<64x64xf32> to vector<64x64xbf16>
    %cst_184 = arith.constant dense<0.000000e+00> : vector<64x64xf32>
    %259 = tpu.matmul %255, %258, %cst_184 {dimension_numbers = #tpu.dot_dimension_numbers<[1], [0], [0], [1], [0, 0, 1, 1], [], []>} : vector<64x64xbf16>, vector<64x64xbf16>, vector<64x64xf32> -> vector<64x64xf32>
    %260 = vector.broadcast %256 : vector<64x1xf32> to vector<64x64xf32>
    %261 = arith.addf %259, %260 : vector<64x64xf32>
    %c0_185 = arith.constant 0 : index
    %c128_186 = arith.constant 128 : index
    %262 = vector.load %arg35[%c0_185, %c128_186] : memref<64x195xf32, #tpu.memory_space<vmem>>, vector<64x64xf32>
    tpu.vector_store %arg35[%c0_185, %c128_186], %261 {strides = array<i32>} : memref<64x195xf32, #tpu.memory_space<vmem>>, vector<64x64xf32>,
    %c0_187 = arith.constant 0 : index
    %c0_188 = arith.constant 0 : index
    %263 = vector.load %arg28[%c0_187, %c0_188] : memref<128x64xbf16, #tpu.memory_space<vmem>>, vector<128x64xbf16>
    %c0_189 = arith.constant 0 : index
    %c0_190 = arith.constant 0 : index
    %264 = vector.load %arg29[%c0_189, %c0_190] : memref<128x1xf32, #tpu.memory_space<vmem>>, vector<128x1xf32>
    %c0_191 = arith.constant 0 : index
    %c128_192 = arith.constant 128 : index
    %265 = vector.load %arg35[%c0_191, %c128_192] : memref<64x195xf32, #tpu.memory_space<vmem>>, vector<64x64xf32>
    %266 = arith.truncf %265 : vector<64x64xf32> to vector<64x64xbf16>
    %cst_193 = arith.constant dense<0.000000e+00> : vector<128x64xf32>
    %267 = tpu.matmul %263, %266, %cst_193 {dimension_numbers = #tpu.dot_dimension_numbers<[1], [0], [0], [1], [0, 0, 1, 1], [], []>} : vector<128x64xbf16>, vector<64x64xbf16>, vector<128x64xf32> -> vector<128x64xf32>
    %268 = vector.broadcast %264 : vector<128x1xf32> to vector<128x64xf32>
    %269 = arith.addf %267, %268 : vector<128x64xf32>
    %c0_194 = arith.constant 0 : index
    %c128_195 = arith.constant 128 : index
    %270 = vector.load %arg35[%c0_194, %c128_195] : memref<64x195xf32, #tpu.memory_space<vmem>>, vector<64x64xf32>
    %271 = vector.extract_strided_slice %269 {offsets = [0, 0], sizes = [64, 64], strides = [1, 1]} : vector<128x64xf32> to vector<64x64xf32>
    %272 = arith.negf %271 : vector<64x64xf32>
    %273 = math.exp %272 : vector<64x64xf32>
    %cst_196 = arith.constant 1.000000e+00 : f32
    %274 = vector.broadcast %cst_196 : f32 to vector<64x64xf32>
    %275 = arith.addf %274, %273 : vector<64x64xf32>
    %276 = arith.divf %274, %275 : vector<64x64xf32>
    %277 = vector.extract_strided_slice %269 {offsets = [64, 0], sizes = [64, 64], strides = [1, 1]} : vector<128x64xf32> to vector<64x64xf32>
    %278 = arith.subf %277, %270 : vector<64x64xf32>
    %279 = arith.mulf %276, %278 : vector<64x64xf32>
    %280 = arith.addf %270, %279 : vector<64x64xf32>
    %c0_197 = arith.constant 0 : index
    %c128_198 = arith.constant 128 : index
    %281 = vector.load %arg34[%c0_197, %c128_198] : memref<64x195xf32, #tpu.memory_space<vmem>>, vector<64x64xf32>
    tpu.vector_store %arg34[%c0_197, %c128_198], %280 {strides = array<i32>} : memref<64x195xf32, #tpu.memory_space<vmem>>, vector<64x64xf32>,
    %c0_199 = arith.constant 0 : index
    %c0_200 = arith.constant 0 : index
    %282 = vector.load %arg30[%c0_199, %c0_200] : memref<64x64xbf16, #tpu.memory_space<vmem>>, vector<64x64xbf16>
    %c0_201 = arith.constant 0 : index
    %c0_202 = arith.constant 0 : index
    %283 = vector.load %arg31[%c0_201, %c0_202] : memref<64x1xf32, #tpu.memory_space<vmem>>, vector<64x1xf32>
    %c0_203 = arith.constant 0 : index
    %c128_204 = arith.constant 128 : index
    %284 = vector.load %arg34[%c0_203, %c128_204] : memref<64x195xf32, #tpu.memory_space<vmem>>, vector<64x64xf32>
    %285 = arith.truncf %284 : vector<64x64xf32> to vector<64x64xbf16>
    %cst_205 = arith.constant dense<0.000000e+00> : vector<64x64xf32>
    %286 = tpu.matmul %282, %285, %cst_205 {dimension_numbers = #tpu.dot_dimension_numbers<[1], [0], [0], [1], [0, 0, 1, 1], [], []>} : vector<64x64xbf16>, vector<64x64xbf16>, vector<64x64xf32> -> vector<64x64xf32>
    %287 = vector.broadcast %283 : vector<64x1xf32> to vector<64x64xf32>
    %288 = arith.addf %286, %287 : vector<64x64xf32>
    %c0_206 = arith.constant 0 : index
    %c0_207 = arith.constant 0 : index
    %c0_208 = arith.constant 0 : index
    %289 = vector.load %arg32[%c0_206, %c0_207, %c0_208] : memref<1x64x64xf32, #tpu.memory_space<vmem>>, vector<1x64x64xf32>
    %290 = vector.shape_cast %289 : vector<1x64x64xf32> to vector<64x64xf32>
    %291 = vector.shape_cast %288 : vector<64x64xf32> to vector<1x64x64xf32>
    tpu.vector_store %arg32[%c0_206, %c0_207, %c0_208], %291 {strides = array<i32>} : memref<1x64x64xf32, #tpu.memory_space<vmem>>, vector<1x64x64xf32>,
    %292 = arith.negf %288 : vector<64x64xf32>
    %293 = math.exp %292 : vector<64x64xf32>
    %cst_209 = arith.constant 1.000000e+00 : f32
    %294 = vector.broadcast %cst_209 : f32 to vector<64x64xf32>
    %295 = arith.addf %294, %293 : vector<64x64xf32>
    %296 = arith.divf %294, %295 : vector<64x64xf32>
    %c0_210 = arith.constant 0 : index
    %c0_211 = arith.constant 0 : index
    %c0_212 = arith.constant 0 : index
    %297 = vector.load %arg33[%c0_210, %c0_211, %c0_212] : memref<1x64x64xf32, #tpu.memory_space<vmem>>, vector<1x64x64xf32>
    %298 = vector.shape_cast %297 : vector<1x64x64xf32> to vector<64x64xf32>
    %299 = vector.shape_cast %296 : vector<64x64xf32> to vector<1x64x64xf32>
    tpu.vector_store %arg33[%c0_210, %c0_211, %c0_212], %299 {strides = array<i32>} : memref<1x64x64xf32, #tpu.memory_space<vmem>>, vector<1x64x64xf32>,
    return
  }
  func.func @transform_0(%arg0: i32) -> (i32, i32, i32) {
    %c0_i32 = arith.constant 0 : i32
    %c0_i32_0 = arith.constant 0 : i32
    %c0_i32_1 = arith.constant 0 : i32
    return %arg0, %c0_i32, %c0_i32_0 : i32, i32, i32
  }
  func.func @transform_1(%arg0: i32) -> (i32, i32) {
    %c0_i32 = arith.constant 0 : i32
    %c0_i32_0 = arith.constant 0 : i32
    %c0_i32_1 = arith.constant 0 : i32
    return %c0_i32, %c0_i32_0 : i32, i32
  }
  func.func @transform_2(%arg0: i32) -> (i32, i32) {
    %c0_i32 = arith.constant 0 : i32
    %c0_i32_0 = arith.constant 0 : i32
    %c0_i32_1 = arith.constant 0 : i32
    return %c0_i32, %c0_i32_0 : i32, i32
  }
  func.func @transform_3(%arg0: i32) -> (i32, i32) {
    %c0_i32 = arith.constant 0 : i32
    %c0_i32_0 = arith.constant 0 : i32
    %c0_i32_1 = arith.constant 0 : i32
    return %c0_i32, %c0_i32_0 : i32, i32
  }
  func.func @transform_4(%arg0: i32) -> (i32, i32) {
    %c0_i32 = arith.constant 0 : i32
    %c0_i32_0 = arith.constant 0 : i32
    %c0_i32_1 = arith.constant 0 : i32
    return %c0_i32, %c0_i32_0 : i32, i32
  }
  func.func @transform_5(%arg0: i32) -> (i32, i32) {
    %c0_i32 = arith.constant 0 : i32
    %c0_i32_0 = arith.constant 0 : i32
    %c0_i32_1 = arith.constant 0 : i32
    return %c0_i32, %c0_i32_0 : i32, i32
  }
  func.func @transform_6(%arg0: i32) -> (i32, i32) {
    %c0_i32 = arith.constant 0 : i32
    %c0_i32_0 = arith.constant 0 : i32
    %c0_i32_1 = arith.constant 0 : i32
    return %c0_i32, %c0_i32_0 : i32, i32
  }
  func.func @transform_7(%arg0: i32) -> (i32, i32) {
    %c0_i32 = arith.constant 0 : i32
    %c0_i32_0 = arith.constant 0 : i32
    %c0_i32_1 = arith.constant 0 : i32
    return %c0_i32, %c0_i32_0 : i32, i32
  }
  func.func @transform_8(%arg0: i32) -> (i32, i32) {
    %c0_i32 = arith.constant 0 : i32
    %c0_i32_0 = arith.constant 0 : i32
    %c0_i32_1 = arith.constant 0 : i32
    return %c0_i32, %c0_i32_0 : i32, i32
  }
  func.func @transform_9(%arg0: i32) -> (i32, i32) {
    %c0_i32 = arith.constant 0 : i32
    %c0_i32_0 = arith.constant 0 : i32
    %c0_i32_1 = arith.constant 0 : i32
    return %c0_i32, %c0_i32_0 : i32, i32
  }
  func.func @transform_10(%arg0: i32) -> (i32, i32) {
    %c0_i32 = arith.constant 0 : i32
    %c0_i32_0 = arith.constant 0 : i32
    %c0_i32_1 = arith.constant 0 : i32
    return %c0_i32, %c0_i32_0 : i32, i32
  }
  func.func @transform_11(%arg0: i32) -> (i32, i32) {
    %c0_i32 = arith.constant 0 : i32
    %c0_i32_0 = arith.constant 0 : i32
    %c0_i32_1 = arith.constant 0 : i32
    return %c0_i32, %c0_i32_0 : i32, i32
  }
  func.func @transform_12(%arg0: i32) -> (i32, i32) {
    %c0_i32 = arith.constant 0 : i32
    %c0_i32_0 = arith.constant 0 : i32
    %c0_i32_1 = arith.constant 0 : i32
    return %c0_i32, %c0_i32_0 : i32, i32
  }
  func.func @transform_13(%arg0: i32) -> (i32, i32) {
    %c0_i32 = arith.constant 0 : i32
    %c0_i32_0 = arith.constant 0 : i32
    %c0_i32_1 = arith.constant 0 : i32
    return %c0_i32, %c0_i32_0 : i32, i32
  }
  func.func @transform_14(%arg0: i32) -> (i32, i32) {
    %c0_i32 = arith.constant 0 : i32
    %c0_i32_0 = arith.constant 0 : i32
    %c0_i32_1 = arith.constant 0 : i32
    return %c0_i32, %c0_i32_0 : i32, i32
  }
  func.func @transform_15(%arg0: i32) -> (i32, i32) {
    %c0_i32 = arith.constant 0 : i32
    %c0_i32_0 = arith.constant 0 : i32
    %c0_i32_1 = arith.constant 0 : i32
    return %c0_i32, %c0_i32_0 : i32, i32
  }
  func.func @transform_16(%arg0: i32) -> (i32, i32) {
    %c0_i32 = arith.constant 0 : i32
    %c0_i32_0 = arith.constant 0 : i32
    %c0_i32_1 = arith.constant 0 : i32
    return %c0_i32, %c0_i32_0 : i32, i32
  }
  func.func @transform_17(%arg0: i32) -> (i32, i32) {
    %c0_i32 = arith.constant 0 : i32
    %c0_i32_0 = arith.constant 0 : i32
    %c0_i32_1 = arith.constant 0 : i32
    return %c0_i32, %c0_i32_0 : i32, i32
  }
  func.func @transform_18(%arg0: i32) -> (i32, i32) {
    %c0_i32 = arith.constant 0 : i32
    %c0_i32_0 = arith.constant 0 : i32
    %c0_i32_1 = arith.constant 0 : i32
    return %c0_i32, %c0_i32_0 : i32, i32
  }
  func.func @transform_19(%arg0: i32) -> (i32, i32) {
    %c0_i32 = arith.constant 0 : i32
    %c0_i32_0 = arith.constant 0 : i32
    %c0_i32_1 = arith.constant 0 : i32
    return %c0_i32, %c0_i32_0 : i32, i32
  }
  func.func @transform_20(%arg0: i32) -> (i32, i32) {
    %c0_i32 = arith.constant 0 : i32
    %c0_i32_0 = arith.constant 0 : i32
    %c0_i32_1 = arith.constant 0 : i32
    return %c0_i32, %c0_i32_0 : i32, i32
  }
  func.func @transform_21(%arg0: i32) -> (i32, i32) {
    %c0_i32 = arith.constant 0 : i32
    %c0_i32_0 = arith.constant 0 : i32
    %c0_i32_1 = arith.constant 0 : i32
    return %c0_i32, %c0_i32_0 : i32, i32
  }
  func.func @transform_22(%arg0: i32) -> (i32, i32) {
    %c0_i32 = arith.constant 0 : i32
    %c0_i32_0 = arith.constant 0 : i32
    %c0_i32_1 = arith.constant 0 : i32
    return %c0_i32, %c0_i32_0 : i32, i32
  }
  func.func @transform_23(%arg0: i32) -> (i32, i32) {
    %c0_i32 = arith.constant 0 : i32
    %c0_i32_0 = arith.constant 0 : i32
    %c0_i32_1 = arith.constant 0 : i32
    return %c0_i32, %c0_i32_0 : i32, i32
  }
  func.func @transform_24(%arg0: i32) -> (i32, i32) {
    %c0_i32 = arith.constant 0 : i32
    %c0_i32_0 = arith.constant 0 : i32
    %c0_i32_1 = arith.constant 0 : i32
    return %c0_i32, %c0_i32_0 : i32, i32
  }
  func.func @transform_25(%arg0: i32) -> (i32, i32) {
    %c0_i32 = arith.constant 0 : i32
    %c0_i32_0 = arith.constant 0 : i32
    %c0_i32_1 = arith.constant 0 : i32
    return %c0_i32, %c0_i32_0 : i32, i32
  }
  func.func @transform_26(%arg0: i32) -> (i32, i32) {
    %c0_i32 = arith.constant 0 : i32
    %c0_i32_0 = arith.constant 0 : i32
    %c0_i32_1 = arith.constant 0 : i32
    return %c0_i32, %c0_i32_0 : i32, i32
  }
  func.func @transform_27(%arg0: i32) -> (i32, i32) {
    %c0_i32 = arith.constant 0 : i32
    %c0_i32_0 = arith.constant 0 : i32
    %c0_i32_1 = arith.constant 0 : i32
    return %c0_i32, %c0_i32_0 : i32, i32
  }
  func.func @transform_28(%arg0: i32) -> (i32, i32) {
    %c0_i32 = arith.constant 0 : i32
    %c0_i32_0 = arith.constant 0 : i32
    %c0_i32_1 = arith.constant 0 : i32
    return %c0_i32, %c0_i32_0 : i32, i32
  }
  func.func @transform_29(%arg0: i32) -> (i32, i32) {
    %c0_i32 = arith.constant 0 : i32
    %c0_i32_0 = arith.constant 0 : i32
    %c0_i32_1 = arith.constant 0 : i32
    return %c0_i32, %c0_i32_0 : i32, i32
  }
  func.func @transform_30(%arg0: i32) -> (i32, i32) {
    %c0_i32 = arith.constant 0 : i32
    %c0_i32_0 = arith.constant 0 : i32
    %c0_i32_1 = arith.constant 0 : i32
    return %c0_i32, %c0_i32_0 : i32, i32
  }
  func.func @transform_31(%arg0: i32) -> (i32, i32, i32) {
    %c0_i32 = arith.constant 0 : i32
    %c0_i32_0 = arith.constant 0 : i32
    %c0_i32_1 = arith.constant 0 : i32
    return %arg0, %c0_i32, %c0_i32_0 : i32, i32, i32
  }
  func.func @transform_32(%arg0: i32) -> (i32, i32, i32) {
    %c0_i32 = arith.constant 0 : i32
    %c0_i32_0 = arith.constant 0 : i32
    %c0_i32_1 = arith.constant 0 : i32
    return %arg0, %c0_i32, %c0_i32_0 : i32, i32, i32
  }
}

</mosaic_0001>

<llo_original>
// kernel: tpu_custom_call.1
$region0: #{tpu_custom_call.1}
  #allocation0 [shape = 'u32[]', space=smem, size = 0x4, offset = 0x4, fixed_abs, tag = 'smem constant byte address 0x4 - core index']
  #allocation1 [shape = 'u32[144,128]{1,0:T(1,128)}', space=vmem, size = 0x12000, scoped, tag = 'internal scratch']
  #allocation2 [shape = 'f32[64,195]{1,0:T(8,128)}', space=vmem, size = 0x10000, scoped, tag = 'scratch operand']
  #allocation3 [shape = 'f32[64,195]{1,0:T(8,128)}', space=vmem, size = 0x10000, scoped, tag = 'scratch operand']
  %s0 = inlined_call_operand.smem [shape: u32[33], index: -1, kind: input, shape index: {}]
  %s1 = sld [smem:[%s0]]
  %s2 = scalar_lea.smem %s0, 1
  %s3 = sld [smem:[%s2]]
  %s4 = scalar_lea.smem %s0, 2
  %s5 = sld [smem:[%s4]]
  %s6 = scalar_lea.smem %s0, 3
  %s7 = sld [smem:[%s6]]
  %s8 = scalar_lea.smem %s0, 4
  %s9 = sld [smem:[%s8]]
  %s10 = scalar_lea.smem %s0, 5
  %s11 = sld [smem:[%s10]]
  %s12 = scalar_lea.smem %s0, 6
  %s13 = sld [smem:[%s12]]
  %s14 = scalar_lea.smem %s0, 7
  %s15 = sld [smem:[%s14]]
  %s16 = scalar_lea.smem %s0, 8
  %s17 = sld [smem:[%s16]]
  %s18 = scalar_lea.smem %s0, 9
  %s19 = sld [smem:[%s18]]
  %s20 = scalar_lea.smem %s0, 10
  %s21 = sld [smem:[%s20]]
  %s22 = scalar_lea.smem %s0, 11
  %s23 = sld [smem:[%s22]]
  %s24 = scalar_lea.smem %s0, 12
  %s25 = sld [smem:[%s24]]
  %s26 = scalar_lea.smem %s0, 13
  %s27 = sld [smem:[%s26]]
  %s28 = scalar_lea.smem %s0, 14
  %s29 = sld [smem:[%s28]]
  %s30 = scalar_lea.smem %s0, 15
  %s31 = sld [smem:[%s30]]
  %s32 = scalar_lea.smem %s0, 16
  %s33 = sld [smem:[%s32]]
  %s34 = scalar_lea.smem %s0, 17
  %s35 = sld [smem:[%s34]]
  %s36 = scalar_lea.smem %s0, 18
  %s37 = sld [smem:[%s36]]
  %s38 = scalar_lea.smem %s0, 19
  %s39 = sld [smem:[%s38]]
  %s40 = scalar_lea.smem %s0, 20
  %s41 = sld [smem:[%s40]]
  %s42 = scalar_lea.smem %s0, 21
  %s43 = sld [smem:[%s42]]
  %s44 = scalar_lea.smem %s0, 22
  %s45 = sld [smem:[%s44]]
  %s46 = scalar_lea.smem %s0, 23
  %s47 = sld [smem:[%s46]]
  %s48 = scalar_lea.smem %s0, 24
  %s49 = sld [smem:[%s48]]
  %s50 = scalar_lea.smem %s0, 25
  %s51 = sld [smem:[%s50]]
  %s52 = scalar_lea.smem %s0, 26
  %s53 = sld [smem:[%s52]]
  %s54 = scalar_lea.smem %s0, 27
  %s55 = sld [smem:[%s54]]
  %s56 = scalar_lea.smem %s0, 28
  %s57 = sld [smem:[%s56]]
  %s58 = scalar_lea.smem %s0, 29
  %s59 = sld [smem:[%s58]]
  %s60 = scalar_lea.smem %s0, 30
  %s61 = sld [smem:[%s60]]
  %s62 = scalar_lea.smem %s0, 31
  %s63 = sld [smem:[%s62]]
  %s64 = scalar_lea.smem %s0, 32
  %s65 = sld [smem:[%s64]]
  %66 = xla_tuple %s63, %s65
  %s67 = sld [smem:[#allocation0]]
  $region165: #{tpu_custom_call.1} parent=0
    _
  %s69 = ssub.s32 1, %s67
  %s70 = scalar_select 0, %s69, %s67
  $region1: #{tpu_custom_call.1} parent=0
    #allocation4 [shape = 'u8[65536]{0}', space=vmem, size = 0x10000, scoped, tag = 'output window, operand 0']
    #allocation5 [shape = 's32[2]{0}', space=sflag, size = 0x8, scoped, tag = 'scoped memory for tpu_custom_call.1']
    #allocation6 [shape = 'u8[65536]{0}', space=vmem, size = 0x10000, scoped, tag = 'output window, operand 1']
    #allocation7 [shape = 's32[2]{0}', space=sflag, size = 0x8, scoped, tag = 'scoped memory for tpu_custom_call.1']
    %71 = vsyncpa [#allocation5], 0
    %s72 = scalar_lea.sflag [#allocation5], 1
    %73 = vsyncpa %s72, 0
    %74 = vsyncpa [#allocation7], 0
    %s75 = scalar_lea.sflag [#allocation7], 1
    %76 = vsyncpa %s75, 0
    loop: start=0, step=1, limit=4
    $region2: #{tpu_custom_call.1} parent=1 // loop_pre_header
      _
    $region3: #{tpu_custom_call.1} parent=1 // loop_header
      %s78 = sphi 0, %s82
      %p79 = scmp.ge.s32.totalorder %s78, 4
      %s88 = sphi 0, %s90
      %s91 = sphi 0, %s88
      %s92 = sphi 0, %s91
      %s108 = sphi 0, %s92
      %s112 = sphi 0, %s112
      %s114 = sphi 0, %s112
      %s115 = sphi 0, %s114
      %s129 = sphi 0, %s115
      %s133 = sphi 0, %s133
      %s135 = sphi 0, %s133
      %s136 = sphi 0, %s135
      %s150 = sphi 0, %s136
      %s154 = sphi 0, %s154
      %s156 = sphi 0, %s154
      %s157 = sphi 0, %s156
      %s171 = sphi 0, %s157
      %s175 = sphi 0, %s175
      %s177 = sphi 0, %s175
      %s178 = sphi 0, %s177
      %s192 = sphi 0, %s178
      %s196 = sphi 0, %s196
      %s198 = sphi 0, %s196
      %s199 = sphi 0, %s198
      %s213 = sphi 0, %s199
      %s217 = sphi 0, %s217
      %s219 = sphi 0, %s217
      %s220 = sphi 0, %s219
      %s234 = sphi 0, %s220
      %s238 = sphi 0, %s238
      %s240 = sphi 0, %s238
      %s241 = sphi 0, %s240
      %s255 = sphi 0, %s241
      %s259 = sphi 0, %s259
      %s261 = sphi 0, %s259
      %s262 = sphi 0, %s261
      %s276 = sphi 0, %s262
      %s280 = sphi 0, %s280
      %s282 = sphi 0, %s280
      %s283 = sphi 0, %s282
      %s297 = sphi 0, %s283
      %s301 = sphi 0, %s301
      %s303 = sphi 0, %s301
      %s304 = sphi 0, %s303
      %s318 = sphi 0, %s304
      %s322 = sphi 0, %s322
      %s324 = sphi 0, %s322
      %s325 = sphi 0, %s324
      %s339 = sphi 0, %s325
      %s343 = sphi 0, %s343
      %s345 = sphi 0, %s343
      %s346 = sphi 0, %s345
      %s360 = sphi 0, %s346
      %s364 = sphi 0, %s364
      %s366 = sphi 0, %s364
      %s367 = sphi 0, %s366
      %s381 = sphi 0, %s367
      %s385 = sphi 0, %s385
      %s387 = sphi 0, %s385
      %s388 = sphi 0, %s387
      %s402 = sphi 0, %s388
      %s406 = sphi 0, %s406
      %s408 = sphi 0, %s406
      %s409 = sphi 0, %s408
      %s423 = sphi 0, %s409
      %s427 = sphi 0, %s427
      %s429 = sphi 0, %s427
      %s430 = sphi 0, %s429
      %s444 = sphi 0, %s430
      %s448 = sphi 0, %s448
      %s450 = sphi 0, %s448
      %s451 = sphi 0, %s450
      %s465 = sphi 0, %s451
      %s469 = sphi 0, %s469
      %s471 = sphi 0, %s469
      %s472 = sphi 0, %s471
      %s486 = sphi 0, %s472
      %s490 = sphi 0, %s490
      %s492 = sphi 0, %s490
      %s493 = sphi 0, %s492
      %s507 = sphi 0, %s493
      %s511 = sphi 0, %s511
      %s513 = sphi 0, %s511
      %s514 = sphi 0, %s513
      %s528 = sphi 0, %s514
      %s532 = sphi 0, %s532
      %s534 = sphi 0, %s532
      %s535 = sphi 0, %s534
      %s549 = sphi 0, %s535
      %s553 = sphi 0, %s553
      %s555 = sphi 0, %s553
      %s556 = sphi 0, %s555
      %s570 = sphi 0, %s556
      %s574 = sphi 0, %s574
      %s576 = sphi 0, %s574
      %s577 = sphi 0, %s576
      %s591 = sphi 0, %s577
      %s595 = sphi 0, %s595
      %s597 = sphi 0, %s595
      %s598 = sphi 0, %s597
      %s612 = sphi 0, %s598
      %s616 = sphi 0, %s616
      %s618 = sphi 0, %s616
      %s619 = sphi 0, %s618
      %s633 = sphi 0, %s619
      %s637 = sphi 0, %s637
      %s639 = sphi 0, %s637
      %s640 = sphi 0, %s639
      %s654 = sphi 0, %s640
      %s658 = sphi 0, %s658
      %s660 = sphi 0, %s658
      %s661 = sphi 0, %s660
      %s675 = sphi 0, %s661
      %s679 = sphi 0, %s679
      %s681 = sphi 0, %s679
      %s682 = sphi 0, %s681
      %s696 = sphi 0, %s682
      %s700 = sphi 0, %s700
      %s702 = sphi 0, %s700
      %s703 = sphi 0, %s702
      %s717 = sphi 0, %s703
      %s721 = sphi 0, %s721
      %s723 = sphi 0, %s721
      %s724 = sphi 0, %s723
      %s738 = sphi 0, %s724
      %s744 = sphi 0, %s746
      %s747 = sphi 0, %s744
      %s748 = sphi 0, %s747
      %s764 = sphi 0, %s748
      %s770 = sphi 0, %s772
      %s773 = sphi 0, %s770
      %s774 = sphi 0, %s773
      %s790 = sphi 0, %s774
    $region4: #{tpu_custom_call.1} parent=1 // loop_header_branch
      %81 = sbr.rel (%p79) target = $region8
    $region5: #{tpu_custom_call.1} parent=1 // loop_body
      %s83 = ssub.s32 %s78, 1
      %s84 = ssub.s32 %s78, 2
      %s85 = sadd.s32 %s78, 1
      %s86 = ssub.s32 %s78, %s85
      %p87 = scmp.eq.s32.totalorder %s86, 0
      %s89 = sadd.s32 %s88, 1
      %s90 = scalar_select %p87, %s88, %s89
      %p93 = pneg %p87
      %p94 = scmp.eq.s32.totalorder %s78, 1
      %p95 = por %p93, %p94
      %p96 = scmp.ne.s32.totalorder %s88, %s91
      %p97 = scmp.eq.s32.totalorder %s78, 0
      %p98 = por %p96, %p97
      %p99 = scmp.ne.s32.totalorder %s88, %s91
      %p100 = scmp.eq.s32.totalorder %s83, 1
      %p101 = por %p99, %p100
      %p102 = scmp.ne.s32.totalorder %s91, %s92
      %p103 = scmp.eq.s32.totalorder %s83, 0
      %p104 = por %p102, %p103
      %p105 = scmp.ne.s32.totalorder %s91, %s92
      %p106 = scmp.eq.s32.totalorder %s84, 1
      %p107 = por %p105, %p106
      %p109 = scmp.ne.s32.totalorder %s92, %s108
      %p110 = scmp.eq.s32.totalorder %s84, 0
      %p111 = por %p109, %p110
      %s113 = sadd.s32 %s112, 1
      %p116 = scmp.eq.s32.totalorder %s78, 1
      %p117 = scmp.ne.s32.totalorder %s112, %s114
      %p118 = scmp.eq.s32.totalorder %s78, 0
      %p119 = por %p117, %p118
      %p120 = scmp.ne.s32.totalorder %s112, %s114
      %p121 = scmp.eq.s32.totalorder %s83, 1
      %p122 = por %p120, %p121
      %p123 = scmp.ne.s32.totalorder %s114, %s115
      %p124 = scmp.eq.s32.totalorder %s83, 0
      %p125 = por %p123, %p124
      %p126 = scmp.ne.s32.totalorder %s114, %s115
      %p127 = scmp.eq.s32.totalorder %s84, 1
      %p128 = por %p126, %p127
      %p130 = scmp.ne.s32.totalorder %s115, %s129
      %p131 = scmp.eq.s32.totalorder %s84, 0
      %p132 = por %p130, %p131
      %s134 = sadd.s32 %s133, 1
      %p137 = scmp.eq.s32.totalorder %s78, 1
      %p138 = scmp.ne.s32.totalorder %s133, %s135
      %p139 = scmp.eq.s32.totalorder %s78, 0
      %p140 = por %p138, %p139
      %p141 = scmp.ne.s32.totalorder %s133, %s135
      %p142 = scmp.eq.s32.totalorder %s83, 1
      %p143 = por %p141, %p142
      %p144 = scmp.ne.s32.totalorder %s135, %s136
      %p145 = scmp.eq.s32.totalorder %s83, 0
      %p146 = por %p144, %p145
      %p147 = scmp.ne.s32.totalorder %s135, %s136
      %p148 = scmp.eq.s32.totalorder %s84, 1
      %p149 = por %p147, %p148
      %p151 = scmp.ne.s32.totalorder %s136, %s150
      %p152 = scmp.eq.s32.totalorder %s84, 0
      %p153 = por %p151, %p152
      %s155 = sadd.s32 %s154, 1
      %p158 = scmp.eq.s32.totalorder %s78, 1
      %p159 = scmp.ne.s32.totalorder %s154, %s156
      %p160 = scmp.eq.s32.totalorder %s78, 0
      %p161 = por %p159, %p160
      %p162 = scmp.ne.s32.totalorder %s154, %s156
      %p163 = scmp.eq.s32.totalorder %s83, 1
      %p164 = por %p162, %p163
      %p165 = scmp.ne.s32.totalorder %s156, %s157
      %p166 = scmp.eq.s32.totalorder %s83, 0
      %p167 = por %p165, %p166
      %p168 = scmp.ne.s32.totalorder %s156, %s157
      %p169 = scmp.eq.s32.totalorder %s84, 1
      %p170 = por %p168, %p169
      %p172 = scmp.ne.s32.totalorder %s157, %s171
      %p173 = scmp.eq.s32.totalorder %s84, 0
      %p174 = por %p172, %p173
      %s176 = sadd.s32 %s175, 1
      %p179 = scmp.eq.s32.totalorder %s78, 1
      %p180 = scmp.ne.s32.totalorder %s175, %s177
      %p181 = scmp.eq.s32.totalorder %s78, 0
      %p182 = por %p180, %p181
      %p183 = scmp.ne.s32.totalorder %s175, %s177
      %p184 = scmp.eq.s32.totalorder %s83, 1
      %p185 = por %p183, %p184
      %p186 = scmp.ne.s32.totalorder %s177, %s178
      %p187 = scmp.eq.s32.totalorder %s83, 0
      %p188 = por %p186, %p187
      %p189 = scmp.ne.s32.totalorder %s177, %s178
      %p190 = scmp.eq.s32.totalorder %s84, 1
      %p191 = por %p189, %p190
      %p193 = scmp.ne.s32.totalorder %s178, %s192
      %p194 = scmp.eq.s32.totalorder %s84, 0
      %p195 = por %p193, %p194
      %s197 = sadd.s32 %s196, 1
      %p200 = scmp.eq.s32.totalorder %s78, 1
      %p201 = scmp.ne.s32.totalorder %s196, %s198
      %p202 = scmp.eq.s32.totalorder %s78, 0
      %p203 = por %p201, %p202
      %p204 = scmp.ne.s32.totalorder %s196, %s198
      %p205 = scmp.eq.s32.totalorder %s83, 1
      %p206 = por %p204, %p205
      %p207 = scmp.ne.s32.totalorder %s198, %s199
      %p208 = scmp.eq.s32.totalorder %s83, 0
      %p209 = por %p207, %p208
      %p210 = scmp.ne.s32.totalorder %s198, %s199
      %p211 = scmp.eq.s32.totalorder %s84, 1
      %p212 = por %p210, %p211
      %p214 = scmp.ne.s32.totalorder %s199, %s213
      %p215 = scmp.eq.s32.totalorder %s84, 0
      %p216 = por %p214, %p215
      %s218 = sadd.s32 %s217, 1
      %p221 = scmp.eq.s32.totalorder %s78, 1
      %p222 = scmp.ne.s32.totalorder %s217, %s219
      %p223 = scmp.eq.s32.totalorder %s78, 0
      %p224 = por %p222, %p223
      %p225 = scmp.ne.s32.totalorder %s217, %s219
      %p226 = scmp.eq.s32.totalorder %s83, 1
      %p227 = por %p225, %p226
      %p228 = scmp.ne.s32.totalorder %s219, %s220
      %p229 = scmp.eq.s32.totalorder %s83, 0
      %p230 = por %p228, %p229
      %p231 = scmp.ne.s32.totalorder %s219, %s220
      %p232 = scmp.eq.s32.totalorder %s84, 1
      %p233 = por %p231, %p232
      %p235 = scmp.ne.s32.totalorder %s220, %s234
      %p236 = scmp.eq.s32.totalorder %s84, 0
      %p237 = por %p235, %p236
      %s239 = sadd.s32 %s238, 1
      %p242 = scmp.eq.s32.totalorder %s78, 1
      %p243 = scmp.ne.s32.totalorder %s238, %s240
      %p244 = scmp.eq.s32.totalorder %s78, 0
      %p245 = por %p243, %p244
      %p246 = scmp.ne.s32.totalorder %s238, %s240
      %p247 = scmp.eq.s32.totalorder %s83, 1
      %p248 = por %p246, %p247
      %p249 = scmp.ne.s32.totalorder %s240, %s241
      %p250 = scmp.eq.s32.totalorder %s83, 0
      %p251 = por %p249, %p250
      %p252 = scmp.ne.s32.totalorder %s240, %s241
      %p253 = scmp.eq.s32.totalorder %s84, 1
      %p254 = por %p252, %p253
      %p256 = scmp.ne.s32.totalorder %s241, %s255
      %p257 = scmp.eq.s32.totalorder %s84, 0
      %p258 = por %p256, %p257
      %s260 = sadd.s32 %s259, 1
      %p263 = scmp.eq.s32.totalorder %s78, 1
      %p264 = scmp.ne.s32.totalorder %s259, %s261
      %p265 = scmp.eq.s32.totalorder %s78, 0
      %p266 = por %p264, %p265
      %p267 = scmp.ne.s32.totalorder %s259, %s261
      %p268 = scmp.eq.s32.totalorder %s83, 1
      %p269 = por %p267, %p268
      %p270 = scmp.ne.s32.totalorder %s261, %s262
      %p271 = scmp.eq.s32.totalorder %s83, 0
      %p272 = por %p270, %p271
      %p273 = scmp.ne.s32.totalorder %s261, %s262
      %p274 = scmp.eq.s32.totalorder %s84, 1
      %p275 = por %p273, %p274
      %p277 = scmp.ne.s32.totalorder %s262, %s276
      %p278 = scmp.eq.s32.totalorder %s84, 0
      %p279 = por %p277, %p278
      %s281 = sadd.s32 %s280, 1
      %p284 = scmp.eq.s32.totalorder %s78, 1
      %p285 = scmp.ne.s32.totalorder %s280, %s282
      %p286 = scmp.eq.s32.totalorder %s78, 0
      %p287 = por %p285, %p286
      %p288 = scmp.ne.s32.totalorder %s280, %s282
      %p289 = scmp.eq.s32.totalorder %s83, 1
      %p290 = por %p288, %p289
      %p291 = scmp.ne.s32.totalorder %s282, %s283
      %p292 = scmp.eq.s32.totalorder %s83, 0
      %p293 = por %p291, %p292
      %p294 = scmp.ne.s32.totalorder %s282, %s283
      %p295 = scmp.eq.s32.totalorder %s84, 1
      %p296 = por %p294, %p295
      %p298 = scmp.ne.s32.totalorder %s283, %s297
      %p299 = scmp.eq.s32.totalorder %s84, 0
      %p300 = por %p298, %p299
      %s302 = sadd.s32 %s301, 1
      %p305 = scmp.eq.s32.totalorder %s78, 1
      %p306 = scmp.ne.s32.totalorder %s301, %s303
      %p307 = scmp.eq.s32.totalorder %s78, 0
      %p308 = por %p306, %p307
      %p309 = scmp.ne.s32.totalorder %s301, %s303
      %p310 = scmp.eq.s32.totalorder %s83, 1
      %p311 = por %p309, %p310
      %p312 = scmp.ne.s32.totalorder %s303, %s304
      %p313 = scmp.eq.s32.totalorder %s83, 0
      %p314 = por %p312, %p313
      %p315 = scmp.ne.s32.totalorder %s303, %s304
      %p316 = scmp.eq.s32.totalorder %s84, 1
      %p317 = por %p315, %p316
      %p319 = scmp.ne.s32.totalorder %s304, %s318
      %p320 = scmp.eq.s32.totalorder %s84, 0
      %p321 = por %p319, %p320
      %s323 = sadd.s32 %s322, 1
      %p326 = scmp.eq.s32.totalorder %s78, 1
      %p327 = scmp.ne.s32.totalorder %s322, %s324
      %p328 = scmp.eq.s32.totalorder %s78, 0
      %p329 = por %p327, %p328
      %p330 = scmp.ne.s32.totalorder %s322, %s324
      %p331 = scmp.eq.s32.totalorder %s83, 1
      %p332 = por %p330, %p331
      %p333 = scmp.ne.s32.totalorder %s324, %s325
      %p334 = scmp.eq.s32.totalorder %s83, 0
      %p335 = por %p333, %p334
      %p336 = scmp.ne.s32.totalorder %s324, %s325
      %p337 = scmp.eq.s32.totalorder %s84, 1
      %p338 = por %p336, %p337
      %p340 = scmp.ne.s32.totalorder %s325, %s339
      %p341 = scmp.eq.s32.totalorder %s84, 0
      %p342 = por %p340, %p341
      %s344 = sadd.s32 %s343, 1
      %p347 = scmp.eq.s32.totalorder %s78, 1
      %p348 = scmp.ne.s32.totalorder %s343, %s345
      %p349 = scmp.eq.s32.totalorder %s78, 0
      %p350 = por %p348, %p349
      %p351 = scmp.ne.s32.totalorder %s343, %s345
      %p352 = scmp.eq.s32.totalorder %s83, 1
      %p353 = por %p351, %p352
      %p354 = scmp.ne.s32.totalorder %s345, %s346
      %p355 = scmp.eq.s32.totalorder %s83, 0
      %p356 = por %p354, %p355
      %p357 = scmp.ne.s32.totalorder %s345, %s346
      %p358 = scmp.eq.s32.totalorder %s84, 1
      %p359 = por %p357, %p358
      %p361 = scmp.ne.s32.totalorder %s346, %s360
      %p362 = scmp.eq.s32.totalorder %s84, 0
      %p363 = por %p361, %p362
      %s365 = sadd.s32 %s364, 1
      %p368 = scmp.eq.s32.totalorder %s78, 1
      %p369 = scmp.ne.s32.totalorder %s364, %s366
      %p370 = scmp.eq.s32.totalorder %s78, 0
      %p371 = por %p369, %p370
      %p372 = scmp.ne.s32.totalorder %s364, %s366
      %p373 = scmp.eq.s32.totalorder %s83, 1
      %p374 = por %p372, %p373
      %p375 = scmp.ne.s32.totalorder %s366, %s367
      %p376 = scmp.eq.s32.totalorder %s83, 0
      %p377 = por %p375, %p376
      %p378 = scmp.ne.s32.totalorder %s366, %s367
      %p379 = scmp.eq.s32.totalorder %s84, 1
      %p380 = por %p378, %p379
      %p382 = scmp.ne.s32.totalorder %s367, %s381
      %p383 = scmp.eq.s32.totalorder %s84, 0
      %p384 = por %p382, %p383
      %s386 = sadd.s32 %s385, 1
      %p389 = scmp.eq.s32.totalorder %s78, 1
      %p390 = scmp.ne.s32.totalorder %s385, %s387
      %p391 = scmp.eq.s32.totalorder %s78, 0
      %p392 = por %p390, %p391
      %p393 = scmp.ne.s32.totalorder %s385, %s387
      %p394 = scmp.eq.s32.totalorder %s83, 1
      %p395 = por %p393, %p394
      %p396 = scmp.ne.s32.totalorder %s387, %s388
      %p397 = scmp.eq.s32.totalorder %s83, 0
      %p398 = por %p396, %p397
      %p399 = scmp.ne.s32.totalorder %s387, %s388
      %p400 = scmp.eq.s32.totalorder %s84, 1
      %p401 = por %p399, %p400
      %p403 = scmp.ne.s32.totalorder %s388, %s402
      %p404 = scmp.eq.s32.totalorder %s84, 0
      %p405 = por %p403, %p404
      %s407 = sadd.s32 %s406, 1
      %p410 = scmp.eq.s32.totalorder %s78, 1
      %p411 = scmp.ne.s32.totalorder %s406, %s408
      %p412 = scmp.eq.s32.totalorder %s78, 0
      %p413 = por %p411, %p412
      %p414 = scmp.ne.s32.totalorder %s406, %s408
      %p415 = scmp.eq.s32.totalorder %s83, 1
      %p416 = por %p414, %p415
      %p417 = scmp.ne.s32.totalorder %s408, %s409
      %p418 = scmp.eq.s32.totalorder %s83, 0
      %p419 = por %p417, %p418
      %p420 = scmp.ne.s32.totalorder %s408, %s409
      %p421 = scmp.eq.s32.totalorder %s84, 1
      %p422 = por %p420, %p421
      %p424 = scmp.ne.s32.totalorder %s409, %s423
      %p425 = scmp.eq.s32.totalorder %s84, 0
      %p426 = por %p424, %p425
      %s428 = sadd.s32 %s427, 1
      %p431 = scmp.eq.s32.totalorder %s78, 1
      %p432 = scmp.ne.s32.totalorder %s427, %s429
      %p433 = scmp.eq.s32.totalorder %s78, 0
      %p434 = por %p432, %p433
      %p435 = scmp.ne.s32.totalorder %s427, %s429
      %p436 = scmp.eq.s32.totalorder %s83, 1
      %p437 = por %p435, %p436
      %p438 = scmp.ne.s32.totalorder %s429, %s430
      %p439 = scmp.eq.s32.totalorder %s83, 0
      %p440 = por %p438, %p439
      %p441 = scmp.ne.s32.totalorder %s429, %s430
      %p442 = scmp.eq.s32.totalorder %s84, 1
      %p443 = por %p441, %p442
      %p445 = scmp.ne.s32.totalorder %s430, %s444
      %p446 = scmp.eq.s32.totalorder %s84, 0
      %p447 = por %p445, %p446
      %s449 = sadd.s32 %s448, 1
      %p452 = scmp.eq.s32.totalorder %s78, 1
      %p453 = scmp.ne.s32.totalorder %s448, %s450
      %p454 = scmp.eq.s32.totalorder %s78, 0
      %p455 = por %p453, %p454
      %p456 = scmp.ne.s32.totalorder %s448, %s450
      %p457 = scmp.eq.s32.totalorder %s83, 1
      %p458 = por %p456, %p457
      %p459 = scmp.ne.s32.totalorder %s450, %s451
      %p460 = scmp.eq.s32.totalorder %s83, 0
      %p461 = por %p459, %p460
      %p462 = scmp.ne.s32.totalorder %s450, %s451
      %p463 = scmp.eq.s32.totalorder %s84, 1
      %p464 = por %p462, %p463
      %p466 = scmp.ne.s32.totalorder %s451, %s465
      %p467 = scmp.eq.s32.totalorder %s84, 0
      %p468 = por %p466, %p467
      %s470 = sadd.s32 %s469, 1
      %p473 = scmp.eq.s32.totalorder %s78, 1
      %p474 = scmp.ne.s32.totalorder %s469, %s471
      %p475 = scmp.eq.s32.totalorder %s78, 0
      %p476 = por %p474, %p475
      %p477 = scmp.ne.s32.totalorder %s469, %s471
      %p478 = scmp.eq.s32.totalorder %s83, 1
      %p479 = por %p477, %p478
      %p480 = scmp.ne.s32.totalorder %s471, %s472
      %p481 = scmp.eq.s32.totalorder %s83, 0
      %p482 = por %p480, %p481
      %p483 = scmp.ne.s32.totalorder %s471, %s472
      %p484 = scmp.eq.s32.totalorder %s84, 1
      %p485 = por %p483, %p484
      %p487 = scmp.ne.s32.totalorder %s472, %s486
      %p488 = scmp.eq.s32.totalorder %s84, 0
      %p489 = por %p487, %p488
      %s491 = sadd.s32 %s490, 1
      %p494 = scmp.eq.s32.totalorder %s78, 1
      %p495 = scmp.ne.s32.totalorder %s490, %s492
      %p496 = scmp.eq.s32.totalorder %s78, 0
      %p497 = por %p495, %p496
      %p498 = scmp.ne.s32.totalorder %s490, %s492
      %p499 = scmp.eq.s32.totalorder %s83, 1
      %p500 = por %p498, %p499
      %p501 = scmp.ne.s32.totalorder %s492, %s493
      %p502 = scmp.eq.s32.totalorder %s83, 0
      %p503 = por %p501, %p502
      %p504 = scmp.ne.s32.totalorder %s492, %s493
      %p505 = scmp.eq.s32.totalorder %s84, 1
      %p506 = por %p504, %p505
      %p508 = scmp.ne.s32.totalorder %s493, %s507
      %p509 = scmp.eq.s32.totalorder %s84, 0
      %p510 = por %p508, %p509
      %s512 = sadd.s32 %s511, 1
      %p515 = scmp.eq.s32.totalorder %s78, 1
      %p516 = scmp.ne.s32.totalorder %s511, %s513
      %p517 = scmp.eq.s32.totalorder %s78, 0
      %p518 = por %p516, %p517
      %p519 = scmp.ne.s32.totalorder %s511, %s513
      %p520 = scmp.eq.s32.totalorder %s83, 1
      %p521 = por %p519, %p520
      %p522 = scmp.ne.s32.totalorder %s513, %s514
      %p523 = scmp.eq.s32.totalorder %s83, 0
      %p524 = por %p522, %p523
      %p525 = scmp.ne.s32.totalorder %s513, %s514
      %p526 = scmp.eq.s32.totalorder %s84, 1
      %p527 = por %p525, %p526
      %p529 = scmp.ne.s32.totalorder %s514, %s528
      %p530 = scmp.eq.s32.totalorder %s84, 0
      %p531 = por %p529, %p530
      %s533 = sadd.s32 %s532, 1
      %p536 = scmp.eq.s32.totalorder %s78, 1
      %p537 = scmp.ne.s32.totalorder %s532, %s534
      %p538 = scmp.eq.s32.totalorder %s78, 0
      %p539 = por %p537, %p538
      %p540 = scmp.ne.s32.totalorder %s532, %s534
      %p541 = scmp.eq.s32.totalorder %s83, 1
      %p542 = por %p540, %p541
      %p543 = scmp.ne.s32.totalorder %s534, %s535
      %p544 = scmp.eq.s32.totalorder %s83, 0
      %p545 = por %p543, %p544
      %p546 = scmp.ne.s32.totalorder %s534, %s535
      %p547 = scmp.eq.s32.totalorder %s84, 1
      %p548 = por %p546, %p547
      %p550 = scmp.ne.s32.totalorder %s535, %s549
      %p551 = scmp.eq.s32.totalorder %s84, 0
      %p552 = por %p550, %p551
      %s554 = sadd.s32 %s553, 1
      %p557 = scmp.eq.s32.totalorder %s78, 1
      %p558 = scmp.ne.s32.totalorder %s553, %s555
      %p559 = scmp.eq.s32.totalorder %s78, 0
      %p560 = por %p558, %p559
      %p561 = scmp.ne.s32.totalorder %s553, %s555
      %p562 = scmp.eq.s32.totalorder %s83, 1
      %p563 = por %p561, %p562
      %p564 = scmp.ne.s32.totalorder %s555, %s556
      %p565 = scmp.eq.s32.totalorder %s83, 0
      %p566 = por %p564, %p565
      %p567 = scmp.ne.s32.totalorder %s555, %s556
      %p568 = scmp.eq.s32.totalorder %s84, 1
      %p569 = por %p567, %p568
      %p571 = scmp.ne.s32.totalorder %s556, %s570
      %p572 = scmp.eq.s32.totalorder %s84, 0
      %p573 = por %p571, %p572
      %s575 = sadd.s32 %s574, 1
      %p578 = scmp.eq.s32.totalorder %s78, 1
      %p579 = scmp.ne.s32.totalorder %s574, %s576
      %p580 = scmp.eq.s32.totalorder %s78, 0
      %p581 = por %p579, %p580
      %p582 = scmp.ne.s32.totalorder %s574, %s576
      %p583 = scmp.eq.s32.totalorder %s83, 1
      %p584 = por %p582, %p583
      %p585 = scmp.ne.s32.totalorder %s576, %s577
      %p586 = scmp.eq.s32.totalorder %s83, 0
      %p587 = por %p585, %p586
      %p588 = scmp.ne.s32.totalorder %s576, %s577
      %p589 = scmp.eq.s32.totalorder %s84, 1
      %p590 = por %p588, %p589
      %p592 = scmp.ne.s32.totalorder %s577, %s591
      %p593 = scmp.eq.s32.totalorder %s84, 0
      %p594 = por %p592, %p593
      %s596 = sadd.s32 %s595, 1
      %p599 = scmp.eq.s32.totalorder %s78, 1
      %p600 = scmp.ne.s32.totalorder %s595, %s597
      %p601 = scmp.eq.s32.totalorder %s78, 0
      %p602 = por %p600, %p601
      %p603 = scmp.ne.s32.totalorder %s595, %s597
      %p604 = scmp.eq.s32.totalorder %s83, 1
      %p605 = por %p603, %p604
      %p606 = scmp.ne.s32.totalorder %s597, %s598
      %p607 = scmp.eq.s32.totalorder %s83, 0
      %p608 = por %p606, %p607
      %p609 = scmp.ne.s32.totalorder %s597, %s598
      %p610 = scmp.eq.s32.totalorder %s84, 1
      %p611 = por %p609, %p610
      %p613 = scmp.ne.s32.totalorder %s598, %s612
      %p614 = scmp.eq.s32.totalorder %s84, 0
      %p615 = por %p613, %p614
      %s617 = sadd.s32 %s616, 1
      %p620 = scmp.eq.s32.totalorder %s78, 1
      %p621 = scmp.ne.s32.totalorder %s616, %s618
      %p622 = scmp.eq.s32.totalorder %s78, 0
      %p623 = por %p621, %p622
      %p624 = scmp.ne.s32.totalorder %s616, %s618
      %p625 = scmp.eq.s32.totalorder %s83, 1
      %p626 = por %p624, %p625
      %p627 = scmp.ne.s32.totalorder %s618, %s619
      %p628 = scmp.eq.s32.totalorder %s83, 0
      %p629 = por %p627, %p628
      %p630 = scmp.ne.s32.totalorder %s618, %s619
      %p631 = scmp.eq.s32.totalorder %s84, 1
      %p632 = por %p630, %p631
      %p634 = scmp.ne.s32.totalorder %s619, %s633
      %p635 = scmp.eq.s32.totalorder %s84, 0
      %p636 = por %p634, %p635
      %s638 = sadd.s32 %s637, 1
      %p641 = scmp.eq.s32.totalorder %s78, 1
      %p642 = scmp.ne.s32.totalorder %s637, %s639
      %p643 = scmp.eq.s32.totalorder %s78, 0
      %p644 = por %p642, %p643
      %p645 = scmp.ne.s32.totalorder %s637, %s639
      %p646 = scmp.eq.s32.totalorder %s83, 1
      %p647 = por %p645, %p646
      %p648 = scmp.ne.s32.totalorder %s639, %s640
      %p649 = scmp.eq.s32.totalorder %s83, 0
      %p650 = por %p648, %p649
      %p651 = scmp.ne.s32.totalorder %s639, %s640
      %p652 = scmp.eq.s32.totalorder %s84, 1
      %p653 = por %p651, %p652
      %p655 = scmp.ne.s32.totalorder %s640, %s654
      %p656 = scmp.eq.s32.totalorder %s84, 0
      %p657 = por %p655, %p656
      %s659 = sadd.s32 %s658, 1
      %p662 = scmp.eq.s32.totalorder %s78, 1
      %p663 = scmp.ne.s32.totalorder %s658, %s660
      %p664 = scmp.eq.s32.totalorder %s78, 0
      %p665 = por %p663, %p664
      %p666 = scmp.ne.s32.totalorder %s658, %s660
      %p667 = scmp.eq.s32.totalorder %s83, 1
      %p668 = por %p666, %p667
      %p669 = scmp.ne.s32.totalorder %s660, %s661
      %p670 = scmp.eq.s32.totalorder %s83, 0
      %p671 = por %p669, %p670
      %p672 = scmp.ne.s32.totalorder %s660, %s661
      %p673 = scmp.eq.s32.totalorder %s84, 1
      %p674 = por %p672, %p673
      %p676 = scmp.ne.s32.totalorder %s661, %s675
      %p677 = scmp.eq.s32.totalorder %s84, 0
      %p678 = por %p676, %p677
      %s680 = sadd.s32 %s679, 1
      %p683 = scmp.eq.s32.totalorder %s78, 1
      %p684 = scmp.ne.s32.totalorder %s679, %s681
      %p685 = scmp.eq.s32.totalorder %s78, 0
      %p686 = por %p684, %p685
      %p687 = scmp.ne.s32.totalorder %s679, %s681
      %p688 = scmp.eq.s32.totalorder %s83, 1
      %p689 = por %p687, %p688
      %p690 = scmp.ne.s32.totalorder %s681, %s682
      %p691 = scmp.eq.s32.totalorder %s83, 0
      %p692 = por %p690, %p691
      %p693 = scmp.ne.s32.totalorder %s681, %s682
      %p694 = scmp.eq.s32.totalorder %s84, 1
      %p695 = por %p693, %p694
      %p697 = scmp.ne.s32.totalorder %s682, %s696
      %p698 = scmp.eq.s32.totalorder %s84, 0
      %p699 = por %p697, %p698
      %s701 = sadd.s32 %s700, 1
      %p704 = scmp.eq.s32.totalorder %s78, 1
      %p705 = scmp.ne.s32.totalorder %s700, %s702
      %p706 = scmp.eq.s32.totalorder %s78, 0
      %p707 = por %p705, %p706
      %p708 = scmp.ne.s32.totalorder %s700, %s702
      %p709 = scmp.eq.s32.totalorder %s83, 1
      %p710 = por %p708, %p709
      %p711 = scmp.ne.s32.totalorder %s702, %s703
      %p712 = scmp.eq.s32.totalorder %s83, 0
      %p713 = por %p711, %p712
      %p714 = scmp.ne.s32.totalorder %s702, %s703
      %p715 = scmp.eq.s32.totalorder %s84, 1
      %p716 = por %p714, %p715
      %p718 = scmp.ne.s32.totalorder %s703, %s717
      %p719 = scmp.eq.s32.totalorder %s84, 0
      %p720 = por %p718, %p719
      %s722 = sadd.s32 %s721, 1
      %p725 = scmp.eq.s32.totalorder %s78, 1
      %p726 = scmp.ne.s32.totalorder %s721, %s723
      %p727 = scmp.eq.s32.totalorder %s78, 0
      %p728 = por %p726, %p727
      %p729 = scmp.ne.s32.totalorder %s721, %s723
      %p730 = scmp.eq.s32.totalorder %s83, 1
      %p731 = por %p729, %p730
      %p732 = scmp.ne.s32.totalorder %s723, %s724
      %p733 = scmp.eq.s32.totalorder %s83, 0
      %p734 = por %p732, %p733
      %p735 = scmp.ne.s32.totalorder %s723, %s724
      %p736 = scmp.eq.s32.totalorder %s84, 1
      %p737 = por %p735, %p736
      %p739 = scmp.ne.s32.totalorder %s724, %s738
      %p740 = scmp.eq.s32.totalorder %s84, 0
      %p741 = por %p739, %p740
      %s742 = ssub.s32 %s78, %s85
      %p743 = scmp.eq.s32.totalorder %s742, 0
      %s745 = sadd.s32 %s744, 1
      %s746 = scalar_select %p743, %s744, %s745
      %p749 = pneg %p743
      %p750 = scmp.eq.s32.totalorder %s78, 1
      %p751 = por %p749, %p750
      %p752 = scmp.ne.s32.totalorder %s744, %s747
      %p753 = scmp.eq.s32.totalorder %s78, 0
      %p754 = por %p752, %p753
      %p755 = scmp.ne.s32.totalorder %s744, %s747
      %p756 = scmp.eq.s32.totalorder %s83, 1
      %p757 = por %p755, %p756
      %p758 = scmp.ne.s32.totalorder %s747, %s748
      %p759 = scmp.eq.s32.totalorder %s83, 0
      %p760 = por %p758, %p759
      %p761 = scmp.ne.s32.totalorder %s747, %s748
      %p762 = scmp.eq.s32.totalorder %s84, 1
      %p763 = por %p761, %p762
      %p765 = scmp.ne.s32.totalorder %s748, %s764
      %p766 = scmp.eq.s32.totalorder %s84, 0
      %p767 = por %p765, %p766
      %s768 = ssub.s32 %s78, %s85
      %p769 = scmp.eq.s32.totalorder %s768, 0
      %s771 = sadd.s32 %s770, 1
      %s772 = scalar_select %p769, %s770, %s771
      %p775 = pneg %p769
      %p776 = scmp.eq.s32.totalorder %s78, 1
      %p777 = por %p775, %p776
      %p778 = scmp.ne.s32.totalorder %s770, %s773
      %p779 = scmp.eq.s32.totalorder %s78, 0
      %p780 = por %p778, %p779
      %p781 = scmp.ne.s32.totalorder %s770, %s773
      %p782 = scmp.eq.s32.totalorder %s83, 1
      %p783 = por %p781, %p782
      %p784 = scmp.ne.s32.totalorder %s773, %s774
      %p785 = scmp.eq.s32.totalorder %s83, 0
      %p786 = por %p784, %p785
      %p787 = scmp.ne.s32.totalorder %s773, %s774
      %p788 = scmp.eq.s32.totalorder %s84, 1
      %p789 = por %p787, %p788
      %p791 = scmp.ne.s32.totalorder %s774, %s790
      %p792 = scmp.eq.s32.totalorder %s84, 0
      %p793 = por %p791, %p792
      %p794 = scmp.le.s32.totalorder 1, %s78
      %p795 = scmp.lt.s32.totalorder %s78, 3
      %p796 = pnand %p794, %p795
      %p797 = pneg %p796
      // Predicated region
      $region9: #{tpu_custom_call.1} parent=5 // pred_check
        _
      $region10: #{tpu_custom_call.1} parent=5 // pred_check_branch
        %799 = sbr.rel (%p796) target = $region12
      $region11: #{tpu_custom_call.1} parent=5 // pred_region
        %s800 = ssub.s32 %s78, 1
        // Predicated region
        $region13: #{tpu_custom_call.1} parent=11 // pred_check
          %p801 = pneg %p125
        $region14: #{tpu_custom_call.1} parent=11 // pred_check_branch
          %803 = sbr.rel (%p801) target = $region16
        $region15: #{tpu_custom_call.1} parent=11 // pred_region
          _
        $region16: #{tpu_custom_call.1} parent=11 // pred_fallthru
          _
        // Predicated region
        $region17: #{tpu_custom_call.1} parent=11 // pred_check
          %p804 = pneg %p146
        $region18: #{tpu_custom_call.1} parent=11 // pred_check_branch
          %806 = sbr.rel (%p804) target = $region20
        $region19: #{tpu_custom_call.1} parent=11 // pred_region
          _
        $region20: #{tpu_custom_call.1} parent=11 // pred_fallthru
          _
        // Predicated region
        $region21: #{tpu_custom_call.1} parent=11 // pred_check
          %p807 = pneg %p167
        $region22: #{tpu_custom_call.1} parent=11 // pred_check_branch
          %809 = sbr.rel (%p807) target = $region24
        $region23: #{tpu_custom_call.1} parent=11 // pred_region
          _
        $region24: #{tpu_custom_call.1} parent=11 // pred_fallthru
          _
        // Predicated region
        $region25: #{tpu_custom_call.1} parent=11 // pred_check
          %p810 = pneg %p188
        $region26: #{tpu_custom_call.1} parent=11 // pred_check_branch
          %812 = sbr.rel (%p810) target = $region28
        $region27: #{tpu_custom_call.1} parent=11 // pred_region
          _
        $region28: #{tpu_custom_call.1} parent=11 // pred_fallthru
          _
        // Predicated region
        $region29: #{tpu_custom_call.1} parent=11 // pred_check
          %p813 = pneg %p209
        $region30: #{tpu_custom_call.1} parent=11 // pred_check_branch
          %815 = sbr.rel (%p813) target = $region32
        $region31: #{tpu_custom_call.1} parent=11 // pred_region
          _
        $region32: #{tpu_custom_call.1} parent=11 // pred_fallthru
          _
        // Predicated region
        $region33: #{tpu_custom_call.1} parent=11 // pred_check
          %p816 = pneg %p230
        $region34: #{tpu_custom_call.1} parent=11 // pred_check_branch
          %818 = sbr.rel (%p816) target = $region36
        $region35: #{tpu_custom_call.1} parent=11 // pred_region
          _
        $region36: #{tpu_custom_call.1} parent=11 // pred_fallthru
          _
        // Predicated region
        $region37: #{tpu_custom_call.1} parent=11 // pred_check
          %p819 = pneg %p251
        $region38: #{tpu_custom_call.1} parent=11 // pred_check_branch
          %821 = sbr.rel (%p819) target = $region40
        $region39: #{tpu_custom_call.1} parent=11 // pred_region
          _
        $region40: #{tpu_custom_call.1} parent=11 // pred_fallthru
          _
        // Predicated region
        $region41: #{tpu_custom_call.1} parent=11 // pred_check
          %p822 = pneg %p272
        $region42: #{tpu_custom_call.1} parent=11 // pred_check_branch
          %824 = sbr.rel (%p822) target = $region44
        $region43: #{tpu_custom_call.1} parent=11 // pred_region
          _
        $region44: #{tpu_custom_call.1} parent=11 // pred_fallthru
          _
        // Predicated region
        $region45: #{tpu_custom_call.1} parent=11 // pred_check
          %p825 = pneg %p293
        $region46: #{tpu_custom_call.1} parent=11 // pred_check_branch
          %827 = sbr.rel (%p825) target = $region48
        $region47: #{tpu_custom_call.1} parent=11 // pred_region
          _
        $region48: #{tpu_custom_call.1} parent=11 // pred_fallthru
          _
        // Predicated region
        $region49: #{tpu_custom_call.1} parent=11 // pred_check
          %p828 = pneg %p314
        $region50: #{tpu_custom_call.1} parent=11 // pred_check_branch
          %830 = sbr.rel (%p828) target = $region52
        $region51: #{tpu_custom_call.1} parent=11 // pred_region
          _
        $region52: #{tpu_custom_call.1} parent=11 // pred_fallthru
          _
        // Predicated region
        $region53: #{tpu_custom_call.1} parent=11 // pred_check
          %p831 = pneg %p335
        $region54: #{tpu_custom_call.1} parent=11 // pred_check_branch
          %833 = sbr.rel (%p831) target = $region56
        $region55: #{tpu_custom_call.1} parent=11 // pred_region
          _
        $region56: #{tpu_custom_call.1} parent=11 // pred_fallthru
          _
        // Predicated region
        $region57: #{tpu_custom_call.1} parent=11 // pred_check
          %p834 = pneg %p356
        $region58: #{tpu_custom_call.1} parent=11 // pred_check_branch
          %836 = sbr.rel (%p834) target = $region60
        $region59: #{tpu_custom_call.1} parent=11 // pred_region
          _
        $region60: #{tpu_custom_call.1} parent=11 // pred_fallthru
          _
        // Predicated region
        $region61: #{tpu_custom_call.1} parent=11 // pred_check
          %p837 = pneg %p377
        $region62: #{tpu_custom_call.1} parent=11 // pred_check_branch
          %839 = sbr.rel (%p837) target = $region64
        $region63: #{tpu_custom_call.1} parent=11 // pred_region
          _
        $region64: #{tpu_custom_call.1} parent=11 // pred_fallthru
          _
        // Predicated region
        $region65: #{tpu_custom_call.1} parent=11 // pred_check
          %p840 = pneg %p398
        $region66: #{tpu_custom_call.1} parent=11 // pred_check_branch
          %842 = sbr.rel (%p840) target = $region68
        $region67: #{tpu_custom_call.1} parent=11 // pred_region
          _
        $region68: #{tpu_custom_call.1} parent=11 // pred_fallthru
          _
        // Predicated region
        $region69: #{tpu_custom_call.1} parent=11 // pred_check
          %p843 = pneg %p419
        $region70: #{tpu_custom_call.1} parent=11 // pred_check_branch
          %845 = sbr.rel (%p843) target = $region72
        $region71: #{tpu_custom_call.1} parent=11 // pred_region
          _
        $region72: #{tpu_custom_call.1} parent=11 // pred_fallthru
          _
        // Predicated region
        $region73: #{tpu_custom_call.1} parent=11 // pred_check
          %p846 = pneg %p440
        $region74: #{tpu_custom_call.1} parent=11 // pred_check_branch
          %848 = sbr.rel (%p846) target = $region76
        $region75: #{tpu_custom_call.1} parent=11 // pred_region
          _
        $region76: #{tpu_custom_call.1} parent=11 // pred_fallthru
          _
        // Predicated region
        $region77: #{tpu_custom_call.1} parent=11 // pred_check
          %p849 = pneg %p461
        $region78: #{tpu_custom_call.1} parent=11 // pred_check_branch
          %851 = sbr.rel (%p849) target = $region80
        $region79: #{tpu_custom_call.1} parent=11 // pred_region
          _
        $region80: #{tpu_custom_call.1} parent=11 // pred_fallthru
          _
        // Predicated region
        $region81: #{tpu_custom_call.1} parent=11 // pred_check
          %p852 = pneg %p482
        $region82: #{tpu_custom_call.1} parent=11 // pred_check_branch
          %854 = sbr.rel (%p852) target = $region84
        $region83: #{tpu_custom_call.1} parent=11 // pred_region
          _
        $region84: #{tpu_custom_call.1} parent=11 // pred_fallthru
          _
        // Predicated region
        $region85: #{tpu_custom_call.1} parent=11 // pred_check
          %p855 = pneg %p503
        $region86: #{tpu_custom_call.1} parent=11 // pred_check_branch
          %857 = sbr.rel (%p855) target = $region88
        $region87: #{tpu_custom_call.1} parent=11 // pred_region
          _
        $region88: #{tpu_custom_call.1} parent=11 // pred_fallthru
          _
        // Predicated region
        $region89: #{tpu_custom_call.1} parent=11 // pred_check
          %p858 = pneg %p524
        $region90: #{tpu_custom_call.1} parent=11 // pred_check_branch
          %860 = sbr.rel (%p858) target = $region92
        $region91: #{tpu_custom_call.1} parent=11 // pred_region
          _
        $region92: #{tpu_custom_call.1} parent=11 // pred_fallthru
          _
        // Predicated region
        $region93: #{tpu_custom_call.1} parent=11 // pred_check
          %p861 = pneg %p545
        $region94: #{tpu_custom_call.1} parent=11 // pred_check_branch
          %863 = sbr.rel (%p861) target = $region96
        $region95: #{tpu_custom_call.1} parent=11 // pred_region
          _
        $region96: #{tpu_custom_call.1} parent=11 // pred_fallthru
          _
        // Predicated region
        $region97: #{tpu_custom_call.1} parent=11 // pred_check
          %p864 = pneg %p566
        $region98: #{tpu_custom_call.1} parent=11 // pred_check_branch
          %866 = sbr.rel (%p864) target = $region100
        $region99: #{tpu_custom_call.1} parent=11 // pred_region
          _
        $region100: #{tpu_custom_call.1} parent=11 // pred_fallthru
          _
        // Predicated region
        $region101: #{tpu_custom_call.1} parent=11 // pred_check
          %p867 = pneg %p587
        $region102: #{tpu_custom_call.1} parent=11 // pred_check_branch
          %869 = sbr.rel (%p867) target = $region104
        $region103: #{tpu_custom_call.1} parent=11 // pred_region
          _
        $region104: #{tpu_custom_call.1} parent=11 // pred_fallthru
          _
        // Predicated region
        $region105: #{tpu_custom_call.1} parent=11 // pred_check
          %p870 = pneg %p608
        $region106: #{tpu_custom_call.1} parent=11 // pred_check_branch
          %872 = sbr.rel (%p870) target = $region108
        $region107: #{tpu_custom_call.1} parent=11 // pred_region
          _
        $region108: #{tpu_custom_call.1} parent=11 // pred_fallthru
          _
        // Predicated region
        $region109: #{tpu_custom_call.1} parent=11 // pred_check
          %p873 = pneg %p629
        $region110: #{tpu_custom_call.1} parent=11 // pred_check_branch
          %875 = sbr.rel (%p873) target = $region112
        $region111: #{tpu_custom_call.1} parent=11 // pred_region
          _
        $region112: #{tpu_custom_call.1} parent=11 // pred_fallthru
          _
        // Predicated region
        $region113: #{tpu_custom_call.1} parent=11 // pred_check
          %p876 = pneg %p650
        $region114: #{tpu_custom_call.1} parent=11 // pred_check_branch
          %878 = sbr.rel (%p876) target = $region116
        $region115: #{tpu_custom_call.1} parent=11 // pred_region
          _
        $region116: #{tpu_custom_call.1} parent=11 // pred_fallthru
          _
        // Predicated region
        $region117: #{tpu_custom_call.1} parent=11 // pred_check
          %p879 = pneg %p671
        $region118: #{tpu_custom_call.1} parent=11 // pred_check_branch
          %881 = sbr.rel (%p879) target = $region120
        $region119: #{tpu_custom_call.1} parent=11 // pred_region
          _
        $region120: #{tpu_custom_call.1} parent=11 // pred_fallthru
          _
        // Predicated region
        $region121: #{tpu_custom_call.1} parent=11 // pred_check
          %p882 = pneg %p692
        $region122: #{tpu_custom_call.1} parent=11 // pred_check_branch
          %884 = sbr.rel (%p882) target = $region124
        $region123: #{tpu_custom_call.1} parent=11 // pred_region
          _
        $region124: #{tpu_custom_call.1} parent=11 // pred_fallthru
          _
        // Predicated region
        $region125: #{tpu_custom_call.1} parent=11 // pred_check
          %p885 = pneg %p713
        $region126: #{tpu_custom_call.1} parent=11 // pred_check_branch
          %887 = sbr.rel (%p885) target = $region128
        $region127: #{tpu_custom_call.1} parent=11 // pred_region
          _
        $region128: #{tpu_custom_call.1} parent=11 // pred_fallthru
          _
        // Predicated region
        $region129: #{tpu_custom_call.1} parent=11 // pred_check
          %p888 = pneg %p734
        $region130: #{tpu_custom_call.1} parent=11 // pred_check_branch
          %890 = sbr.rel (%p888) target = $region132
        $region131: #{tpu_custom_call.1} parent=11 // pred_region
          _
        $region132: #{tpu_custom_call.1} parent=11 // pred_fallthru
          _
      $region12: #{tpu_custom_call.1} parent=5 // pred_fallthru
        _
      %p891 = scmp.lt.s32.totalorder %s78, 2
      // Predicated region
      $region133: #{tpu_custom_call.1} parent=5 // pred_check
        %p892 = pneg %p891
      $region134: #{tpu_custom_call.1} parent=5 // pred_check_branch
        %894 = sbr.rel (%p892) target = $region136
      $region135: #{tpu_custom_call.1} parent=5 // pred_region
        // Predicated region
        $region137: #{tpu_custom_call.1} parent=135 // pred_check
          %p895 = pneg %p98
        $region138: #{tpu_custom_call.1} parent=135 // pred_check_branch
          %897 = sbr.rel (%p895) target = $region140
        $region139: #{tpu_custom_call.1} parent=135 // pred_region
          %p898 = scmp.lt.s32.totalorder %s78, 1
          %s899 = scalar_select %p898, %s78, 1
          %s900 = smul.addr %s899, 2
          %s901 = smul.addr %s900, 8
          %s902 = scalar_lea.vmem %s1, %s901
        $region140: #{tpu_custom_call.1} parent=135 // pred_fallthru
          _
      $region136: #{tpu_custom_call.1} parent=5 // pred_fallthru
        _
      %p903 = scmp.le.s32.totalorder 1, %s78
      %p904 = scmp.lt.s32.totalorder %s78, 3
      %p905 = pnand %p903, %p904
      %p906 = pneg %p905
      // Predicated region
      $region141: #{tpu_custom_call.1} parent=5 // pred_check
        _
      $region142: #{tpu_custom_call.1} parent=5 // pred_check_branch
        %908 = sbr.rel (%p905) target = $region144
      $region143: #{tpu_custom_call.1} parent=5 // pred_region
        %s909 = ssub.s32 %s78, 1
        %p910 = scmp.lt.s32.totalorder %s83, 1
        %s911 = scalar_select %p910, %s83, 1
        %s912 = smul.addr %s911, 2
        %s913 = smul.addr %s912, 8
        %s914 = scalar_lea.vmem %s1, %s913
        %p915 = pneg %p104
        %p916 = pneg %p101
        %p917 = pneg %p125
        %p918 = pneg %p122
        %p919 = pneg %p146
        %p920 = pneg %p143
        %p921 = pneg %p167
        %p922 = pneg %p164
        %p923 = pneg %p188
        %p924 = pneg %p185
        %p925 = pneg %p209
        %p926 = pneg %p206
        %p927 = pneg %p230
        %p928 = pneg %p227
        %p929 = pneg %p251
        %p930 = pneg %p248
        %p931 = pneg %p272
        %p932 = pneg %p269
        %p933 = pneg %p293
        %p934 = pneg %p290
        %p935 = pneg %p314
        %p936 = pneg %p311
        %p937 = pneg %p335
        %p938 = pneg %p332
        %p939 = pneg %p356
        %p940 = pneg %p353
        %p941 = pneg %p377
        %p942 = pneg %p374
        %p943 = pneg %p398
        %p944 = pneg %p395
        %p945 = pneg %p419
        %p946 = pneg %p416
        %p947 = pneg %p440
        %p948 = pneg %p437
        %p949 = pneg %p461
        %p950 = pneg %p458
        %p951 = pneg %p482
        %p952 = pneg %p479
        %p953 = pneg %p503
        %p954 = pneg %p500
        %p955 = pneg %p524
        %p956 = pneg %p521
        %p957 = pneg %p545
        %p958 = pneg %p542
        %p959 = pneg %p566
        %p960 = pneg %p563
        %p961 = pneg %p587
        %p962 = pneg %p584
        %p963 = pneg %p608
        %p964 = pneg %p605
        %p965 = pneg %p629
        %p966 = pneg %p626
        %p967 = pneg %p650
        %p968 = pneg %p647
        %p969 = pneg %p671
        %p970 = pneg %p668
        %p971 = pneg %p692
        %p972 = pneg %p689
        %p973 = pneg %p713
        %p974 = pneg %p710
        %p975 = pneg %p734
        %p976 = pneg %p731
        %p977 = pneg %p760
        %p978 = pneg %p757
        %s979 = sand.u32 %s747, 1
        %s980 = scalar_lea.sflag [#allocation5], %s979
        %s981 = sand.u32 %s747, 1
        %s982 = smul.addr %s981, 64
        %s983 = scalar_lea.vmem [#allocation4], %s982
        %p984 = pneg %p786
        %p985 = pneg %p783
        %s986 = sand.u32 %s773, 1
        %s987 = scalar_lea.sflag [#allocation7], %s986
        %s988 = sand.u32 %s773, 1
        %s989 = smul.addr %s988, 64
        %s990 = scalar_lea.vmem [#allocation6], %s989
        %p991 = scmp.lt.s32.totalorder %s83, 1
        %s992 = scalar_select %p991, %s83, 1
        %s993 = smul.addr %s992, 2
        %s994 = smul.addr %s993, 8
        %s995 = scalar_lea.vmem %s1, %s994
        %997 = vst [vmem:[#allocation2] sm:$0xff] 0.0
        %vm998 = vcmask 547840
        %999 = vst.msk [vmem:[#allocation2 + $0x8] sm:$0xff] %vm998, 0.0
        %1000 = vst [vmem:[#allocation2 + $0x10] sm:$0xff] 0.0
        %1001 = vst.msk [vmem:[#allocation2 + $0x18] sm:$0xff] %vm998, 0.0
        %1002 = vst [vmem:[#allocation2 + $0x20] sm:$0xff] 0.0
        %1003 = vst.msk [vmem:[#allocation2 + $0x28] sm:$0xff] %vm998, 0.0
        %1004 = vst [vmem:[#allocation2 + $0x30] sm:$0xff] 0.0
        %1005 = vst.msk [vmem:[#allocation2 + $0x38] sm:$0xff] %vm998, 0.0
        %1006 = vst [vmem:[#allocation2 + $0x40] sm:$0xff] 0.0
        %1007 = vst.msk [vmem:[#allocation2 + $0x48] sm:$0xff] %vm998, 0.0
        %1008 = vst [vmem:[#allocation2 + $0x50] sm:$0xff] 0.0
        %1009 = vst.msk [vmem:[#allocation2 + $0x58] sm:$0xff] %vm998, 0.0
        %1010 = vst [vmem:[#allocation2 + $0x60] sm:$0xff] 0.0
        %1011 = vst.msk [vmem:[#allocation2 + $0x68] sm:$0xff] %vm998, 0.0
        %1012 = vst [vmem:[#allocation2 + $0x70] sm:$0xff] 0.0
        %1013 = vst.msk [vmem:[#allocation2 + $0x78] sm:$0xff] %vm998, 0.0
        %1014 = vst [vmem:[#allocation3] sm:$0xff] 0.0
        %1015 = vst.msk [vmem:[#allocation3 + $0x8] sm:$0xff] %vm998, 0.0
        %1016 = vst [vmem:[#allocation3 + $0x10] sm:$0xff] 0.0
        %1017 = vst.msk [vmem:[#allocation3 + $0x18] sm:$0xff] %vm998, 0.0
        %1018 = vst [vmem:[#allocation3 + $0x20] sm:$0xff] 0.0
        %1019 = vst.msk [vmem:[#allocation3 + $0x28] sm:$0xff] %vm998, 0.0
        %1020 = vst [vmem:[#allocation3 + $0x30] sm:$0xff] 0.0
        %1021 = vst.msk [vmem:[#allocation3 + $0x38] sm:$0xff] %vm998, 0.0
        %1022 = vst [vmem:[#allocation3 + $0x40] sm:$0xff] 0.0
        %1023 = vst.msk [vmem:[#allocation3 + $0x48] sm:$0xff] %vm998, 0.0
        %1024 = vst [vmem:[#allocation3 + $0x50] sm:$0xff] 0.0
        %1025 = vst.msk [vmem:[#allocation3 + $0x58] sm:$0xff] %vm998, 0.0
        %1026 = vst [vmem:[#allocation3 + $0x60] sm:$0xff] 0.0
        %1027 = vst.msk [vmem:[#allocation3 + $0x68] sm:$0xff] %vm998, 0.0
        %1028 = vst [vmem:[#allocation3 + $0x70] sm:$0xff] 0.0
        %1029 = vst.msk [vmem:[#allocation3 + $0x78] sm:$0xff] %vm998, 0.0
        %v1030 = vld [vmem:[%s995] sm:$0xff]
        %v1031 = vld [vmem:[%s995 + $0x8] sm:$0xff]
        %vm1032 = vcmask 130048
        %1033 = vst.msk [vmem:[#allocation2 + $0x8] sm:$0xff] %vm1032, %v1030
        %1034 = vst.msk [vmem:[#allocation2 + $0x18] sm:$0xff] %vm1032, %v1031
        %v1035 = vld [vmem:[%s3] sm:$0xf]
        %v1036 = vld [vmem:[%s3 + $0x4] sm:$0xf]
        %v1037 = vld [vmem:[%s3 + $0x8] sm:$0xf]
        %v1038 = vld [vmem:[%s3 + $0xc] sm:$0xf]
        %v1039 = vld [vmem:[%s5] sm:$0xff]
        %v1040 = vld [vmem:[%s5 + $0x8] sm:$0xff]
        %v1041 = vld [vmem:[%s5 + $0x10] sm:$0xff]
        %v1042 = vld [vmem:[%s5 + $0x18] sm:$0xff]
        %v1043 = vld [vmem:[#allocation2 + $0x8] sm:$0xff]
        %v1044 = vld [vmem:[#allocation2 + $0x18] sm:$0xff]
        %v1045 = vpack.c.bf16 %v1044, %v1043
        %1047 = vset.pattern.permute.xlu0 0
        %1048 = vperm.xlu0 %1047, %v1039
        %v1049 = vpop.permute.xlu0 %1048
        %1052 = vset.pattern.permute.xlu0 0
        %1053 = vperm.xlu0 %1052, %v1040
        %v1054 = vpop.permute.xlu0 %1053
        %1057 = vset.pattern.permute.xlu0 0
        %1058 = vperm.xlu0 %1057, %v1041
        %v1059 = vpop.permute.xlu0 %1058
        %1062 = vset.pattern.permute.xlu0 0
        %1063 = vperm.xlu0 %1062, %v1042
        %v1064 = vpop.permute.xlu0 %1063
        %v1070 = vunpack.c.l.b16 %v1035
        %v1071 = vunpack.c.l.b16 %v1036
        %v1072 = vunpack.c.l.b16 %v1037
        %v1073 = vunpack.c.l.b16 %v1038
        %v1074 = vpack.c.b16 %v1071, %v1070
        %v1075 = vpack.c.b16 %v1073, %v1072
        %v1077 = vsel %vm1032, %v1074, 0
        %v1080 = vsel %vm1032, %v1075, 0
        %1082 = vmatprep.subr.bf16.mxu0 0
        %1083 = vmatpush1.bf16.msra.mxu0 %v1045
        %1084 = vmatprep.subr.bf16.mxu0 0
        %1085 = vmatpush1.bf16.msra.mxu0 0
        %1086 = vmatprep.subr.bf16.mxu0 0
        %1087 = vmatpush1.bf16.msra.mxu0 0
        %1088 = vmatprep.subr.bf16.mxu0 0
        %1089 = vmatpush1.bf16.msra.mxu0 0
        %1090 = vmatprep.subr.bf16.mxu0 0
        %1091 = vmatpush1.bf16.msra.mxu0 0
        %1092 = vmatprep.subr.bf16.mxu0 0
        %1093 = vmatpush1.bf16.msra.mxu0 0
        %1094 = vmatprep.subr.bf16.mxu0 0
        %1095 = vmatpush1.bf16.msra.mxu0 0
        %1096 = vmatprep.subr.bf16.mxu0 0
        %1097 = vmatpush1.bf16.msra.mxu0 0
        %1098 = vmatprep.subr.bf16.mxu0 0
        %1099 = vmatpush1.bf16.msra.mxu0 0
        %1100 = vmatprep.subr.bf16.mxu0 0
        %1101 = vmatpush1.bf16.msra.mxu0 0
        %1102 = vmatprep.subr.bf16.mxu0 0
        %1103 = vmatpush1.bf16.msra.mxu0 0
        %1104 = vmatprep.subr.bf16.mxu0 0
        %1105 = vmatpush1.bf16.msra.mxu0 0
        %1106 = vmatprep.subr.bf16.mxu0 0
        %1107 = vmatpush1.bf16.msra.mxu0 0
        %1108 = vmatprep.subr.bf16.mxu0 0
        %1109 = vmatpush1.bf16.msra.mxu0 0
        %1110 = vmatprep.subr.bf16.mxu0 0
        %1111 = vmatpush1.bf16.msra.mxu0 0
        %1112 = vmatprep.subr.bf16.mxu0 0
        %1113 = vmatpush1.bf16.msra.mxu0 0
        %1114 = vmatprep.mubr.bf16.mxu0 0
        %1115 = vmatmul.mubr.bf16.gmra.mrb[0].mxu0 %v1077
        %v1116 = vpop.f32.mrb[0].mxu0
        %v1117 = vadd.f32 %v1049, %v1116
        %v1118 = vpop.f32.mrb[0].mxu0
        %v1119 = vpop.f32.mrb[0].mxu0
        %v1120 = vadd.f32 %v1054, %v1119
        %v1121 = vpop.f32.mrb[0].mxu0
        %1122 = vmatprep.mubr.bf16.mxu0 0
        %1123 = vmatmul.mubr.bf16.gmra.mrb[0].mxu0 %v1080
        %v1124 = vpop.f32.mrb[0].mxu0
        %v1125 = vadd.f32 %v1059, %v1124
        %v1126 = vpop.f32.mrb[0].mxu0
        %v1127 = vpop.f32.mrb[0].mxu0
        %v1128 = vadd.f32 %v1064, %v1127
        %v1129 = vpop.f32.mrb[0].mxu0
        %1130 = vdwg.mxu0
        %1131 = vst.msk [vmem:[#allocation3 + $0x8] sm:$0xff] %vm1032, %v1117
        %1132 = vst.msk [vmem:[#allocation3 + $0x18] sm:$0xff] %vm1032, %v1120
        %1133 = vst.msk [vmem:[#allocation3 + $0x28] sm:$0xff] %vm1032, %v1125
        %1134 = vst.msk [vmem:[#allocation3 + $0x38] sm:$0xff] %vm1032, %v1128
        %v1135 = vld [vmem:[%s7] sm:$0xf]
        %v1136 = vld [vmem:[%s7 + $0x4] sm:$0xf]
        %v1137 = vld [vmem:[%s7 + $0x8] sm:$0xf]
        %v1138 = vld [vmem:[%s7 + $0xc] sm:$0xf]
        %v1139 = vld [vmem:[%s7 + $0x10] sm:$0xf]
        %v1140 = vld [vmem:[%s7 + $0x14] sm:$0xf]
        %v1141 = vld [vmem:[%s7 + $0x18] sm:$0xf]
        %v1142 = vld [vmem:[%s7 + $0x1c] sm:$0xf]
        %v1143 = vld [vmem:[%s9] sm:$0xff]
        %v1144 = vld [vmem:[%s9 + $0x8] sm:$0xff]
        %v1145 = vld [vmem:[%s9 + $0x10] sm:$0xff]
        %v1146 = vld [vmem:[%s9 + $0x18] sm:$0xff]
        %v1147 = vld [vmem:[%s9 + $0x20] sm:$0xff]
        %v1148 = vld [vmem:[%s9 + $0x28] sm:$0xff]
        %v1149 = vld [vmem:[%s9 + $0x30] sm:$0xff]
        %v1150 = vld [vmem:[%s9 + $0x38] sm:$0xff]
        %v1151 = vld [vmem:[#allocation3] sm:$0xff]
        %v1152 = vld [vmem:[#allocation3 + $0x8] sm:$0xff]
        %v1153 = vld [vmem:[#allocation3 + $0x10] sm:$0xff]
        %v1154 = vld [vmem:[#allocation3 + $0x18] sm:$0xff]
        %v1155 = vld [vmem:[#allocation3 + $0x20] sm:$0xff]
        %v1156 = vld [vmem:[#allocation3 + $0x28] sm:$0xff]
        %v1157 = vld [vmem:[#allocation3 + $0x30] sm:$0xff]
        %v1158 = vld [vmem:[#allocation3 + $0x38] sm:$0xff]
        %1163 = vrot.lane.b32.xlu0 %v1152, 127
        %v1164 = vpop.permute.xlu0 %1163
        %1165 = vrot.lane.b32.xlu0 %v1154, 127
        %v1166 = vpop.permute.xlu0 %1165
        %1167 = vrot.lane.b32.xlu0 %v1156, 127
        %v1168 = vpop.permute.xlu0 %1167
        %1169 = vrot.lane.b32.xlu0 %v1158, 127
        %v1170 = vpop.permute.xlu0 %1169
        %1175 = vrot.lane.b32.xlu0 %v1152, 126
        %v1176 = vpop.permute.xlu0 %1175
        %1177 = vrot.lane.b32.xlu0 %v1154, 126
        %v1178 = vpop.permute.xlu0 %1177
        %1179 = vrot.lane.b32.xlu0 %v1156, 126
        %v1180 = vpop.permute.xlu0 %1179
        %1181 = vrot.lane.b32.xlu0 %v1158, 126
        %v1182 = vpop.permute.xlu0 %1181
        %v1187 = vpack.c.bf16 %v1153, %v1151
        %v1188 = vpack.c.bf16 %v1154, %v1152
        %v1189 = vpack.c.bf16 %v1157, %v1155
        %v1190 = vpack.c.bf16 %v1158, %v1156
        %v1191 = vpack.c.bf16 %v1166, %v1164
        %v1192 = vpack.c.bf16 %v1170, %v1168
        %v1193 = vpack.c.bf16 %v1178, %v1176
        %v1194 = vpack.c.bf16 %v1182, %v1180
        %1196 = vset.pattern.permute.xlu0 0
        %1197 = vperm.xlu0 %1196, %v1143
        %v1198 = vpop.permute.xlu0 %1197
        %1201 = vset.pattern.permute.xlu0 0
        %1202 = vperm.xlu0 %1201, %v1144
        %v1203 = vpop.permute.xlu0 %1202
        %1206 = vset.pattern.permute.xlu0 0
        %1207 = vperm.xlu0 %1206, %v1145
        %v1208 = vpop.permute.xlu0 %1207
        %1211 = vset.pattern.permute.xlu0 0
        %1212 = vperm.xlu0 %1211, %v1146
        %v1213 = vpop.permute.xlu0 %1212
        %1216 = vset.pattern.permute.xlu0 0
        %1217 = vperm.xlu0 %1216, %v1147
        %v1218 = vpop.permute.xlu0 %1217
        %1221 = vset.pattern.permute.xlu0 0
        %1222 = vperm.xlu0 %1221, %v1148
        %v1223 = vpop.permute.xlu0 %1222
        %1226 = vset.pattern.permute.xlu0 0
        %1227 = vperm.xlu0 %1226, %v1149
        %v1228 = vpop.permute.xlu0 %1227
        %1231 = vset.pattern.permute.xlu0 0
        %1232 = vperm.xlu0 %1231, %v1150
        %v1233 = vpop.permute.xlu0 %1232
        %v1243 = vunpack.c.l.b16 %v1135
        %v1244 = vunpack.c.l.b16 %v1136
        %v1245 = vunpack.c.l.b16 %v1137
        %v1246 = vunpack.c.l.b16 %v1138
        %v1247 = vunpack.c.l.b16 %v1139
        %v1248 = vunpack.c.l.b16 %v1140
        %v1249 = vunpack.c.l.b16 %v1141
        %v1250 = vunpack.c.l.b16 %v1142
        %v1251 = vpack.c.b16 %v1244, %v1243
        %v1252 = vpack.c.b16 %v1246, %v1245
        %v1253 = vpack.c.b16 %v1248, %v1247
        %v1254 = vpack.c.b16 %v1250, %v1249
        %1263 = vrot.lane.b32.xlu0 %v1187, 1
        %v1264 = vpop.permute.xlu0 %1263
        %1265 = vrot.lane.b32.xlu0 %v1188, 1
        %v1266 = vpop.permute.xlu0 %1265
        %1267 = vrot.lane.b32.xlu0 %v1189, 1
        %v1268 = vpop.permute.xlu0 %1267
        %1269 = vrot.lane.b32.xlu0 %v1190, 1
        %v1270 = vpop.permute.xlu0 %1269
        %1271 = vrot.lane.b32.xlu0 %v1191, 1
        %v1272 = vpop.permute.xlu0 %1271
        %1273 = vrot.lane.b32.xlu0 %v1192, 1
        %v1274 = vpop.permute.xlu0 %1273
        %1275 = vrot.lane.b32.xlu0 %v1193, 1
        %v1276 = vpop.permute.xlu0 %1275
        %1277 = vrot.lane.b32.xlu0 %v1194, 1
        %v1278 = vpop.permute.xlu0 %1277
        %vm1279 = vcmask 7168
        %v1280 = vsel %vm1279, %v1264, %v1266
        %v1281 = vsel %vm1279, %v1268, %v1270
        %vm1288 = vcmask 785408
        %v1290 = vsel %vm1288, %v1251, 0
        %v1293 = vsel %vm1288, %v1252, 0
        %v1296 = vsel %vm1288, %v1253, 0
        %v1299 = vsel %vm1288, %v1254, 0
        %1301 = vmatprep.subr.bf16.mxu0 0
        %1302 = vmatpush1.bf16.msra.mxu0 %v1280
        %1303 = vmatprep.subr.bf16.mxu0 0
        %1304 = vmatpush1.bf16.msra.mxu0 %v1281
        %1305 = vmatprep.subr.bf16.mxu0 0
        %1306 = vmatpush1.bf16.msra.mxu0 %v1272
        %1307 = vmatprep.subr.bf16.mxu0 0
        %1308 = vmatpush1.bf16.msra.mxu0 %v1274
        %1309 = vmatprep.subr.bf16.mxu0 0
        %1310 = vmatpush1.bf16.msra.mxu0 %v1276
        %1311 = vmatprep.subr.bf16.mxu0 0
        %1312 = vmatpush1.bf16.msra.mxu0 %v1278
        %1313 = vmatprep.subr.bf16.mxu0 0
        %1314 = vmatpush1.bf16.msra.mxu0 0
        %1315 = vmatprep.subr.bf16.mxu0 0
        %1316 = vmatpush1.bf16.msra.mxu0 0
        %1317 = vmatprep.subr.bf16.mxu0 0
        %1318 = vmatpush1.bf16.msra.mxu0 0
        %1319 = vmatprep.subr.bf16.mxu0 0
        %1320 = vmatpush1.bf16.msra.mxu0 0
        %1321 = vmatprep.subr.bf16.mxu0 0
        %1322 = vmatpush1.bf16.msra.mxu0 0
        %1323 = vmatprep.subr.bf16.mxu0 0
        %1324 = vmatpush1.bf16.msra.mxu0 0
        %1325 = vmatprep.subr.bf16.mxu0 0
        %1326 = vmatpush1.bf16.msra.mxu0 0
        %1327 = vmatprep.subr.bf16.mxu0 0
        %1328 = vmatpush1.bf16.msra.mxu0 0
        %1329 = vmatprep.subr.bf16.mxu0 0
        %1330 = vmatpush1.bf16.msra.mxu0 0
        %1331 = vmatprep.subr.bf16.mxu0 0
        %1332 = vmatpush1.bf16.msra.mxu0 0
        %1333 = vmatprep.mubr.bf16.mxu0 0
        %1334 = vmatmul.mubr.bf16.gmra.mrb[0].mxu0 %v1290
        %v1335 = vpop.f32.mrb[0].mxu0
        %v1336 = vadd.f32 %v1198, %v1335
        %v1337 = vpop.f32.mrb[0].mxu0
        %v1338 = vpop.f32.mrb[0].mxu0
        %v1339 = vadd.f32 %v1203, %v1338
        %v1340 = vpop.f32.mrb[0].mxu0
        %1341 = vmatprep.mubr.bf16.mxu0 0
        %1342 = vmatmul.mubr.bf16.gmra.mrb[0].mxu0 %v1293
        %v1343 = vpop.f32.mrb[0].mxu0
        %v1344 = vadd.f32 %v1208, %v1343
        %v1345 = vpop.f32.mrb[0].mxu0
        %v1346 = vpop.f32.mrb[0].mxu0
        %v1347 = vadd.f32 %v1213, %v1346
        %v1348 = vpop.f32.mrb[0].mxu0
        %1349 = vmatprep.mubr.bf16.mxu0 0
        %1350 = vmatmul.mubr.bf16.gmra.mrb[0].mxu0 %v1296
        %v1351 = vpop.f32.mrb[0].mxu0
        %v1352 = vadd.f32 %v1218, %v1351
        %v1353 = vpop.f32.mrb[0].mxu0
        %v1354 = vpop.f32.mrb[0].mxu0
        %v1355 = vadd.f32 %v1223, %v1354
        %v1356 = vpop.f32.mrb[0].mxu0
        %1357 = vmatprep.mubr.bf16.mxu0 0
        %1358 = vmatmul.mubr.bf16.gmra.mrb[0].mxu0 %v1299
        %v1359 = vpop.f32.mrb[0].mxu0
        %v1360 = vadd.f32 %v1228, %v1359
        %v1361 = vpop.f32.mrb[0].mxu0
        %v1362 = vpop.f32.mrb[0].mxu0
        %v1363 = vadd.f32 %v1233, %v1362
        %v1364 = vpop.f32.mrb[0].mxu0
        %1365 = vdwg.mxu0
        %v1366 = vxor.u32 %v1336, 2147483648
        %v1367 = vxor.u32 %v1339, 2147483648
        %v1368 = vxor.u32 %v1344, 2147483648
        %v1369 = vxor.u32 %v1347, 2147483648
        %v1370 = vmul.f32 %v1366, 1.442695
        %v1371 = vpow.pop %v1370
        %v1372 = vmul.f32 %v1367, 1.442695
        %v1373 = vpow.pop %v1372
        %v1374 = vmul.f32 %v1368, 1.442695
        %v1375 = vpow.pop %v1374
        %v1376 = vmul.f32 %v1369, 1.442695
        %v1377 = vpow.pop %v1376
        %v1378 = vadd.f32 %v1371, 1.0
        %v1379 = vadd.f32 %v1373, 1.0
        %v1380 = vadd.f32 %v1375, 1.0
        %v1381 = vadd.f32 %v1377, 1.0
        %v1382 = vrcp.pop %v1378
        %v1383 = vmul.f32 1.0, %v1382
        %v1384 = vrcp.pop %v1379
        %v1385 = vmul.f32 1.0, %v1384
        %v1386 = vrcp.pop %v1380
        %v1387 = vmul.f32 1.0, %v1386
        %v1388 = vrcp.pop %v1381
        %v1389 = vmul.f32 1.0, %v1388
        %v1390 = vsub.f32 %v1352, %v1152
        %v1391 = vsub.f32 %v1355, %v1154
        %v1392 = vsub.f32 %v1360, %v1156
        %v1393 = vsub.f32 %v1363, %v1158
        %v1394 = vmul.f32 %v1383, %v1390
        %v1395 = vmul.f32 %v1385, %v1391
        %v1396 = vmul.f32 %v1387, %v1392
        %v1397 = vmul.f32 %v1389, %v1393
        %v1398 = vadd.f32 %v1152, %v1394
        %v1399 = vadd.f32 %v1154, %v1395
        %v1400 = vadd.f32 %v1156, %v1396
        %v1401 = vadd.f32 %v1158, %v1397
        %1402 = vst.msk [vmem:[#allocation2 + $0x8] sm:$0xff] %vm1032, %v1398
        %1403 = vst.msk [vmem:[#allocation2 + $0x18] sm:$0xff] %vm1032, %v1399
        %1404 = vst.msk [vmem:[#allocation2 + $0x28] sm:$0xff] %vm1032, %v1400
        %1405 = vst.msk [vmem:[#allocation2 + $0x38] sm:$0xff] %vm1032, %v1401
        %v1406 = vld [vmem:[%s11] sm:$0xf]
        %v1407 = vld [vmem:[%s11 + $0x4] sm:$0xf]
        %v1408 = vld [vmem:[%s11 + $0x8] sm:$0xf]
        %v1409 = vld [vmem:[%s11 + $0xc] sm:$0xf]
        %v1410 = vld [vmem:[%s11 + $0x10] sm:$0xf]
        %v1411 = vld [vmem:[%s11 + $0x14] sm:$0xf]
        %v1412 = vld [vmem:[%s11 + $0x18] sm:$0xf]
        %v1413 = vld [vmem:[%s11 + $0x1c] sm:$0xf]
        %v1414 = vld [vmem:[%s13] sm:$0xff]
        %v1415 = vld [vmem:[%s13 + $0x8] sm:$0xff]
        %v1416 = vld [vmem:[%s13 + $0x10] sm:$0xff]
        %v1417 = vld [vmem:[%s13 + $0x18] sm:$0xff]
        %v1418 = vld [vmem:[%s13 + $0x20] sm:$0xff]
        %v1419 = vld [vmem:[%s13 + $0x28] sm:$0xff]
        %v1420 = vld [vmem:[%s13 + $0x30] sm:$0xff]
        %v1421 = vld [vmem:[%s13 + $0x38] sm:$0xff]
        %v1422 = vld [vmem:[#allocation2] sm:$0xff]
        %v1423 = vld [vmem:[#allocation2 + $0x8] sm:$0xff]
        %v1424 = vld [vmem:[#allocation2 + $0x10] sm:$0xff]
        %v1425 = vld [vmem:[#allocation2 + $0x18] sm:$0xff]
        %v1426 = vld [vmem:[#allocation2 + $0x20] sm:$0xff]
        %v1427 = vld [vmem:[#allocation2 + $0x28] sm:$0xff]
        %v1428 = vld [vmem:[#allocation2 + $0x30] sm:$0xff]
        %v1429 = vld [vmem:[#allocation2 + $0x38] sm:$0xff]
        %1434 = vrot.lane.b32.xlu0 %v1423, 125
        %v1435 = vpop.permute.xlu0 %1434
        %1436 = vrot.lane.b32.xlu0 %v1425, 125
        %v1437 = vpop.permute.xlu0 %1436
        %1438 = vrot.lane.b32.xlu0 %v1427, 125
        %v1439 = vpop.permute.xlu0 %1438
        %1440 = vrot.lane.b32.xlu0 %v1429, 125
        %v1441 = vpop.permute.xlu0 %1440
        %1446 = vrot.lane.b32.xlu0 %v1423, 122
        %v1447 = vpop.permute.xlu0 %1446
        %1448 = vrot.lane.b32.xlu0 %v1425, 122
        %v1449 = vpop.permute.xlu0 %1448
        %1450 = vrot.lane.b32.xlu0 %v1427, 122
        %v1451 = vpop.permute.xlu0 %1450
        %1452 = vrot.lane.b32.xlu0 %v1429, 122
        %v1453 = vpop.permute.xlu0 %1452
        %v1458 = vpack.c.bf16 %v1424, %v1422
        %v1459 = vpack.c.bf16 %v1425, %v1423
        %v1460 = vpack.c.bf16 %v1428, %v1426
        %v1461 = vpack.c.bf16 %v1429, %v1427
        %v1462 = vpack.c.bf16 %v1437, %v1435
        %v1463 = vpack.c.bf16 %v1441, %v1439
        %v1464 = vpack.c.bf16 %v1449, %v1447
        %v1465 = vpack.c.bf16 %v1453, %v1451
        %1467 = vset.pattern.permute.xlu0 0
        %1468 = vperm.xlu0 %1467, %v1414
        %v1469 = vpop.permute.xlu0 %1468
        %1472 = vset.pattern.permute.xlu0 0
        %1473 = vperm.xlu0 %1472, %v1415
        %v1474 = vpop.permute.xlu0 %1473
        %1477 = vset.pattern.permute.xlu0 0
        %1478 = vperm.xlu0 %1477, %v1416
        %v1479 = vpop.permute.xlu0 %1478
        %1482 = vset.pattern.permute.xlu0 0
        %1483 = vperm.xlu0 %1482, %v1417
        %v1484 = vpop.permute.xlu0 %1483
        %1487 = vset.pattern.permute.xlu0 0
        %1488 = vperm.xlu0 %1487, %v1418
        %v1489 = vpop.permute.xlu0 %1488
        %1492 = vset.pattern.permute.xlu0 0
        %1493 = vperm.xlu0 %1492, %v1419
        %v1494 = vpop.permute.xlu0 %1493
        %1497 = vset.pattern.permute.xlu0 0
        %1498 = vperm.xlu0 %1497, %v1420
        %v1499 = vpop.permute.xlu0 %1498
        %1502 = vset.pattern.permute.xlu0 0
        %1503 = vperm.xlu0 %1502, %v1421
        %v1504 = vpop.permute.xlu0 %1503
        %v1514 = vunpack.c.l.b16 %v1406
        %v1515 = vunpack.c.l.b16 %v1407
        %v1516 = vunpack.c.l.b16 %v1408
        %v1517 = vunpack.c.l.b16 %v1409
        %v1518 = vunpack.c.l.b16 %v1410
        %v1519 = vunpack.c.l.b16 %v1411
        %v1520 = vunpack.c.l.b16 %v1412
        %v1521 = vunpack.c.l.b16 %v1413
        %v1522 = vpack.c.b16 %v1515, %v1514
        %v1523 = vpack.c.b16 %v1517, %v1516
        %v1524 = vpack.c.b16 %v1519, %v1518
        %v1525 = vpack.c.b16 %v1521, %v1520
        %1534 = vrot.lane.b32.xlu0 %v1458, 3
        %v1535 = vpop.permute.xlu0 %1534
        %1536 = vrot.lane.b32.xlu0 %v1459, 3
        %v1537 = vpop.permute.xlu0 %1536
        %1538 = vrot.lane.b32.xlu0 %v1460, 3
        %v1539 = vpop.permute.xlu0 %1538
        %1540 = vrot.lane.b32.xlu0 %v1461, 3
        %v1541 = vpop.permute.xlu0 %1540
        %1542 = vrot.lane.b32.xlu0 %v1462, 3
        %v1543 = vpop.permute.xlu0 %1542
        %1544 = vrot.lane.b32.xlu0 %v1463, 3
        %v1545 = vpop.permute.xlu0 %1544
        %1546 = vrot.lane.b32.xlu0 %v1464, 3
        %v1547 = vpop.permute.xlu0 %1546
        %1548 = vrot.lane.b32.xlu0 %v1465, 3
        %v1549 = vpop.permute.xlu0 %1548
        %vm1550 = vcmask 23552
        %v1551 = vsel %vm1550, %v1535, %v1537
        %v1552 = vsel %vm1550, %v1539, %v1541
        %v1560 = vsel %vm1288, %v1522, 0
        %v1563 = vsel %vm1288, %v1523, 0
        %v1566 = vsel %vm1288, %v1524, 0
        %v1569 = vsel %vm1288, %v1525, 0
        %1571 = vmatprep.subr.bf16.mxu0 0
        %1572 = vmatpush1.bf16.msra.mxu0 %v1551
        %1573 = vmatprep.subr.bf16.mxu0 0
        %1574 = vmatpush1.bf16.msra.mxu0 %v1552
        %1575 = vmatprep.subr.bf16.mxu0 0
        %1576 = vmatpush1.bf16.msra.mxu0 %v1543
        %1577 = vmatprep.subr.bf16.mxu0 0
        %1578 = vmatpush1.bf16.msra.mxu0 %v1545
        %1579 = vmatprep.subr.bf16.mxu0 0
        %1580 = vmatpush1.bf16.msra.mxu0 %v1547
        %1581 = vmatprep.subr.bf16.mxu0 0
        %1582 = vmatpush1.bf16.msra.mxu0 %v1549
        %1583 = vmatprep.subr.bf16.mxu0 0
        %1584 = vmatpush1.bf16.msra.mxu0 0
        %1585 = vmatprep.subr.bf16.mxu0 0
        %1586 = vmatpush1.bf16.msra.mxu0 0
        %1587 = vmatprep.subr.bf16.mxu0 0
        %1588 = vmatpush1.bf16.msra.mxu0 0
        %1589 = vmatprep.subr.bf16.mxu0 0
        %1590 = vmatpush1.bf16.msra.mxu0 0
        %1591 = vmatprep.subr.bf16.mxu0 0
        %1592 = vmatpush1.bf16.msra.mxu0 0
        %1593 = vmatprep.subr.bf16.mxu0 0
        %1594 = vmatpush1.bf16.msra.mxu0 0
        %1595 = vmatprep.subr.bf16.mxu0 0
        %1596 = vmatpush1.bf16.msra.mxu0 0
        %1597 = vmatprep.subr.bf16.mxu0 0
        %1598 = vmatpush1.bf16.msra.mxu0 0
        %1599 = vmatprep.subr.bf16.mxu0 0
        %1600 = vmatpush1.bf16.msra.mxu0 0
        %1601 = vmatprep.subr.bf16.mxu0 0
        %1602 = vmatpush1.bf16.msra.mxu0 0
        %1603 = vmatprep.mubr.bf16.mxu0 0
        %1604 = vmatmul.mubr.bf16.gmra.mrb[0].mxu0 %v1560
        %v1605 = vpop.f32.mrb[0].mxu0
        %v1606 = vadd.f32 %v1469, %v1605
        %v1607 = vpop.f32.mrb[0].mxu0
        %v1608 = vpop.f32.mrb[0].mxu0
        %v1609 = vadd.f32 %v1474, %v1608
        %v1610 = vpop.f32.mrb[0].mxu0
        %1611 = vmatprep.mubr.bf16.mxu0 0
        %1612 = vmatmul.mubr.bf16.gmra.mrb[0].mxu0 %v1563
        %v1613 = vpop.f32.mrb[0].mxu0
        %v1614 = vadd.f32 %v1479, %v1613
        %v1615 = vpop.f32.mrb[0].mxu0
        %v1616 = vpop.f32.mrb[0].mxu0
        %v1617 = vadd.f32 %v1484, %v1616
        %v1618 = vpop.f32.mrb[0].mxu0
        %1619 = vmatprep.mubr.bf16.mxu0 0
        %1620 = vmatmul.mubr.bf16.gmra.mrb[0].mxu0 %v1566
        %v1621 = vpop.f32.mrb[0].mxu0
        %v1622 = vadd.f32 %v1489, %v1621
        %v1623 = vpop.f32.mrb[0].mxu0
        %v1624 = vpop.f32.mrb[0].mxu0
        %v1625 = vadd.f32 %v1494, %v1624
        %v1626 = vpop.f32.mrb[0].mxu0
        %1627 = vmatprep.mubr.bf16.mxu0 0
        %1628 = vmatmul.mubr.bf16.gmra.mrb[0].mxu0 %v1569
        %v1629 = vpop.f32.mrb[0].mxu0
        %v1630 = vadd.f32 %v1499, %v1629
        %v1631 = vpop.f32.mrb[0].mxu0
        %v1632 = vpop.f32.mrb[0].mxu0
        %v1633 = vadd.f32 %v1504, %v1632
        %v1634 = vpop.f32.mrb[0].mxu0
        %1635 = vdwg.mxu0
        %v1636 = vxor.u32 %v1606, 2147483648
        %v1637 = vxor.u32 %v1609, 2147483648
        %v1638 = vxor.u32 %v1614, 2147483648
        %v1639 = vxor.u32 %v1617, 2147483648
        %v1640 = vmul.f32 %v1636, 1.442695
        %v1641 = vpow.pop %v1640
        %v1642 = vmul.f32 %v1637, 1.442695
        %v1643 = vpow.pop %v1642
        %v1644 = vmul.f32 %v1638, 1.442695
        %v1645 = vpow.pop %v1644
        %v1646 = vmul.f32 %v1639, 1.442695
        %v1647 = vpow.pop %v1646
        %v1648 = vadd.f32 %v1641, 1.0
        %v1649 = vadd.f32 %v1643, 1.0
        %v1650 = vadd.f32 %v1645, 1.0
        %v1651 = vadd.f32 %v1647, 1.0
        %v1652 = vrcp.pop %v1648
        %v1653 = vmul.f32 1.0, %v1652
        %v1654 = vrcp.pop %v1649
        %v1655 = vmul.f32 1.0, %v1654
        %v1656 = vrcp.pop %v1650
        %v1657 = vmul.f32 1.0, %v1656
        %v1658 = vrcp.pop %v1651
        %v1659 = vmul.f32 1.0, %v1658
        %v1660 = vsub.f32 %v1622, %v1423
        %v1661 = vsub.f32 %v1625, %v1425
        %v1662 = vsub.f32 %v1630, %v1427
        %v1663 = vsub.f32 %v1633, %v1429
        %v1664 = vmul.f32 %v1653, %v1660
        %v1665 = vmul.f32 %v1655, %v1661
        %v1666 = vmul.f32 %v1657, %v1662
        %v1667 = vmul.f32 %v1659, %v1663
        %v1668 = vadd.f32 %v1423, %v1664
        %v1669 = vadd.f32 %v1425, %v1665
        %v1670 = vadd.f32 %v1427, %v1666
        %v1671 = vadd.f32 %v1429, %v1667
        %1672 = vst.msk [vmem:[#allocation3 + $0x8] sm:$0xff] %vm1032, %v1668
        %1673 = vst.msk [vmem:[#allocation3 + $0x18] sm:$0xff] %vm1032, %v1669
        %1674 = vst.msk [vmem:[#allocation3 + $0x28] sm:$0xff] %vm1032, %v1670
        %1675 = vst.msk [vmem:[#allocation3 + $0x38] sm:$0xff] %vm1032, %v1671
        %v1676 = vld [vmem:[%s15] sm:$0xf]
        %v1677 = vld [vmem:[%s15 + $0x4] sm:$0xf]
        %v1678 = vld [vmem:[%s15 + $0x8] sm:$0xf]
        %v1679 = vld [vmem:[%s15 + $0xc] sm:$0xf]
        %v1680 = vld [vmem:[%s17] sm:$0xff]
        %v1681 = vld [vmem:[%s17 + $0x8] sm:$0xff]
        %v1682 = vld [vmem:[%s17 + $0x10] sm:$0xff]
        %v1683 = vld [vmem:[%s17 + $0x18] sm:$0xff]
        %v1684 = vld [vmem:[#allocation3 + $0x8] sm:$0xff]
        %v1685 = vld [vmem:[#allocation3 + $0x18] sm:$0xff]
        %v1686 = vld [vmem:[#allocation3 + $0x28] sm:$0xff]
        %v1687 = vld [vmem:[#allocation3 + $0x38] sm:$0xff]
        %v1688 = vpack.c.bf16 %v1685, %v1684
        %v1689 = vpack.c.bf16 %v1687, %v1686
        %v1694 = vunpack.c.l.b16 %v1676
        %v1695 = vunpack.c.l.b16 %v1677
        %v1696 = vunpack.c.l.b16 %v1678
        %v1697 = vunpack.c.l.b16 %v1679
        %v1698 = vpack.c.b16 %v1695, %v1694
        %v1699 = vpack.c.b16 %v1697, %v1696
        %vm1700 = vcmask 261120
        %v1702 = vsel %vm1700, %v1698, 0
        %v1705 = vsel %vm1700, %v1699, 0
        %1707 = vmatprep.subr.bf16.mxu0 0
        %1708 = vmatpush1.bf16.msra.mxu0 %v1688
        %1709 = vmatprep.subr.bf16.mxu0 0
        %1710 = vmatpush1.bf16.msra.mxu0 %v1689
        %1711 = vmatprep.subr.bf16.mxu0 0
        %1712 = vmatpush1.bf16.msra.mxu0 0
        %1713 = vmatprep.subr.bf16.mxu0 0
        %1714 = vmatpush1.bf16.msra.mxu0 0
        %1715 = vmatprep.subr.bf16.mxu0 0
        %1716 = vmatpush1.bf16.msra.mxu0 0
        %1717 = vmatprep.subr.bf16.mxu0 0
        %1718 = vmatpush1.bf16.msra.mxu0 0
        %1719 = vmatprep.subr.bf16.mxu0 0
        %1720 = vmatpush1.bf16.msra.mxu0 0
        %1721 = vmatprep.subr.bf16.mxu0 0
        %1722 = vmatpush1.bf16.msra.mxu0 0
        %1723 = vmatprep.subr.bf16.mxu0 0
        %1724 = vmatpush1.bf16.msra.mxu0 0
        %1725 = vmatprep.subr.bf16.mxu0 0
        %1726 = vmatpush1.bf16.msra.mxu0 0
        %1727 = vmatprep.subr.bf16.mxu0 0
        %1728 = vmatpush1.bf16.msra.mxu0 0
        %1729 = vmatprep.subr.bf16.mxu0 0
        %1730 = vmatpush1.bf16.msra.mxu0 0
        %1731 = vmatprep.subr.bf16.mxu0 0
        %1732 = vmatpush1.bf16.msra.mxu0 0
        %1733 = vmatprep.subr.bf16.mxu0 0
        %1734 = vmatpush1.bf16.msra.mxu0 0
        %1735 = vmatprep.subr.bf16.mxu0 0
        %1736 = vmatpush1.bf16.msra.mxu0 0
        %1737 = vmatprep.subr.bf16.mxu0 0
        %1738 = vmatpush1.bf16.msra.mxu0 0
        %1739 = vmatprep.mubr.bf16.mxu0 0
        %1740 = vmatmul.mubr.bf16.gmra.mrb[0].mxu0 %v1702
        %v1741 = vpop.f32.mrb[0].mxu0
        %v1742 = vadd.f32 0.0, %v1741
        %v1743 = vpop.f32.mrb[0].mxu0
        %v1744 = vpop.f32.mrb[0].mxu0
        %v1745 = vadd.f32 0.0, %v1744
        %v1746 = vpop.f32.mrb[0].mxu0
        %1747 = vmatprep.mubr.bf16.mxu0 0
        %1748 = vmatmul.mubr.bf16.gmra.mrb[0].mxu0 %v1705
        %v1749 = vpop.f32.mrb[0].mxu0
        %v1750 = vadd.f32 0.0, %v1749
        %v1751 = vpop.f32.mrb[0].mxu0
        %v1752 = vpop.f32.mrb[0].mxu0
        %v1753 = vadd.f32 0.0, %v1752
        %v1754 = vpop.f32.mrb[0].mxu0
        %1755 = vdwg.mxu0
        %1756 = vrot.lane.b32.xlu0 %v1698, 96
        %v1757 = vpop.permute.xlu0 %1756
        %1758 = vrot.lane.b32.xlu0 %v1699, 96
        %v1759 = vpop.permute.xlu0 %1758
        %v1761 = vsel %vm1700, %v1757, 0
        %v1764 = vsel %vm1700, %v1759, 0
        %1766 = vmatprep.subr.bf16.mxu0 0
        %1767 = vmatpush1.bf16.msra.mxu0 %v1688
        %1768 = vmatprep.subr.bf16.mxu0 0
        %1769 = vmatpush1.bf16.msra.mxu0 %v1689
        %1770 = vmatprep.subr.bf16.mxu0 0
        %1771 = vmatpush1.bf16.msra.mxu0 0
        %1772 = vmatprep.subr.bf16.mxu0 0
        %1773 = vmatpush1.bf16.msra.mxu0 0
        %1774 = vmatprep.subr.bf16.mxu0 0
        %1775 = vmatpush1.bf16.msra.mxu0 0
        %1776 = vmatprep.subr.bf16.mxu0 0
        %1777 = vmatpush1.bf16.msra.mxu0 0
        %1778 = vmatprep.subr.bf16.mxu0 0
        %1779 = vmatpush1.bf16.msra.mxu0 0
        %1780 = vmatprep.subr.bf16.mxu0 0
        %1781 = vmatpush1.bf16.msra.mxu0 0
        %1782 = vmatprep.subr.bf16.mxu0 0
        %1783 = vmatpush1.bf16.msra.mxu0 0
        %1784 = vmatprep.subr.bf16.mxu0 0
        %1785 = vmatpush1.bf16.msra.mxu0 0
        %1786 = vmatprep.subr.bf16.mxu0 0
        %1787 = vmatpush1.bf16.msra.mxu0 0
        %1788 = vmatprep.subr.bf16.mxu0 0
        %1789 = vmatpush1.bf16.msra.mxu0 0
        %1790 = vmatprep.subr.bf16.mxu0 0
        %1791 = vmatpush1.bf16.msra.mxu0 0
        %1792 = vmatprep.subr.bf16.mxu0 0
        %1793 = vmatpush1.bf16.msra.mxu0 0
        %1794 = vmatprep.subr.bf16.mxu0 0
        %1795 = vmatpush1.bf16.msra.mxu0 0
        %1796 = vmatprep.subr.bf16.mxu0 0
        %1797 = vmatpush1.bf16.msra.mxu0 0
        %1798 = vmatprep.mubr.bf16.mxu0 0
        %1799 = vmatmul.mubr.bf16.gmra.mrb[0].mxu0 %v1761
        %v1800 = vpop.f32.mrb[0].mxu0
        %v1801 = vadd.f32 0.0, %v1800
        %v1802 = vpop.f32.mrb[0].mxu0
        %v1803 = vpop.f32.mrb[0].mxu0
        %v1804 = vadd.f32 0.0, %v1803
        %v1805 = vpop.f32.mrb[0].mxu0
        %1806 = vmatprep.mubr.bf16.mxu0 0
        %1807 = vmatmul.mubr.bf16.gmra.mrb[0].mxu0 %v1764
        %v1808 = vpop.f32.mrb[0].mxu0
        %v1809 = vadd.f32 0.0, %v1808
        %v1810 = vpop.f32.mrb[0].mxu0
        %v1811 = vpop.f32.mrb[0].mxu0
        %v1812 = vadd.f32 0.0, %v1811
        %v1813 = vpop.f32.mrb[0].mxu0
        %1814 = vdwg.mxu0
        %v1815 = vlaneseq
        %v1816 = vshrl.u32 %v1815, 7
        %v1817 = vadd.s32 %v1816, 8
        %v1818 = vlaneseq
        %v1819 = vand.u32 %v1818, 127
        %v1820 = vmul.u32 %v1816, 2
        %v1821 = vmul.u32 %v1817, 2
        %vm1822 = vcmp.eq.s32.totalorder %v1819, %v1820
        %vm1823 = vcmp.eq.s32.totalorder %v1819, %v1821
        %v1824 = vsel %vm1822, 1, 0
        %v1825 = vsel %vm1823, 1, 0
        %v1826 = vcvt.s32.f32 %v1824
        %v1827 = vcvt.s32.f32 %v1825
        %v1828 = vadd.s32 %v1820, 1
        %v1829 = vadd.s32 %v1821, 1
        %vm1830 = vcmp.eq.s32.totalorder %v1819, %v1828
        %vm1831 = vcmp.eq.s32.totalorder %v1819, %v1829
        %v1832 = vsel %vm1830, 1, 0
        %v1833 = vsel %vm1831, 1, 0
        %v1834 = vcvt.s32.f32 %v1832
        %v1835 = vcvt.s32.f32 %v1833
        %v1837 = vsel %vm1032, %v1801, 0
        %v1840 = vsel %vm1032, %v1804, 0
        %v1843 = vsel %vm1032, %v1809, 0
        %v1846 = vsel %vm1032, %v1812, 0
        %1848 = vmatprep.subr.mxu0 0.0
        %1849 = vmatpush1.msra.mxu0 %v1834
        %1850 = vmatprep.subr.mxu0 0.0
        %1851 = vmatpush1.msra.mxu0 %v1835
        %1852 = vmatprep.subr.mxu0 0.0
        %1853 = vmatpush1.msra.mxu0 0.0
        %1854 = vmatprep.subr.mxu0 0.0
        %1855 = vmatpush1.msra.mxu0 0.0
        %1856 = vmatprep.subr.mxu0 0.0
        %1857 = vmatpush1.msra.mxu0 0.0
        %1858 = vmatprep.subr.mxu0 0.0
        %1859 = vmatpush1.msra.mxu0 0.0
        %1860 = vmatprep.subr.mxu0 0.0
        %1861 = vmatpush1.msra.mxu0 0.0
        %1862 = vmatprep.subr.mxu0 0.0
        %1863 = vmatpush1.msra.mxu0 0.0
        %1864 = vmatprep.subr.mxu0 0.0
        %1865 = vmatpush1.msra.mxu0 0.0
        %1866 = vmatprep.subr.mxu0 0.0
        %1867 = vmatpush1.msra.mxu0 0.0
        %1868 = vmatprep.subr.mxu0 0.0
        %1869 = vmatpush1.msra.mxu0 0.0
        %1870 = vmatprep.subr.mxu0 0.0
        %1871 = vmatpush1.msra.mxu0 0.0
        %1872 = vmatprep.subr.mxu0 0.0
        %1873 = vmatpush1.msra.mxu0 0.0
        %1874 = vmatprep.subr.mxu0 0.0
        %1875 = vmatpush1.msra.mxu0 0.0
        %1876 = vmatprep.subr.mxu0 0.0
        %1877 = vmatpush1.msra.mxu0 0.0
        %1878 = vmatprep.subr.mxu0 0.0
        %1879 = vmatpush1.msra.mxu0 0.0
        %1880 = vmatprep.subr.mxu0 0.0
        %1881 = vmatpush1.msra.mxu0 0.0
        %1882 = vmatprep.subr.mxu0 0.0
        %1883 = vmatpush1.msra.mxu0 0.0
        %1884 = vmatprep.subr.mxu0 0.0
        %1885 = vmatpush1.msra.mxu0 0.0
        %1886 = vmatprep.subr.mxu0 0.0
        %1887 = vmatpush1.msra.mxu0 0.0
        %1888 = vmatprep.subr.mxu0 0.0
        %1889 = vmatpush1.msra.mxu0 0.0
        %1890 = vmatprep.subr.mxu0 0.0
        %1891 = vmatpush1.msra.mxu0 0.0
        %1892 = vmatprep.subr.mxu0 0.0
        %1893 = vmatpush1.msra.mxu0 0.0
        %1894 = vmatprep.subr.mxu0 0.0
        %1895 = vmatpush1.msra.mxu0 0.0
        %1896 = vmatprep.subr.mxu0 0.0
        %1897 = vmatpush1.msra.mxu0 0.0
        %1898 = vmatprep.subr.mxu0 0.0
        %1899 = vmatpush1.msra.mxu0 0.0
        %1900 = vmatprep.subr.mxu0 0.0
        %1901 = vmatpush1.msra.mxu0 0.0
        %1902 = vmatprep.subr.mxu0 0.0
        %1903 = vmatpush1.msra.mxu0 0.0
        %1904 = vmatprep.subr.mxu0 0.0
        %1905 = vmatpush1.msra.mxu0 0.0
        %1906 = vmatprep.subr.mxu0 0.0
        %1907 = vmatpush1.msra.mxu0 0.0
        %1908 = vmatprep.subr.mxu0 0.0
        %1909 = vmatpush1.msra.mxu0 0.0
        %1910 = vmatprep.subr.mxu0 0.0
        %1911 = vmatpush1.msra.mxu0 0.0
        %1912 = vmatprep.mubr.f32.mxu0 0.0
        %1913 = vmatmul.mubr.f32.gmra.mrb[0].mxu0 %v1837
        %v1914 = vpop.f32.mrb[0].mxu0
        %v1915 = vadd.f32 0.0, %v1914
        %v1916 = vpop.f32.mrb[0].mxu0
        %1917 = vmatprep.mubr.f32.mxu0 0.0
        %1918 = vmatmul.mubr.f32.gmra.mrb[0].mxu0 %v1840
        %v1919 = vpop.f32.mrb[0].mxu0
        %v1920 = vadd.f32 0.0, %v1919
        %v1921 = vpop.f32.mrb[0].mxu0
        %1922 = vmatprep.mubr.f32.mxu0 0.0
        %1923 = vmatmul.mubr.f32.gmra.mrb[0].mxu0 %v1843
        %v1924 = vpop.f32.mrb[0].mxu0
        %v1925 = vadd.f32 0.0, %v1924
        %v1926 = vpop.f32.mrb[0].mxu0
        %1927 = vmatprep.mubr.f32.mxu0 0.0
        %1928 = vmatmul.mubr.f32.gmra.mrb[0].mxu0 %v1846
        %v1929 = vpop.f32.mrb[0].mxu0
        %v1930 = vadd.f32 0.0, %v1929
        %v1931 = vpop.f32.mrb[0].mxu0
        %1932 = vdwg.mxu0
        %v1934 = vsel %vm1032, %v1742, 0
        %v1937 = vsel %vm1032, %v1745, 0
        %v1940 = vsel %vm1032, %v1750, 0
        %v1943 = vsel %vm1032, %v1753, 0
        %1945 = vmatprep.subr.mxu0 0.0
        %1946 = vmatpush1.msra.mxu0 %v1826
        %1947 = vmatprep.subr.mxu0 0.0
        %1948 = vmatpush1.msra.mxu0 %v1827
        %1949 = vmatprep.subr.mxu0 0.0
        %1950 = vmatpush1.msra.mxu0 0.0
        %1951 = vmatprep.subr.mxu0 0.0
        %1952 = vmatpush1.msra.mxu0 0.0
        %1953 = vmatprep.subr.mxu0 0.0
        %1954 = vmatpush1.msra.mxu0 0.0
        %1955 = vmatprep.subr.mxu0 0.0
        %1956 = vmatpush1.msra.mxu0 0.0
        %1957 = vmatprep.subr.mxu0 0.0
        %1958 = vmatpush1.msra.mxu0 0.0
        %1959 = vmatprep.subr.mxu0 0.0
        %1960 = vmatpush1.msra.mxu0 0.0
        %1961 = vmatprep.subr.mxu0 0.0
        %1962 = vmatpush1.msra.mxu0 0.0
        %1963 = vmatprep.subr.mxu0 0.0
        %1964 = vmatpush1.msra.mxu0 0.0
        %1965 = vmatprep.subr.mxu0 0.0
        %1966 = vmatpush1.msra.mxu0 0.0
        %1967 = vmatprep.subr.mxu0 0.0
        %1968 = vmatpush1.msra.mxu0 0.0
        %1969 = vmatprep.subr.mxu0 0.0
        %1970 = vmatpush1.msra.mxu0 0.0
        %1971 = vmatprep.subr.mxu0 0.0
        %1972 = vmatpush1.msra.mxu0 0.0
        %1973 = vmatprep.subr.mxu0 0.0
        %1974 = vmatpush1.msra.mxu0 0.0
        %1975 = vmatprep.subr.mxu0 0.0
        %1976 = vmatpush1.msra.mxu0 0.0
        %1977 = vmatprep.subr.mxu0 0.0
        %1978 = vmatpush1.msra.mxu0 0.0
        %1979 = vmatprep.subr.mxu0 0.0
        %1980 = vmatpush1.msra.mxu0 0.0
        %1981 = vmatprep.subr.mxu0 0.0
        %1982 = vmatpush1.msra.mxu0 0.0
        %1983 = vmatprep.subr.mxu0 0.0
        %1984 = vmatpush1.msra.mxu0 0.0
        %1985 = vmatprep.subr.mxu0 0.0
        %1986 = vmatpush1.msra.mxu0 0.0
        %1987 = vmatprep.subr.mxu0 0.0
        %1988 = vmatpush1.msra.mxu0 0.0
        %1989 = vmatprep.subr.mxu0 0.0
        %1990 = vmatpush1.msra.mxu0 0.0
        %1991 = vmatprep.subr.mxu0 0.0
        %1992 = vmatpush1.msra.mxu0 0.0
        %1993 = vmatprep.subr.mxu0 0.0
        %1994 = vmatpush1.msra.mxu0 0.0
        %1995 = vmatprep.subr.mxu0 0.0
        %1996 = vmatpush1.msra.mxu0 0.0
        %1997 = vmatprep.subr.mxu0 0.0
        %1998 = vmatpush1.msra.mxu0 0.0
        %1999 = vmatprep.subr.mxu0 0.0
        %2000 = vmatpush1.msra.mxu0 0.0
        %2001 = vmatprep.subr.mxu0 0.0
        %2002 = vmatpush1.msra.mxu0 0.0
        %2003 = vmatprep.subr.mxu0 0.0
        %2004 = vmatpush1.msra.mxu0 0.0
        %2005 = vmatprep.subr.mxu0 0.0
        %2006 = vmatpush1.msra.mxu0 0.0
        %2007 = vmatprep.subr.mxu0 0.0
        %2008 = vmatpush1.msra.mxu0 0.0
        %2009 = vmatprep.mubr.f32.mxu0 0.0
        %2010 = vmatmul.mubr.f32.gmra.mrb[0].mxu0 %v1934
        %v2011 = vpop.f32.mrb[0].mxu0
        %v2012 = vadd.f32 %v1915, %v2011
        %v2013 = vpop.f32.mrb[0].mxu0
        %2014 = vmatprep.mubr.f32.mxu0 0.0
        %2015 = vmatmul.mubr.f32.gmra.mrb[0].mxu0 %v1937
        %v2016 = vpop.f32.mrb[0].mxu0
        %v2017 = vadd.f32 %v1920, %v2016
        %v2018 = vpop.f32.mrb[0].mxu0
        %2019 = vmatprep.mubr.f32.mxu0 0.0
        %2020 = vmatmul.mubr.f32.gmra.mrb[0].mxu0 %v1940
        %v2021 = vpop.f32.mrb[0].mxu0
        %v2022 = vadd.f32 %v1925, %v2021
        %v2023 = vpop.f32.mrb[0].mxu0
        %2024 = vmatprep.mubr.f32.mxu0 0.0
        %2025 = vmatmul.mubr.f32.gmra.mrb[0].mxu0 %v1943
        %v2026 = vpop.f32.mrb[0].mxu0
        %v2027 = vadd.f32 %v1930, %v2026
        %v2028 = vpop.f32.mrb[0].mxu0
        %2029 = vdwg.mxu0
        %2031 = vset.pattern.permute.xlu0 0
        %2032 = vperm.xlu0 %2031, %v1680
        %v2033 = vpop.permute.xlu0 %2032
        %2036 = vset.pattern.permute.xlu0 0
        %2037 = vperm.xlu0 %2036, %v1681
        %v2038 = vpop.permute.xlu0 %2037
        %2041 = vset.pattern.permute.xlu0 0
        %2042 = vperm.xlu0 %2041, %v1682
        %v2043 = vpop.permute.xlu0 %2042
        %2046 = vset.pattern.permute.xlu0 0
        %2047 = vperm.xlu0 %2046, %v1683
        %v2048 = vpop.permute.xlu0 %2047
        %v2050 = vadd.f32 %v2012, %v2033
        %v2051 = vadd.f32 %v2017, %v2038
        %v2052 = vadd.f32 %v2022, %v2043
        %v2053 = vadd.f32 %v2027, %v2048
        %2054 = vst.msk [vmem:[#allocation2 + $0x8] sm:$0xff] %vm1700, %v2050
        %2055 = vst.msk [vmem:[#allocation2 + $0x18] sm:$0xff] %vm1700, %v2051
        %2056 = vst.msk [vmem:[#allocation2 + $0x28] sm:$0xff] %vm1700, %v2052
        %2057 = vst.msk [vmem:[#allocation2 + $0x38] sm:$0xff] %vm1700, %v2053
        %v2058 = vld [vmem:[%s19] sm:$0xf]
        %v2059 = vld [vmem:[%s19 + $0x4] sm:$0xf]
        %v2060 = vld [vmem:[%s19 + $0x8] sm:$0xf]
        %v2061 = vld [vmem:[%s19 + $0xc] sm:$0xf]
        %v2062 = vld [vmem:[%s19 + $0x10] sm:$0xf]
        %v2063 = vld [vmem:[%s19 + $0x14] sm:$0xf]
        %v2064 = vld [vmem:[%s19 + $0x18] sm:$0xf]
        %v2065 = vld [vmem:[%s19 + $0x1c] sm:$0xf]
        %v2066 = vld [vmem:[%s21] sm:$0xff]
        %v2067 = vld [vmem:[%s21 + $0x8] sm:$0xff]
        %v2068 = vld [vmem:[%s21 + $0x10] sm:$0xff]
        %v2069 = vld [vmem:[%s21 + $0x18] sm:$0xff]
        %v2070 = vld [vmem:[%s21 + $0x20] sm:$0xff]
        %v2071 = vld [vmem:[%s21 + $0x28] sm:$0xff]
        %v2072 = vld [vmem:[%s21 + $0x30] sm:$0xff]
        %v2073 = vld [vmem:[%s21 + $0x38] sm:$0xff]
        %v2074 = vld [vmem:[#allocation2] sm:$0xff]
        %v2075 = vld [vmem:[#allocation2 + $0x8] sm:$0xff]
        %v2076 = vld [vmem:[#allocation2 + $0x10] sm:$0xff]
        %v2077 = vld [vmem:[#allocation2 + $0x18] sm:$0xff]
        %v2078 = vld [vmem:[#allocation2 + $0x20] sm:$0xff]
        %v2079 = vld [vmem:[#allocation2 + $0x28] sm:$0xff]
        %v2080 = vld [vmem:[#allocation2 + $0x30] sm:$0xff]
        %v2081 = vld [vmem:[#allocation2 + $0x38] sm:$0xff]
        %2086 = vrot.lane.b32.xlu0 %v2075, 127
        %v2087 = vpop.permute.xlu0 %2086
        %2088 = vrot.lane.b32.xlu0 %v2077, 127
        %v2089 = vpop.permute.xlu0 %2088
        %2090 = vrot.lane.b32.xlu0 %v2079, 127
        %v2091 = vpop.permute.xlu0 %2090
        %2092 = vrot.lane.b32.xlu0 %v2081, 127
        %v2093 = vpop.permute.xlu0 %2092
        %2098 = vrot.lane.b32.xlu0 %v2075, 126
        %v2099 = vpop.permute.xlu0 %2098
        %2100 = vrot.lane.b32.xlu0 %v2077, 126
        %v2101 = vpop.permute.xlu0 %2100
        %2102 = vrot.lane.b32.xlu0 %v2079, 126
        %v2103 = vpop.permute.xlu0 %2102
        %2104 = vrot.lane.b32.xlu0 %v2081, 126
        %v2105 = vpop.permute.xlu0 %2104
        %v2110 = vpack.c.bf16 %v2076, %v2074
        %v2111 = vpack.c.bf16 %v2077, %v2075
        %v2112 = vpack.c.bf16 %v2080, %v2078
        %v2113 = vpack.c.bf16 %v2081, %v2079
        %v2114 = vpack.c.bf16 %v2089, %v2087
        %v2115 = vpack.c.bf16 %v2093, %v2091
        %v2116 = vpack.c.bf16 %v2101, %v2099
        %v2117 = vpack.c.bf16 %v2105, %v2103
        %2119 = vset.pattern.permute.xlu0 0
        %2120 = vperm.xlu0 %2119, %v2066
        %v2121 = vpop.permute.xlu0 %2120
        %2124 = vset.pattern.permute.xlu0 0
        %2125 = vperm.xlu0 %2124, %v2067
        %v2126 = vpop.permute.xlu0 %2125
        %2129 = vset.pattern.permute.xlu0 0
        %2130 = vperm.xlu0 %2129, %v2068
        %v2131 = vpop.permute.xlu0 %2130
        %2134 = vset.pattern.permute.xlu0 0
        %2135 = vperm.xlu0 %2134, %v2069
        %v2136 = vpop.permute.xlu0 %2135
        %2139 = vset.pattern.permute.xlu0 0
        %2140 = vperm.xlu0 %2139, %v2070
        %v2141 = vpop.permute.xlu0 %2140
        %2144 = vset.pattern.permute.xlu0 0
        %2145 = vperm.xlu0 %2144, %v2071
        %v2146 = vpop.permute.xlu0 %2145
        %2149 = vset.pattern.permute.xlu0 0
        %2150 = vperm.xlu0 %2149, %v2072
        %v2151 = vpop.permute.xlu0 %2150
        %2154 = vset.pattern.permute.xlu0 0
        %2155 = vperm.xlu0 %2154, %v2073
        %v2156 = vpop.permute.xlu0 %2155
        %v2166 = vunpack.c.l.b16 %v2058
        %v2167 = vunpack.c.l.b16 %v2059
        %v2168 = vunpack.c.l.b16 %v2060
        %v2169 = vunpack.c.l.b16 %v2061
        %v2170 = vunpack.c.l.b16 %v2062
        %v2171 = vunpack.c.l.b16 %v2063
        %v2172 = vunpack.c.l.b16 %v2064
        %v2173 = vunpack.c.l.b16 %v2065
        %v2174 = vpack.c.b16 %v2167, %v2166
        %v2175 = vpack.c.b16 %v2169, %v2168
        %v2176 = vpack.c.b16 %v2171, %v2170
        %v2177 = vpack.c.b16 %v2173, %v2172
        %2186 = vrot.lane.b32.xlu0 %v2110, 1
        %v2187 = vpop.permute.xlu0 %2186
        %2188 = vrot.lane.b32.xlu0 %v2111, 1
        %v2189 = vpop.permute.xlu0 %2188
        %2190 = vrot.lane.b32.xlu0 %v2112, 1
        %v2191 = vpop.permute.xlu0 %2190
        %2192 = vrot.lane.b32.xlu0 %v2113, 1
        %v2193 = vpop.permute.xlu0 %2192
        %2194 = vrot.lane.b32.xlu0 %v2114, 1
        %v2195 = vpop.permute.xlu0 %2194
        %2196 = vrot.lane.b32.xlu0 %v2115, 1
        %v2197 = vpop.permute.xlu0 %2196
        %2198 = vrot.lane.b32.xlu0 %v2116, 1
        %v2199 = vpop.permute.xlu0 %2198
        %2200 = vrot.lane.b32.xlu0 %v2117, 1
        %v2201 = vpop.permute.xlu0 %2200
        %v2202 = vsel %vm1279, %v2187, %v2189
        %v2203 = vsel %vm1279, %v2191, %v2193
        %v2211 = vsel %vm1288, %v2174, 0
        %v2214 = vsel %vm1288, %v2175, 0
        %v2217 = vsel %vm1288, %v2176, 0
        %v2220 = vsel %vm1288, %v2177, 0
        %2222 = vmatprep.subr.bf16.mxu0 0
        %2223 = vmatpush1.bf16.msra.mxu0 %v2202
        %2224 = vmatprep.subr.bf16.mxu0 0
        %2225 = vmatpush1.bf16.msra.mxu0 %v2203
        %2226 = vmatprep.subr.bf16.mxu0 0
        %2227 = vmatpush1.bf16.msra.mxu0 %v2195
        %2228 = vmatprep.subr.bf16.mxu0 0
        %2229 = vmatpush1.bf16.msra.mxu0 %v2197
        %2230 = vmatprep.subr.bf16.mxu0 0
        %2231 = vmatpush1.bf16.msra.mxu0 %v2199
        %2232 = vmatprep.subr.bf16.mxu0 0
        %2233 = vmatpush1.bf16.msra.mxu0 %v2201
        %2234 = vmatprep.subr.bf16.mxu0 0
        %2235 = vmatpush1.bf16.msra.mxu0 0
        %2236 = vmatprep.subr.bf16.mxu0 0
        %2237 = vmatpush1.bf16.msra.mxu0 0
        %2238 = vmatprep.subr.bf16.mxu0 0
        %2239 = vmatpush1.bf16.msra.mxu0 0
        %2240 = vmatprep.subr.bf16.mxu0 0
        %2241 = vmatpush1.bf16.msra.mxu0 0
        %2242 = vmatprep.subr.bf16.mxu0 0
        %2243 = vmatpush1.bf16.msra.mxu0 0
        %2244 = vmatprep.subr.bf16.mxu0 0
        %2245 = vmatpush1.bf16.msra.mxu0 0
        %2246 = vmatprep.subr.bf16.mxu0 0
        %2247 = vmatpush1.bf16.msra.mxu0 0
        %2248 = vmatprep.subr.bf16.mxu0 0
        %2249 = vmatpush1.bf16.msra.mxu0 0
        %2250 = vmatprep.subr.bf16.mxu0 0
        %2251 = vmatpush1.bf16.msra.mxu0 0
        %2252 = vmatprep.subr.bf16.mxu0 0
        %2253 = vmatpush1.bf16.msra.mxu0 0
        %2254 = vmatprep.mubr.bf16.mxu0 0
        %2255 = vmatmul.mubr.bf16.gmra.mrb[0].mxu0 %v2211
        %v2256 = vpop.f32.mrb[0].mxu0
        %v2257 = vadd.f32 %v2121, %v2256
        %v2258 = vpop.f32.mrb[0].mxu0
        %v2259 = vpop.f32.mrb[0].mxu0
        %v2260 = vadd.f32 %v2126, %v2259
        %v2261 = vpop.f32.mrb[0].mxu0
        %2262 = vmatprep.mubr.bf16.mxu0 0
        %2263 = vmatmul.mubr.bf16.gmra.mrb[0].mxu0 %v2214
        %v2264 = vpop.f32.mrb[0].mxu0
        %v2265 = vadd.f32 %v2131, %v2264
        %v2266 = vpop.f32.mrb[0].mxu0
        %v2267 = vpop.f32.mrb[0].mxu0
        %v2268 = vadd.f32 %v2136, %v2267
        %v2269 = vpop.f32.mrb[0].mxu0
        %2270 = vmatprep.mubr.bf16.mxu0 0
        %2271 = vmatmul.mubr.bf16.gmra.mrb[0].mxu0 %v2217
        %v2272 = vpop.f32.mrb[0].mxu0
        %v2273 = vadd.f32 %v2141, %v2272
        %v2274 = vpop.f32.mrb[0].mxu0
        %v2275 = vpop.f32.mrb[0].mxu0
        %v2276 = vadd.f32 %v2146, %v2275
        %v2277 = vpop.f32.mrb[0].mxu0
        %2278 = vmatprep.mubr.bf16.mxu0 0
        %2279 = vmatmul.mubr.bf16.gmra.mrb[0].mxu0 %v2220
        %v2280 = vpop.f32.mrb[0].mxu0
        %v2281 = vadd.f32 %v2151, %v2280
        %v2282 = vpop.f32.mrb[0].mxu0
        %v2283 = vpop.f32.mrb[0].mxu0
        %v2284 = vadd.f32 %v2156, %v2283
        %v2285 = vpop.f32.mrb[0].mxu0
        %2286 = vdwg.mxu0
        %v2287 = vxor.u32 %v2257, 2147483648
        %v2288 = vxor.u32 %v2260, 2147483648
        %v2289 = vxor.u32 %v2265, 2147483648
        %v2290 = vxor.u32 %v2268, 2147483648
        %v2291 = vmul.f32 %v2287, 1.442695
        %v2292 = vpow.pop %v2291
        %v2293 = vmul.f32 %v2288, 1.442695
        %v2294 = vpow.pop %v2293
        %v2295 = vmul.f32 %v2289, 1.442695
        %v2296 = vpow.pop %v2295
        %v2297 = vmul.f32 %v2290, 1.442695
        %v2298 = vpow.pop %v2297
        %v2299 = vadd.f32 %v2292, 1.0
        %v2300 = vadd.f32 %v2294, 1.0
        %v2301 = vadd.f32 %v2296, 1.0
        %v2302 = vadd.f32 %v2298, 1.0
        %v2303 = vrcp.pop %v2299
        %v2304 = vmul.f32 1.0, %v2303
        %v2305 = vrcp.pop %v2300
        %v2306 = vmul.f32 1.0, %v2305
        %v2307 = vrcp.pop %v2301
        %v2308 = vmul.f32 1.0, %v2307
        %v2309 = vrcp.pop %v2302
        %v2310 = vmul.f32 1.0, %v2309
        %v2311 = vsub.f32 %v2273, %v2075
        %v2312 = vsub.f32 %v2276, %v2077
        %v2313 = vsub.f32 %v2281, %v2079
        %v2314 = vsub.f32 %v2284, %v2081
        %v2315 = vmul.f32 %v2304, %v2311
        %v2316 = vmul.f32 %v2306, %v2312
        %v2317 = vmul.f32 %v2308, %v2313
        %v2318 = vmul.f32 %v2310, %v2314
        %v2319 = vadd.f32 %v2075, %v2315
        %v2320 = vadd.f32 %v2077, %v2316
        %v2321 = vadd.f32 %v2079, %v2317
        %v2322 = vadd.f32 %v2081, %v2318
        %2323 = vst.msk [vmem:[#allocation3 + $0x8] sm:$0xff] %vm1700, %v2319
        %2324 = vst.msk [vmem:[#allocation3 + $0x18] sm:$0xff] %vm1700, %v2320
        %2325 = vst.msk [vmem:[#allocation3 + $0x28] sm:$0xff] %vm1700, %v2321
        %2326 = vst.msk [vmem:[#allocation3 + $0x38] sm:$0xff] %vm1700, %v2322
        %v2327 = vld [vmem:[%s23] sm:$0xf]
        %v2328 = vld [vmem:[%s23 + $0x4] sm:$0xf]
        %v2329 = vld [vmem:[%s23 + $0x8] sm:$0xf]
        %v2330 = vld [vmem:[%s23 + $0xc] sm:$0xf]
        %v2331 = vld [vmem:[%s23 + $0x10] sm:$0xf]
        %v2332 = vld [vmem:[%s23 + $0x14] sm:$0xf]
        %v2333 = vld [vmem:[%s23 + $0x18] sm:$0xf]
        %v2334 = vld [vmem:[%s23 + $0x1c] sm:$0xf]
        %v2335 = vld [vmem:[%s25] sm:$0xff]
        %v2336 = vld [vmem:[%s25 + $0x8] sm:$0xff]
        %v2337 = vld [vmem:[%s25 + $0x10] sm:$0xff]
        %v2338 = vld [vmem:[%s25 + $0x18] sm:$0xff]
        %v2339 = vld [vmem:[%s25 + $0x20] sm:$0xff]
        %v2340 = vld [vmem:[%s25 + $0x28] sm:$0xff]
        %v2341 = vld [vmem:[%s25 + $0x30] sm:$0xff]
        %v2342 = vld [vmem:[%s25 + $0x38] sm:$0xff]
        %v2343 = vld [vmem:[#allocation3] sm:$0xff]
        %v2344 = vld [vmem:[#allocation3 + $0x8] sm:$0xff]
        %v2345 = vld [vmem:[#allocation3 + $0x10] sm:$0xff]
        %v2346 = vld [vmem:[#allocation3 + $0x18] sm:$0xff]
        %v2347 = vld [vmem:[#allocation3 + $0x20] sm:$0xff]
        %v2348 = vld [vmem:[#allocation3 + $0x28] sm:$0xff]
        %v2349 = vld [vmem:[#allocation3 + $0x30] sm:$0xff]
        %v2350 = vld [vmem:[#allocation3 + $0x38] sm:$0xff]
        %2355 = vrot.lane.b32.xlu0 %v2344, 125
        %v2356 = vpop.permute.xlu0 %2355
        %2357 = vrot.lane.b32.xlu0 %v2346, 125
        %v2358 = vpop.permute.xlu0 %2357
        %2359 = vrot.lane.b32.xlu0 %v2348, 125
        %v2360 = vpop.permute.xlu0 %2359
        %2361 = vrot.lane.b32.xlu0 %v2350, 125
        %v2362 = vpop.permute.xlu0 %2361
        %2367 = vrot.lane.b32.xlu0 %v2344, 122
        %v2368 = vpop.permute.xlu0 %2367
        %2369 = vrot.lane.b32.xlu0 %v2346, 122
        %v2370 = vpop.permute.xlu0 %2369
        %2371 = vrot.lane.b32.xlu0 %v2348, 122
        %v2372 = vpop.permute.xlu0 %2371
        %2373 = vrot.lane.b32.xlu0 %v2350, 122
        %v2374 = vpop.permute.xlu0 %2373
        %v2379 = vpack.c.bf16 %v2345, %v2343
        %v2380 = vpack.c.bf16 %v2346, %v2344
        %v2381 = vpack.c.bf16 %v2349, %v2347
        %v2382 = vpack.c.bf16 %v2350, %v2348
        %v2383 = vpack.c.bf16 %v2358, %v2356
        %v2384 = vpack.c.bf16 %v2362, %v2360
        %v2385 = vpack.c.bf16 %v2370, %v2368
        %v2386 = vpack.c.bf16 %v2374, %v2372
        %2388 = vset.pattern.permute.xlu0 0
        %2389 = vperm.xlu0 %2388, %v2335
        %v2390 = vpop.permute.xlu0 %2389
        %2393 = vset.pattern.permute.xlu0 0
        %2394 = vperm.xlu0 %2393, %v2336
        %v2395 = vpop.permute.xlu0 %2394
        %2398 = vset.pattern.permute.xlu0 0
        %2399 = vperm.xlu0 %2398, %v2337
        %v2400 = vpop.permute.xlu0 %2399
        %2403 = vset.pattern.permute.xlu0 0
        %2404 = vperm.xlu0 %2403, %v2338
        %v2405 = vpop.permute.xlu0 %2404
        %2408 = vset.pattern.permute.xlu0 0
        %2409 = vperm.xlu0 %2408, %v2339
        %v2410 = vpop.permute.xlu0 %2409
        %2413 = vset.pattern.permute.xlu0 0
        %2414 = vperm.xlu0 %2413, %v2340
        %v2415 = vpop.permute.xlu0 %2414
        %2418 = vset.pattern.permute.xlu0 0
        %2419 = vperm.xlu0 %2418, %v2341
        %v2420 = vpop.permute.xlu0 %2419
        %2423 = vset.pattern.permute.xlu0 0
        %2424 = vperm.xlu0 %2423, %v2342
        %v2425 = vpop.permute.xlu0 %2424
        %v2435 = vunpack.c.l.b16 %v2327
        %v2436 = vunpack.c.l.b16 %v2328
        %v2437 = vunpack.c.l.b16 %v2329
        %v2438 = vunpack.c.l.b16 %v2330
        %v2439 = vunpack.c.l.b16 %v2331
        %v2440 = vunpack.c.l.b16 %v2332
        %v2441 = vunpack.c.l.b16 %v2333
        %v2442 = vunpack.c.l.b16 %v2334
        %v2443 = vpack.c.b16 %v2436, %v2435
        %v2444 = vpack.c.b16 %v2438, %v2437
        %v2445 = vpack.c.b16 %v2440, %v2439
        %v2446 = vpack.c.b16 %v2442, %v2441
        %2455 = vrot.lane.b32.xlu0 %v2379, 3
        %v2456 = vpop.permute.xlu0 %2455
        %2457 = vrot.lane.b32.xlu0 %v2380, 3
        %v2458 = vpop.permute.xlu0 %2457
        %2459 = vrot.lane.b32.xlu0 %v2381, 3
        %v2460 = vpop.permute.xlu0 %2459
        %2461 = vrot.lane.b32.xlu0 %v2382, 3
        %v2462 = vpop.permute.xlu0 %2461
        %2463 = vrot.lane.b32.xlu0 %v2383, 3
        %v2464 = vpop.permute.xlu0 %2463
        %2465 = vrot.lane.b32.xlu0 %v2384, 3
        %v2466 = vpop.permute.xlu0 %2465
        %2467 = vrot.lane.b32.xlu0 %v2385, 3
        %v2468 = vpop.permute.xlu0 %2467
        %2469 = vrot.lane.b32.xlu0 %v2386, 3
        %v2470 = vpop.permute.xlu0 %2469
        %v2471 = vsel %vm1550, %v2456, %v2458
        %v2472 = vsel %vm1550, %v2460, %v2462
        %v2480 = vsel %vm1288, %v2443, 0
        %v2483 = vsel %vm1288, %v2444, 0
        %v2486 = vsel %vm1288, %v2445, 0
        %v2489 = vsel %vm1288, %v2446, 0
        %2491 = vmatprep.subr.bf16.mxu0 0
        %2492 = vmatpush1.bf16.msra.mxu0 %v2471
        %2493 = vmatprep.subr.bf16.mxu0 0
        %2494 = vmatpush1.bf16.msra.mxu0 %v2472
        %2495 = vmatprep.subr.bf16.mxu0 0
        %2496 = vmatpush1.bf16.msra.mxu0 %v2464
        %2497 = vmatprep.subr.bf16.mxu0 0
        %2498 = vmatpush1.bf16.msra.mxu0 %v2466
        %2499 = vmatprep.subr.bf16.mxu0 0
        %2500 = vmatpush1.bf16.msra.mxu0 %v2468
        %2501 = vmatprep.subr.bf16.mxu0 0
        %2502 = vmatpush1.bf16.msra.mxu0 %v2470
        %2503 = vmatprep.subr.bf16.mxu0 0
        %2504 = vmatpush1.bf16.msra.mxu0 0
        %2505 = vmatprep.subr.bf16.mxu0 0
        %2506 = vmatpush1.bf16.msra.mxu0 0
        %2507 = vmatprep.subr.bf16.mxu0 0
        %2508 = vmatpush1.bf16.msra.mxu0 0
        %2509 = vmatprep.subr.bf16.mxu0 0
        %2510 = vmatpush1.bf16.msra.mxu0 0
        %2511 = vmatprep.subr.bf16.mxu0 0
        %2512 = vmatpush1.bf16.msra.mxu0 0
        %2513 = vmatprep.subr.bf16.mxu0 0
        %2514 = vmatpush1.bf16.msra.mxu0 0
        %2515 = vmatprep.subr.bf16.mxu0 0
        %2516 = vmatpush1.bf16.msra.mxu0 0
        %2517 = vmatprep.subr.bf16.mxu0 0
        %2518 = vmatpush1.bf16.msra.mxu0 0
        %2519 = vmatprep.subr.bf16.mxu0 0
        %2520 = vmatpush1.bf16.msra.mxu0 0
        %2521 = vmatprep.subr.bf16.mxu0 0
        %2522 = vmatpush1.bf16.msra.mxu0 0
        %2523 = vmatprep.mubr.bf16.mxu0 0
        %2524 = vmatmul.mubr.bf16.gmra.mrb[0].mxu0 %v2480
        %v2525 = vpop.f32.mrb[0].mxu0
        %v2526 = vadd.f32 %v2390, %v2525
        %v2527 = vpop.f32.mrb[0].mxu0
        %v2528 = vpop.f32.mrb[0].mxu0
        %v2529 = vadd.f32 %v2395, %v2528
        %v2530 = vpop.f32.mrb[0].mxu0
        %2531 = vmatprep.mubr.bf16.mxu0 0
        %2532 = vmatmul.mubr.bf16.gmra.mrb[0].mxu0 %v2483
        %v2533 = vpop.f32.mrb[0].mxu0
        %v2534 = vadd.f32 %v2400, %v2533
        %v2535 = vpop.f32.mrb[0].mxu0
        %v2536 = vpop.f32.mrb[0].mxu0
        %v2537 = vadd.f32 %v2405, %v2536
        %v2538 = vpop.f32.mrb[0].mxu0
        %2539 = vmatprep.mubr.bf16.mxu0 0
        %2540 = vmatmul.mubr.bf16.gmra.mrb[0].mxu0 %v2486
        %v2541 = vpop.f32.mrb[0].mxu0
        %v2542 = vadd.f32 %v2410, %v2541
        %v2543 = vpop.f32.mrb[0].mxu0
        %v2544 = vpop.f32.mrb[0].mxu0
        %v2545 = vadd.f32 %v2415, %v2544
        %v2546 = vpop.f32.mrb[0].mxu0
        %2547 = vmatprep.mubr.bf16.mxu0 0
        %2548 = vmatmul.mubr.bf16.gmra.mrb[0].mxu0 %v2489
        %v2549 = vpop.f32.mrb[0].mxu0
        %v2550 = vadd.f32 %v2420, %v2549
        %v2551 = vpop.f32.mrb[0].mxu0
        %v2552 = vpop.f32.mrb[0].mxu0
        %v2553 = vadd.f32 %v2425, %v2552
        %v2554 = vpop.f32.mrb[0].mxu0
        %2555 = vdwg.mxu0
        %v2556 = vxor.u32 %v2526, 2147483648
        %v2557 = vxor.u32 %v2529, 2147483648
        %v2558 = vxor.u32 %v2534, 2147483648
        %v2559 = vxor.u32 %v2537, 2147483648
        %v2560 = vmul.f32 %v2556, 1.442695
        %v2561 = vpow.pop %v2560
        %v2562 = vmul.f32 %v2557, 1.442695
        %v2563 = vpow.pop %v2562
        %v2564 = vmul.f32 %v2558, 1.442695
        %v2565 = vpow.pop %v2564
        %v2566 = vmul.f32 %v2559, 1.442695
        %v2567 = vpow.pop %v2566
        %v2568 = vadd.f32 %v2561, 1.0
        %v2569 = vadd.f32 %v2563, 1.0
        %v2570 = vadd.f32 %v2565, 1.0
        %v2571 = vadd.f32 %v2567, 1.0
        %v2572 = vrcp.pop %v2568
        %v2573 = vmul.f32 1.0, %v2572
        %v2574 = vrcp.pop %v2569
        %v2575 = vmul.f32 1.0, %v2574
        %v2576 = vrcp.pop %v2570
        %v2577 = vmul.f32 1.0, %v2576
        %v2578 = vrcp.pop %v2571
        %v2579 = vmul.f32 1.0, %v2578
        %v2580 = vsub.f32 %v2542, %v2344
        %v2581 = vsub.f32 %v2545, %v2346
        %v2582 = vsub.f32 %v2550, %v2348
        %v2583 = vsub.f32 %v2553, %v2350
        %v2584 = vmul.f32 %v2573, %v2580
        %v2585 = vmul.f32 %v2575, %v2581
        %v2586 = vmul.f32 %v2577, %v2582
        %v2587 = vmul.f32 %v2579, %v2583
        %v2588 = vadd.f32 %v2344, %v2584
        %v2589 = vadd.f32 %v2346, %v2585
        %v2590 = vadd.f32 %v2348, %v2586
        %v2591 = vadd.f32 %v2350, %v2587
        %2592 = vst.msk [vmem:[#allocation2 + $0x8] sm:$0xff] %vm1700, %v2588
        %2593 = vst.msk [vmem:[#allocation2 + $0x18] sm:$0xff] %vm1700, %v2589
        %2594 = vst.msk [vmem:[#allocation2 + $0x28] sm:$0xff] %vm1700, %v2590
        %2595 = vst.msk [vmem:[#allocation2 + $0x38] sm:$0xff] %vm1700, %v2591
        %v2596 = vld [vmem:[%s27] sm:$0xf]
        %v2597 = vld [vmem:[%s27 + $0x4] sm:$0xf]
        %v2598 = vld [vmem:[%s27 + $0x8] sm:$0xf]
        %v2599 = vld [vmem:[%s27 + $0xc] sm:$0xf]
        %v2600 = vld [vmem:[%s29] sm:$0xff]
        %v2601 = vld [vmem:[%s29 + $0x8] sm:$0xff]
        %v2602 = vld [vmem:[%s29 + $0x10] sm:$0xff]
        %v2603 = vld [vmem:[%s29 + $0x18] sm:$0xff]
        %v2604 = vld [vmem:[#allocation2 + $0x8] sm:$0xff]
        %v2605 = vld [vmem:[#allocation2 + $0x18] sm:$0xff]
        %v2606 = vld [vmem:[#allocation2 + $0x28] sm:$0xff]
        %v2607 = vld [vmem:[#allocation2 + $0x38] sm:$0xff]
        %v2608 = vpack.c.bf16 %v2605, %v2604
        %v2609 = vpack.c.bf16 %v2607, %v2606
        %v2614 = vunpack.c.l.b16 %v2596
        %v2615 = vunpack.c.l.b16 %v2597
        %v2616 = vunpack.c.l.b16 %v2598
        %v2617 = vunpack.c.l.b16 %v2599
        %v2618 = vpack.c.b16 %v2615, %v2614
        %v2619 = vpack.c.b16 %v2617, %v2616
        %v2621 = vsel %vm1700, %v2618, 0
        %v2624 = vsel %vm1700, %v2619, 0
        %2626 = vmatprep.subr.bf16.mxu0 0
        %2627 = vmatpush1.bf16.msra.mxu0 %v2608
        %2628 = vmatprep.subr.bf16.mxu0 0
        %2629 = vmatpush1.bf16.msra.mxu0 %v2609
        %2630 = vmatprep.subr.bf16.mxu0 0
        %2631 = vmatpush1.bf16.msra.mxu0 0
        %2632 = vmatprep.subr.bf16.mxu0 0
        %2633 = vmatpush1.bf16.msra.mxu0 0
        %2634 = vmatprep.subr.bf16.mxu0 0
        %2635 = vmatpush1.bf16.msra.mxu0 0
        %2636 = vmatprep.subr.bf16.mxu0 0
        %2637 = vmatpush1.bf16.msra.mxu0 0
        %2638 = vmatprep.subr.bf16.mxu0 0
        %2639 = vmatpush1.bf16.msra.mxu0 0
        %2640 = vmatprep.subr.bf16.mxu0 0
        %2641 = vmatpush1.bf16.msra.mxu0 0
        %2642 = vmatprep.subr.bf16.mxu0 0
        %2643 = vmatpush1.bf16.msra.mxu0 0
        %2644 = vmatprep.subr.bf16.mxu0 0
        %2645 = vmatpush1.bf16.msra.mxu0 0
        %2646 = vmatprep.subr.bf16.mxu0 0
        %2647 = vmatpush1.bf16.msra.mxu0 0
        %2648 = vmatprep.subr.bf16.mxu0 0
        %2649 = vmatpush1.bf16.msra.mxu0 0
        %2650 = vmatprep.subr.bf16.mxu0 0
        %2651 = vmatpush1.bf16.msra.mxu0 0
        %2652 = vmatprep.subr.bf16.mxu0 0
        %2653 = vmatpush1.bf16.msra.mxu0 0
        %2654 = vmatprep.subr.bf16.mxu0 0
        %2655 = vmatpush1.bf16.msra.mxu0 0
        %2656 = vmatprep.subr.bf16.mxu0 0
        %2657 = vmatpush1.bf16.msra.mxu0 0
        %2658 = vmatprep.mubr.bf16.mxu0 0
        %2659 = vmatmul.mubr.bf16.gmra.mrb[0].mxu0 %v2621
        %v2660 = vpop.f32.mrb[0].mxu0
        %v2661 = vadd.f32 0.0, %v2660
        %v2662 = vpop.f32.mrb[0].mxu0
        %v2663 = vpop.f32.mrb[0].mxu0
        %v2664 = vadd.f32 0.0, %v2663
        %v2665 = vpop.f32.mrb[0].mxu0
        %2666 = vmatprep.mubr.bf16.mxu0 0
        %2667 = vmatmul.mubr.bf16.gmra.mrb[0].mxu0 %v2624
        %v2668 = vpop.f32.mrb[0].mxu0
        %v2669 = vadd.f32 0.0, %v2668
        %v2670 = vpop.f32.mrb[0].mxu0
        %v2671 = vpop.f32.mrb[0].mxu0
        %v2672 = vadd.f32 0.0, %v2671
        %v2673 = vpop.f32.mrb[0].mxu0
        %2674 = vdwg.mxu0
        %2675 = vrot.lane.b32.xlu0 %v2618, 96
        %v2676 = vpop.permute.xlu0 %2675
        %2677 = vrot.lane.b32.xlu0 %v2619, 96
        %v2678 = vpop.permute.xlu0 %2677
        %v2680 = vsel %vm1700, %v2676, 0
        %v2683 = vsel %vm1700, %v2678, 0
        %2685 = vmatprep.subr.bf16.mxu0 0
        %2686 = vmatpush1.bf16.msra.mxu0 %v2608
        %2687 = vmatprep.subr.bf16.mxu0 0
        %2688 = vmatpush1.bf16.msra.mxu0 %v2609
        %2689 = vmatprep.subr.bf16.mxu0 0
        %2690 = vmatpush1.bf16.msra.mxu0 0
        %2691 = vmatprep.subr.bf16.mxu0 0
        %2692 = vmatpush1.bf16.msra.mxu0 0
        %2693 = vmatprep.subr.bf16.mxu0 0
        %2694 = vmatpush1.bf16.msra.mxu0 0
        %2695 = vmatprep.subr.bf16.mxu0 0
        %2696 = vmatpush1.bf16.msra.mxu0 0
        %2697 = vmatprep.subr.bf16.mxu0 0
        %2698 = vmatpush1.bf16.msra.mxu0 0
        %2699 = vmatprep.subr.bf16.mxu0 0
        %2700 = vmatpush1.bf16.msra.mxu0 0
        %2701 = vmatprep.subr.bf16.mxu0 0
        %2702 = vmatpush1.bf16.msra.mxu0 0
        %2703 = vmatprep.subr.bf16.mxu0 0
        %2704 = vmatpush1.bf16.msra.mxu0 0
        %2705 = vmatprep.subr.bf16.mxu0 0
        %2706 = vmatpush1.bf16.msra.mxu0 0
        %2707 = vmatprep.subr.bf16.mxu0 0
        %2708 = vmatpush1.bf16.msra.mxu0 0
        %2709 = vmatprep.subr.bf16.mxu0 0
        %2710 = vmatpush1.bf16.msra.mxu0 0
        %2711 = vmatprep.subr.bf16.mxu0 0
        %2712 = vmatpush1.bf16.msra.mxu0 0
        %2713 = vmatprep.subr.bf16.mxu0 0
        %2714 = vmatpush1.bf16.msra.mxu0 0
        %2715 = vmatprep.subr.bf16.mxu0 0
        %2716 = vmatpush1.bf16.msra.mxu0 0
        %2717 = vmatprep.mubr.bf16.mxu0 0
        %2718 = vmatmul.mubr.bf16.gmra.mrb[0].mxu0 %v2680
        %v2719 = vpop.f32.mrb[0].mxu0
        %v2720 = vadd.f32 0.0, %v2719
        %v2721 = vpop.f32.mrb[0].mxu0
        %v2722 = vpop.f32.mrb[0].mxu0
        %v2723 = vadd.f32 0.0, %v2722
        %v2724 = vpop.f32.mrb[0].mxu0
        %2725 = vmatprep.mubr.bf16.mxu0 0
        %2726 = vmatmul.mubr.bf16.gmra.mrb[0].mxu0 %v2683
        %v2727 = vpop.f32.mrb[0].mxu0
        %v2728 = vadd.f32 0.0, %v2727
        %v2729 = vpop.f32.mrb[0].mxu0
        %v2730 = vpop.f32.mrb[0].mxu0
        %v2731 = vadd.f32 0.0, %v2730
        %v2732 = vpop.f32.mrb[0].mxu0
        %2733 = vdwg.mxu0
        %v2734 = vadd.s32 %v1816, 16
        %v2735 = vadd.s32 %v1816, 24
        %v2736 = vmul.u32 %v2734, 2
        %v2737 = vmul.u32 %v2735, 2
        %vm2738 = vcmp.eq.s32.totalorder %v1819, %v2736
        %vm2739 = vcmp.eq.s32.totalorder %v1819, %v2737
        %v2740 = vsel %vm2738, 1, 0
        %v2741 = vsel %vm2739, 1, 0
        %v2742 = vcvt.s32.f32 %v2740
        %v2743 = vcvt.s32.f32 %v2741
        %v2744 = vadd.s32 %v2736, 1
        %v2745 = vadd.s32 %v2737, 1
        %vm2746 = vcmp.eq.s32.totalorder %v1819, %v2744
        %vm2747 = vcmp.eq.s32.totalorder %v1819, %v2745
        %v2748 = vsel %vm2746, 1, 0
        %v2749 = vsel %vm2747, 1, 0
        %v2750 = vcvt.s32.f32 %v2748
        %v2751 = vcvt.s32.f32 %v2749
        %v2753 = vsel %vm1700, %v2720, 0
        %v2756 = vsel %vm1700, %v2723, 0
        %v2759 = vsel %vm1700, %v2728, 0
        %v2762 = vsel %vm1700, %v2731, 0
        %2764 = vmatprep.subr.mxu0 0.0
        %2765 = vmatpush1.msra.mxu0 %v1834
        %2766 = vmatprep.subr.mxu0 0.0
        %2767 = vmatpush1.msra.mxu0 %v1835
        %2768 = vmatprep.subr.mxu0 0.0
        %2769 = vmatpush1.msra.mxu0 %v2750
        %2770 = vmatprep.subr.mxu0 0.0
        %2771 = vmatpush1.msra.mxu0 %v2751
        %2772 = vmatprep.subr.mxu0 0.0
        %2773 = vmatpush1.msra.mxu0 0.0
        %2774 = vmatprep.subr.mxu0 0.0
        %2775 = vmatpush1.msra.mxu0 0.0
        %2776 = vmatprep.subr.mxu0 0.0
        %2777 = vmatpush1.msra.mxu0 0.0
        %2778 = vmatprep.subr.mxu0 0.0
        %2779 = vmatpush1.msra.mxu0 0.0
        %2780 = vmatprep.subr.mxu0 0.0
        %2781 = vmatpush1.msra.mxu0 0.0
        %2782 = vmatprep.subr.mxu0 0.0
        %2783 = vmatpush1.msra.mxu0 0.0
        %2784 = vmatprep.subr.mxu0 0.0
        %2785 = vmatpush1.msra.mxu0 0.0
        %2786 = vmatprep.subr.mxu0 0.0
        %2787 = vmatpush1.msra.mxu0 0.0
        %2788 = vmatprep.subr.mxu0 0.0
        %2789 = vmatpush1.msra.mxu0 0.0
        %2790 = vmatprep.subr.mxu0 0.0
        %2791 = vmatpush1.msra.mxu0 0.0
        %2792 = vmatprep.subr.mxu0 0.0
        %2793 = vmatpush1.msra.mxu0 0.0
        %2794 = vmatprep.subr.mxu0 0.0
        %2795 = vmatpush1.msra.mxu0 0.0
        %2796 = vmatprep.subr.mxu0 0.0
        %2797 = vmatpush1.msra.mxu0 0.0
        %2798 = vmatprep.subr.mxu0 0.0
        %2799 = vmatpush1.msra.mxu0 0.0
        %2800 = vmatprep.subr.mxu0 0.0
        %2801 = vmatpush1.msra.mxu0 0.0
        %2802 = vmatprep.subr.mxu0 0.0
        %2803 = vmatpush1.msra.mxu0 0.0
        %2804 = vmatprep.subr.mxu0 0.0
        %2805 = vmatpush1.msra.mxu0 0.0
        %2806 = vmatprep.subr.mxu0 0.0
        %2807 = vmatpush1.msra.mxu0 0.0
        %2808 = vmatprep.subr.mxu0 0.0
        %2809 = vmatpush1.msra.mxu0 0.0
        %2810 = vmatprep.subr.mxu0 0.0
        %2811 = vmatpush1.msra.mxu0 0.0
        %2812 = vmatprep.subr.mxu0 0.0
        %2813 = vmatpush1.msra.mxu0 0.0
        %2814 = vmatprep.subr.mxu0 0.0
        %2815 = vmatpush1.msra.mxu0 0.0
        %2816 = vmatprep.subr.mxu0 0.0
        %2817 = vmatpush1.msra.mxu0 0.0
        %2818 = vmatprep.subr.mxu0 0.0
        %2819 = vmatpush1.msra.mxu0 0.0
        %2820 = vmatprep.subr.mxu0 0.0
        %2821 = vmatpush1.msra.mxu0 0.0
        %2822 = vmatprep.subr.mxu0 0.0
        %2823 = vmatpush1.msra.mxu0 0.0
        %2824 = vmatprep.subr.mxu0 0.0
        %2825 = vmatpush1.msra.mxu0 0.0
        %2826 = vmatprep.subr.mxu0 0.0
        %2827 = vmatpush1.msra.mxu0 0.0
        %2828 = vmatprep.mubr.f32.mxu0 0.0
        %2829 = vmatmul.mubr.f32.gmra.mrb[0].mxu0 %v2753
        %v2830 = vpop.f32.mrb[0].mxu0
        %v2831 = vadd.f32 0.0, %v2830
        %v2832 = vpop.f32.mrb[0].mxu0
        %2833 = vmatprep.mubr.f32.mxu0 0.0
        %2834 = vmatmul.mubr.f32.gmra.mrb[0].mxu0 %v2756
        %v2835 = vpop.f32.mrb[0].mxu0
        %v2836 = vadd.f32 0.0, %v2835
        %v2837 = vpop.f32.mrb[0].mxu0
        %2838 = vmatprep.mubr.f32.mxu0 0.0
        %2839 = vmatmul.mubr.f32.gmra.mrb[0].mxu0 %v2759
        %v2840 = vpop.f32.mrb[0].mxu0
        %v2841 = vadd.f32 0.0, %v2840
        %v2842 = vpop.f32.mrb[0].mxu0
        %2843 = vmatprep.mubr.f32.mxu0 0.0
        %2844 = vmatmul.mubr.f32.gmra.mrb[0].mxu0 %v2762
        %v2845 = vpop.f32.mrb[0].mxu0
        %v2846 = vadd.f32 0.0, %v2845
        %v2847 = vpop.f32.mrb[0].mxu0
        %2848 = vdwg.mxu0
        %v2850 = vsel %vm1700, %v2661, 0
        %v2853 = vsel %vm1700, %v2664, 0
        %v2856 = vsel %vm1700, %v2669, 0
        %v2859 = vsel %vm1700, %v2672, 0
        %2861 = vmatprep.subr.mxu0 0.0
        %2862 = vmatpush1.msra.mxu0 %v1826
        %2863 = vmatprep.subr.mxu0 0.0
        %2864 = vmatpush1.msra.mxu0 %v1827
        %2865 = vmatprep.subr.mxu0 0.0
        %2866 = vmatpush1.msra.mxu0 %v2742
        %2867 = vmatprep.subr.mxu0 0.0
        %2868 = vmatpush1.msra.mxu0 %v2743
        %2869 = vmatprep.subr.mxu0 0.0
        %2870 = vmatpush1.msra.mxu0 0.0
        %2871 = vmatprep.subr.mxu0 0.0
        %2872 = vmatpush1.msra.mxu0 0.0
        %2873 = vmatprep.subr.mxu0 0.0
        %2874 = vmatpush1.msra.mxu0 0.0
        %2875 = vmatprep.subr.mxu0 0.0
        %2876 = vmatpush1.msra.mxu0 0.0
        %2877 = vmatprep.subr.mxu0 0.0
        %2878 = vmatpush1.msra.mxu0 0.0
        %2879 = vmatprep.subr.mxu0 0.0
        %2880 = vmatpush1.msra.mxu0 0.0
        %2881 = vmatprep.subr.mxu0 0.0
        %2882 = vmatpush1.msra.mxu0 0.0
        %2883 = vmatprep.subr.mxu0 0.0
        %2884 = vmatpush1.msra.mxu0 0.0
        %2885 = vmatprep.subr.mxu0 0.0
        %2886 = vmatpush1.msra.mxu0 0.0
        %2887 = vmatprep.subr.mxu0 0.0
        %2888 = vmatpush1.msra.mxu0 0.0
        %2889 = vmatprep.subr.mxu0 0.0
        %2890 = vmatpush1.msra.mxu0 0.0
        %2891 = vmatprep.subr.mxu0 0.0
        %2892 = vmatpush1.msra.mxu0 0.0
        %2893 = vmatprep.subr.mxu0 0.0
        %2894 = vmatpush1.msra.mxu0 0.0
        %2895 = vmatprep.subr.mxu0 0.0
        %2896 = vmatpush1.msra.mxu0 0.0
        %2897 = vmatprep.subr.mxu0 0.0
        %2898 = vmatpush1.msra.mxu0 0.0
        %2899 = vmatprep.subr.mxu0 0.0
        %2900 = vmatpush1.msra.mxu0 0.0
        %2901 = vmatprep.subr.mxu0 0.0
        %2902 = vmatpush1.msra.mxu0 0.0
        %2903 = vmatprep.subr.mxu0 0.0
        %2904 = vmatpush1.msra.mxu0 0.0
        %2905 = vmatprep.subr.mxu0 0.0
        %2906 = vmatpush1.msra.mxu0 0.0
        %2907 = vmatprep.subr.mxu0 0.0
        %2908 = vmatpush1.msra.mxu0 0.0
        %2909 = vmatprep.subr.mxu0 0.0
        %2910 = vmatpush1.msra.mxu0 0.0
        %2911 = vmatprep.subr.mxu0 0.0
        %2912 = vmatpush1.msra.mxu0 0.0
        %2913 = vmatprep.subr.mxu0 0.0
        %2914 = vmatpush1.msra.mxu0 0.0
        %2915 = vmatprep.subr.mxu0 0.0
        %2916 = vmatpush1.msra.mxu0 0.0
        %2917 = vmatprep.subr.mxu0 0.0
        %2918 = vmatpush1.msra.mxu0 0.0
        %2919 = vmatprep.subr.mxu0 0.0
        %2920 = vmatpush1.msra.mxu0 0.0
        %2921 = vmatprep.subr.mxu0 0.0
        %2922 = vmatpush1.msra.mxu0 0.0
        %2923 = vmatprep.subr.mxu0 0.0
        %2924 = vmatpush1.msra.mxu0 0.0
        %2925 = vmatprep.mubr.f32.mxu0 0.0
        %2926 = vmatmul.mubr.f32.gmra.mrb[0].mxu0 %v2850
        %v2927 = vpop.f32.mrb[0].mxu0
        %v2928 = vadd.f32 %v2831, %v2927
        %v2929 = vpop.f32.mrb[0].mxu0
        %2930 = vmatprep.mubr.f32.mxu0 0.0
        %2931 = vmatmul.mubr.f32.gmra.mrb[0].mxu0 %v2853
        %v2932 = vpop.f32.mrb[0].mxu0
        %v2933 = vadd.f32 %v2836, %v2932
        %v2934 = vpop.f32.mrb[0].mxu0
        %2935 = vmatprep.mubr.f32.mxu0 0.0
        %2936 = vmatmul.mubr.f32.gmra.mrb[0].mxu0 %v2856
        %v2937 = vpop.f32.mrb[0].mxu0
        %v2938 = vadd.f32 %v2841, %v2937
        %v2939 = vpop.f32.mrb[0].mxu0
        %2940 = vmatprep.mubr.f32.mxu0 0.0
        %2941 = vmatmul.mubr.f32.gmra.mrb[0].mxu0 %v2859
        %v2942 = vpop.f32.mrb[0].mxu0
        %v2943 = vadd.f32 %v2846, %v2942
        %v2944 = vpop.f32.mrb[0].mxu0
        %2945 = vdwg.mxu0
        %2947 = vset.pattern.permute.xlu0 0
        %2948 = vperm.xlu0 %2947, %v2600
        %v2949 = vpop.permute.xlu0 %2948
        %2952 = vset.pattern.permute.xlu0 0
        %2953 = vperm.xlu0 %2952, %v2601
        %v2954 = vpop.permute.xlu0 %2953
        %2957 = vset.pattern.permute.xlu0 0
        %2958 = vperm.xlu0 %2957, %v2602
        %v2959 = vpop.permute.xlu0 %2958
        %2962 = vset.pattern.permute.xlu0 0
        %2963 = vperm.xlu0 %2962, %v2603
        %v2964 = vpop.permute.xlu0 %2963
        %v2966 = vadd.f32 %v2928, %v2949
        %v2967 = vadd.f32 %v2933, %v2954
        %v2968 = vadd.f32 %v2938, %v2959
        %v2969 = vadd.f32 %v2943, %v2964
        %vm2970 = vcmask 523264
        %2971 = vst.msk [vmem:[#allocation3 + $0x8] sm:$0xff] %vm2970, %v2966
        %2972 = vst.msk [vmem:[#allocation3 + $0x18] sm:$0xff] %vm2970, %v2967
        %2973 = vst.msk [vmem:[#allocation3 + $0x28] sm:$0xff] %vm2970, %v2968
        %2974 = vst.msk [vmem:[#allocation3 + $0x38] sm:$0xff] %vm2970, %v2969
        %v2975 = vld [vmem:[%s31] sm:$0xf]
        %v2976 = vld [vmem:[%s31 + $0x4] sm:$0xf]
        %v2977 = vld [vmem:[%s31 + $0x8] sm:$0xf]
        %v2978 = vld [vmem:[%s31 + $0xc] sm:$0xf]
        %v2979 = vld [vmem:[%s31 + $0x10] sm:$0xf]
        %v2980 = vld [vmem:[%s31 + $0x14] sm:$0xf]
        %v2981 = vld [vmem:[%s31 + $0x18] sm:$0xf]
        %v2982 = vld [vmem:[%s31 + $0x1c] sm:$0xf]
        %v2983 = vld [vmem:[%s33] sm:$0xff]
        %v2984 = vld [vmem:[%s33 + $0x8] sm:$0xff]
        %v2985 = vld [vmem:[%s33 + $0x10] sm:$0xff]
        %v2986 = vld [vmem:[%s33 + $0x18] sm:$0xff]
        %v2987 = vld [vmem:[%s33 + $0x20] sm:$0xff]
        %v2988 = vld [vmem:[%s33 + $0x28] sm:$0xff]
        %v2989 = vld [vmem:[%s33 + $0x30] sm:$0xff]
        %v2990 = vld [vmem:[%s33 + $0x38] sm:$0xff]
        %v2991 = vld [vmem:[#allocation3] sm:$0xff]
        %v2992 = vld [vmem:[#allocation3 + $0x8] sm:$0xff]
        %v2993 = vld [vmem:[#allocation3 + $0x10] sm:$0xff]
        %v2994 = vld [vmem:[#allocation3 + $0x18] sm:$0xff]
        %v2995 = vld [vmem:[#allocation3 + $0x20] sm:$0xff]
        %v2996 = vld [vmem:[#allocation3 + $0x28] sm:$0xff]
        %v2997 = vld [vmem:[#allocation3 + $0x30] sm:$0xff]
        %v2998 = vld [vmem:[#allocation3 + $0x38] sm:$0xff]
        %3003 = vrot.lane.b32.xlu0 %v2992, 127
        %v3004 = vpop.permute.xlu0 %3003
        %3005 = vrot.lane.b32.xlu0 %v2994, 127
        %v3006 = vpop.permute.xlu0 %3005
        %3007 = vrot.lane.b32.xlu0 %v2996, 127
        %v3008 = vpop.permute.xlu0 %3007
        %3009 = vrot.lane.b32.xlu0 %v2998, 127
        %v3010 = vpop.permute.xlu0 %3009
        %3015 = vrot.lane.b32.xlu0 %v2992, 126
        %v3016 = vpop.permute.xlu0 %3015
        %3017 = vrot.lane.b32.xlu0 %v2994, 126
        %v3018 = vpop.permute.xlu0 %3017
        %3019 = vrot.lane.b32.xlu0 %v2996, 126
        %v3020 = vpop.permute.xlu0 %3019
        %3021 = vrot.lane.b32.xlu0 %v2998, 126
        %v3022 = vpop.permute.xlu0 %3021
        %v3027 = vpack.c.bf16 %v2993, %v2991
        %v3028 = vpack.c.bf16 %v2994, %v2992
        %v3029 = vpack.c.bf16 %v2997, %v2995
        %v3030 = vpack.c.bf16 %v2998, %v2996
        %v3031 = vpack.c.bf16 %v3006, %v3004
        %v3032 = vpack.c.bf16 %v3010, %v3008
        %v3033 = vpack.c.bf16 %v3018, %v3016
        %v3034 = vpack.c.bf16 %v3022, %v3020
        %3036 = vset.pattern.permute.xlu0 0
        %3037 = vperm.xlu0 %3036, %v2983
        %v3038 = vpop.permute.xlu0 %3037
        %3041 = vset.pattern.permute.xlu0 0
        %3042 = vperm.xlu0 %3041, %v2984
        %v3043 = vpop.permute.xlu0 %3042
        %3046 = vset.pattern.permute.xlu0 0
        %3047 = vperm.xlu0 %3046, %v2985
        %v3048 = vpop.permute.xlu0 %3047
        %3051 = vset.pattern.permute.xlu0 0
        %3052 = vperm.xlu0 %3051, %v2986
        %v3053 = vpop.permute.xlu0 %3052
        %3056 = vset.pattern.permute.xlu0 0
        %3057 = vperm.xlu0 %3056, %v2987
        %v3058 = vpop.permute.xlu0 %3057
        %3061 = vset.pattern.permute.xlu0 0
        %3062 = vperm.xlu0 %3061, %v2988
        %v3063 = vpop.permute.xlu0 %3062
        %3066 = vset.pattern.permute.xlu0 0
        %3067 = vperm.xlu0 %3066, %v2989
        %v3068 = vpop.permute.xlu0 %3067
        %3071 = vset.pattern.permute.xlu0 0
        %3072 = vperm.xlu0 %3071, %v2990
        %v3073 = vpop.permute.xlu0 %3072
        %v3083 = vunpack.c.l.b16 %v2975
        %v3084 = vunpack.c.l.b16 %v2976
        %v3085 = vunpack.c.l.b16 %v2977
        %v3086 = vunpack.c.l.b16 %v2978
        %v3087 = vunpack.c.l.b16 %v2979
        %v3088 = vunpack.c.l.b16 %v2980
        %v3089 = vunpack.c.l.b16 %v2981
        %v3090 = vunpack.c.l.b16 %v2982
        %v3091 = vpack.c.b16 %v3084, %v3083
        %v3092 = vpack.c.b16 %v3086, %v3085
        %v3093 = vpack.c.b16 %v3088, %v3087
        %v3094 = vpack.c.b16 %v3090, %v3089
        %3103 = vrot.lane.b32.xlu0 %v3027, 1
        %v3104 = vpop.permute.xlu0 %3103
        %3105 = vrot.lane.b32.xlu0 %v3028, 1
        %v3106 = vpop.permute.xlu0 %3105
        %3107 = vrot.lane.b32.xlu0 %v3029, 1
        %v3108 = vpop.permute.xlu0 %3107
        %3109 = vrot.lane.b32.xlu0 %v3030, 1
        %v3110 = vpop.permute.xlu0 %3109
        %3111 = vrot.lane.b32.xlu0 %v3031, 1
        %v3112 = vpop.permute.xlu0 %3111
        %3113 = vrot.lane.b32.xlu0 %v3032, 1
        %v3114 = vpop.permute.xlu0 %3113
        %3115 = vrot.lane.b32.xlu0 %v3033, 1
        %v3116 = vpop.permute.xlu0 %3115
        %3117 = vrot.lane.b32.xlu0 %v3034, 1
        %v3118 = vpop.permute.xlu0 %3117
        %v3119 = vsel %vm1279, %v3104, %v3106
        %v3120 = vsel %vm1279, %v3108, %v3110
        %v3128 = vsel %vm1288, %v3091, 0
        %v3131 = vsel %vm1288, %v3092, 0
        %v3134 = vsel %vm1288, %v3093, 0
        %v3137 = vsel %vm1288, %v3094, 0
        %3139 = vmatprep.subr.bf16.mxu0 0
        %3140 = vmatpush1.bf16.msra.mxu0 %v3119
        %3141 = vmatprep.subr.bf16.mxu0 0
        %3142 = vmatpush1.bf16.msra.mxu0 %v3120
        %3143 = vmatprep.subr.bf16.mxu0 0
        %3144 = vmatpush1.bf16.msra.mxu0 %v3112
        %3145 = vmatprep.subr.bf16.mxu0 0
        %3146 = vmatpush1.bf16.msra.mxu0 %v3114
        %3147 = vmatprep.subr.bf16.mxu0 0
        %3148 = vmatpush1.bf16.msra.mxu0 %v3116
        %3149 = vmatprep.subr.bf16.mxu0 0
        %3150 = vmatpush1.bf16.msra.mxu0 %v3118
        %3151 = vmatprep.subr.bf16.mxu0 0
        %3152 = vmatpush1.bf16.msra.mxu0 0
        %3153 = vmatprep.subr.bf16.mxu0 0
        %3154 = vmatpush1.bf16.msra.mxu0 0
        %3155 = vmatprep.subr.bf16.mxu0 0
        %3156 = vmatpush1.bf16.msra.mxu0 0
        %3157 = vmatprep.subr.bf16.mxu0 0
        %3158 = vmatpush1.bf16.msra.mxu0 0
        %3159 = vmatprep.subr.bf16.mxu0 0
        %3160 = vmatpush1.bf16.msra.mxu0 0
        %3161 = vmatprep.subr.bf16.mxu0 0
        %3162 = vmatpush1.bf16.msra.mxu0 0
        %3163 = vmatprep.subr.bf16.mxu0 0
        %3164 = vmatpush1.bf16.msra.mxu0 0
        %3165 = vmatprep.subr.bf16.mxu0 0
        %3166 = vmatpush1.bf16.msra.mxu0 0
        %3167 = vmatprep.subr.bf16.mxu0 0
        %3168 = vmatpush1.bf16.msra.mxu0 0
        %3169 = vmatprep.subr.bf16.mxu0 0
        %3170 = vmatpush1.bf16.msra.mxu0 0
        %3171 = vmatprep.mubr.bf16.mxu0 0
        %3172 = vmatmul.mubr.bf16.gmra.mrb[0].mxu0 %v3128
        %v3173 = vpop.f32.mrb[0].mxu0
        %v3174 = vadd.f32 %v3038, %v3173
        %v3175 = vpop.f32.mrb[0].mxu0
        %v3176 = vpop.f32.mrb[0].mxu0
        %v3177 = vadd.f32 %v3043, %v3176
        %v3178 = vpop.f32.mrb[0].mxu0
        %3179 = vmatprep.mubr.bf16.mxu0 0
        %3180 = vmatmul.mubr.bf16.gmra.mrb[0].mxu0 %v3131
        %v3181 = vpop.f32.mrb[0].mxu0
        %v3182 = vadd.f32 %v3048, %v3181
        %v3183 = vpop.f32.mrb[0].mxu0
        %v3184 = vpop.f32.mrb[0].mxu0
        %v3185 = vadd.f32 %v3053, %v3184
        %v3186 = vpop.f32.mrb[0].mxu0
        %3187 = vmatprep.mubr.bf16.mxu0 0
        %3188 = vmatmul.mubr.bf16.gmra.mrb[0].mxu0 %v3134
        %v3189 = vpop.f32.mrb[0].mxu0
        %v3190 = vadd.f32 %v3058, %v3189
        %v3191 = vpop.f32.mrb[0].mxu0
        %v3192 = vpop.f32.mrb[0].mxu0
        %v3193 = vadd.f32 %v3063, %v3192
        %v3194 = vpop.f32.mrb[0].mxu0
        %3195 = vmatprep.mubr.bf16.mxu0 0
        %3196 = vmatmul.mubr.bf16.gmra.mrb[0].mxu0 %v3137
        %v3197 = vpop.f32.mrb[0].mxu0
        %v3198 = vadd.f32 %v3068, %v3197
        %v3199 = vpop.f32.mrb[0].mxu0
        %v3200 = vpop.f32.mrb[0].mxu0
        %v3201 = vadd.f32 %v3073, %v3200
        %v3202 = vpop.f32.mrb[0].mxu0
        %3203 = vdwg.mxu0
        %v3204 = vxor.u32 %v3174, 2147483648
        %v3205 = vxor.u32 %v3177, 2147483648
        %v3206 = vxor.u32 %v3182, 2147483648
        %v3207 = vxor.u32 %v3185, 2147483648
        %v3208 = vmul.f32 %v3204, 1.442695
        %v3209 = vpow.pop %v3208
        %v3210 = vmul.f32 %v3205, 1.442695
        %v3211 = vpow.pop %v3210
        %v3212 = vmul.f32 %v3206, 1.442695
        %v3213 = vpow.pop %v3212
        %v3214 = vmul.f32 %v3207, 1.442695
        %v3215 = vpow.pop %v3214
        %v3216 = vadd.f32 %v3209, 1.0
        %v3217 = vadd.f32 %v3211, 1.0
        %v3218 = vadd.f32 %v3213, 1.0
        %v3219 = vadd.f32 %v3215, 1.0
        %v3220 = vrcp.pop %v3216
        %v3221 = vmul.f32 1.0, %v3220
        %v3222 = vrcp.pop %v3217
        %v3223 = vmul.f32 1.0, %v3222
        %v3224 = vrcp.pop %v3218
        %v3225 = vmul.f32 1.0, %v3224
        %v3226 = vrcp.pop %v3219
        %v3227 = vmul.f32 1.0, %v3226
        %v3228 = vsub.f32 %v3190, %v2992
        %v3229 = vsub.f32 %v3193, %v2994
        %v3230 = vsub.f32 %v3198, %v2996
        %v3231 = vsub.f32 %v3201, %v2998
        %v3232 = vmul.f32 %v3221, %v3228
        %v3233 = vmul.f32 %v3223, %v3229
        %v3234 = vmul.f32 %v3225, %v3230
        %v3235 = vmul.f32 %v3227, %v3231
        %v3236 = vadd.f32 %v2992, %v3232
        %v3237 = vadd.f32 %v2994, %v3233
        %v3238 = vadd.f32 %v2996, %v3234
        %v3239 = vadd.f32 %v2998, %v3235
        %3240 = vst.msk [vmem:[#allocation2 + $0x8] sm:$0xff] %vm2970, %v3236
        %3241 = vst.msk [vmem:[#allocation2 + $0x18] sm:$0xff] %vm2970, %v3237
        %3242 = vst.msk [vmem:[#allocation2 + $0x28] sm:$0xff] %vm2970, %v3238
        %3243 = vst.msk [vmem:[#allocation2 + $0x38] sm:$0xff] %vm2970, %v3239
        %v3244 = vld [vmem:[%s35] sm:$0xf]
        %v3245 = vld [vmem:[%s35 + $0x4] sm:$0xf]
        %v3246 = vld [vmem:[%s35 + $0x8] sm:$0xf]
        %v3247 = vld [vmem:[%s35 + $0xc] sm:$0xf]
        %v3248 = vld [vmem:[%s35 + $0x10] sm:$0xf]
        %v3249 = vld [vmem:[%s35 + $0x14] sm:$0xf]
        %v3250 = vld [vmem:[%s35 + $0x18] sm:$0xf]
        %v3251 = vld [vmem:[%s35 + $0x1c] sm:$0xf]
        %v3252 = vld [vmem:[%s37] sm:$0xff]
        %v3253 = vld [vmem:[%s37 + $0x8] sm:$0xff]
        %v3254 = vld [vmem:[%s37 + $0x10] sm:$0xff]
        %v3255 = vld [vmem:[%s37 + $0x18] sm:$0xff]
        %v3256 = vld [vmem:[%s37 + $0x20] sm:$0xff]
        %v3257 = vld [vmem:[%s37 + $0x28] sm:$0xff]
        %v3258 = vld [vmem:[%s37 + $0x30] sm:$0xff]
        %v3259 = vld [vmem:[%s37 + $0x38] sm:$0xff]
        %v3260 = vld [vmem:[#allocation2] sm:$0xff]
        %v3261 = vld [vmem:[#allocation2 + $0x8] sm:$0xff]
        %v3262 = vld [vmem:[#allocation2 + $0x10] sm:$0xff]
        %v3263 = vld [vmem:[#allocation2 + $0x18] sm:$0xff]
        %v3264 = vld [vmem:[#allocation2 + $0x20] sm:$0xff]
        %v3265 = vld [vmem:[#allocation2 + $0x28] sm:$0xff]
        %v3266 = vld [vmem:[#allocation2 + $0x30] sm:$0xff]
        %v3267 = vld [vmem:[#allocation2 + $0x38] sm:$0xff]
        %3272 = vrot.lane.b32.xlu0 %v3261, 125
        %v3273 = vpop.permute.xlu0 %3272
        %3274 = vrot.lane.b32.xlu0 %v3263, 125
        %v3275 = vpop.permute.xlu0 %3274
        %3276 = vrot.lane.b32.xlu0 %v3265, 125
        %v3277 = vpop.permute.xlu0 %3276
        %3278 = vrot.lane.b32.xlu0 %v3267, 125
        %v3279 = vpop.permute.xlu0 %3278
        %3284 = vrot.lane.b32.xlu0 %v3261, 122
        %v3285 = vpop.permute.xlu0 %3284
        %3286 = vrot.lane.b32.xlu0 %v3263, 122
        %v3287 = vpop.permute.xlu0 %3286
        %3288 = vrot.lane.b32.xlu0 %v3265, 122
        %v3289 = vpop.permute.xlu0 %3288
        %3290 = vrot.lane.b32.xlu0 %v3267, 122
        %v3291 = vpop.permute.xlu0 %3290
        %v3296 = vpack.c.bf16 %v3262, %v3260
        %v3297 = vpack.c.bf16 %v3263, %v3261
        %v3298 = vpack.c.bf16 %v3266, %v3264
        %v3299 = vpack.c.bf16 %v3267, %v3265
        %v3300 = vpack.c.bf16 %v3275, %v3273
        %v3301 = vpack.c.bf16 %v3279, %v3277
        %v3302 = vpack.c.bf16 %v3287, %v3285
        %v3303 = vpack.c.bf16 %v3291, %v3289
        %3305 = vset.pattern.permute.xlu0 0
        %3306 = vperm.xlu0 %3305, %v3252
        %v3307 = vpop.permute.xlu0 %3306
        %3310 = vset.pattern.permute.xlu0 0
        %3311 = vperm.xlu0 %3310, %v3253
        %v3312 = vpop.permute.xlu0 %3311
        %3315 = vset.pattern.permute.xlu0 0
        %3316 = vperm.xlu0 %3315, %v3254
        %v3317 = vpop.permute.xlu0 %3316
        %3320 = vset.pattern.permute.xlu0 0
        %3321 = vperm.xlu0 %3320, %v3255
        %v3322 = vpop.permute.xlu0 %3321
        %3325 = vset.pattern.permute.xlu0 0
        %3326 = vperm.xlu0 %3325, %v3256
        %v3327 = vpop.permute.xlu0 %3326
        %3330 = vset.pattern.permute.xlu0 0
        %3331 = vperm.xlu0 %3330, %v3257
        %v3332 = vpop.permute.xlu0 %3331
        %3335 = vset.pattern.permute.xlu0 0
        %3336 = vperm.xlu0 %3335, %v3258
        %v3337 = vpop.permute.xlu0 %3336
        %3340 = vset.pattern.permute.xlu0 0
        %3341 = vperm.xlu0 %3340, %v3259
        %v3342 = vpop.permute.xlu0 %3341
        %v3352 = vunpack.c.l.b16 %v3244
        %v3353 = vunpack.c.l.b16 %v3245
        %v3354 = vunpack.c.l.b16 %v3246
        %v3355 = vunpack.c.l.b16 %v3247
        %v3356 = vunpack.c.l.b16 %v3248
        %v3357 = vunpack.c.l.b16 %v3249
        %v3358 = vunpack.c.l.b16 %v3250
        %v3359 = vunpack.c.l.b16 %v3251
        %v3360 = vpack.c.b16 %v3353, %v3352
        %v3361 = vpack.c.b16 %v3355, %v3354
        %v3362 = vpack.c.b16 %v3357, %v3356
        %v3363 = vpack.c.b16 %v3359, %v3358
        %3372 = vrot.lane.b32.xlu0 %v3296, 3
        %v3373 = vpop.permute.xlu0 %3372
        %3374 = vrot.lane.b32.xlu0 %v3297, 3
        %v3375 = vpop.permute.xlu0 %3374
        %3376 = vrot.lane.b32.xlu0 %v3298, 3
        %v3377 = vpop.permute.xlu0 %3376
        %3378 = vrot.lane.b32.xlu0 %v3299, 3
        %v3379 = vpop.permute.xlu0 %3378
        %3380 = vrot.lane.b32.xlu0 %v3300, 3
        %v3381 = vpop.permute.xlu0 %3380
        %3382 = vrot.lane.b32.xlu0 %v3301, 3
        %v3383 = vpop.permute.xlu0 %3382
        %3384 = vrot.lane.b32.xlu0 %v3302, 3
        %v3385 = vpop.permute.xlu0 %3384
        %3386 = vrot.lane.b32.xlu0 %v3303, 3
        %v3387 = vpop.permute.xlu0 %3386
        %v3388 = vsel %vm1550, %v3373, %v3375
        %v3389 = vsel %vm1550, %v3377, %v3379
        %v3397 = vsel %vm1288, %v3360, 0
        %v3400 = vsel %vm1288, %v3361, 0
        %v3403 = vsel %vm1288, %v3362, 0
        %v3406 = vsel %vm1288, %v3363, 0
        %3408 = vmatprep.subr.bf16.mxu0 0
        %3409 = vmatpush1.bf16.msra.mxu0 %v3388
        %3410 = vmatprep.subr.bf16.mxu0 0
        %3411 = vmatpush1.bf16.msra.mxu0 %v3389
        %3412 = vmatprep.subr.bf16.mxu0 0
        %3413 = vmatpush1.bf16.msra.mxu0 %v3381
        %3414 = vmatprep.subr.bf16.mxu0 0
        %3415 = vmatpush1.bf16.msra.mxu0 %v3383
        %3416 = vmatprep.subr.bf16.mxu0 0
        %3417 = vmatpush1.bf16.msra.mxu0 %v3385
        %3418 = vmatprep.subr.bf16.mxu0 0
        %3419 = vmatpush1.bf16.msra.mxu0 %v3387
        %3420 = vmatprep.subr.bf16.mxu0 0
        %3421 = vmatpush1.bf16.msra.mxu0 0
        %3422 = vmatprep.subr.bf16.mxu0 0
        %3423 = vmatpush1.bf16.msra.mxu0 0
        %3424 = vmatprep.subr.bf16.mxu0 0
        %3425 = vmatpush1.bf16.msra.mxu0 0
        %3426 = vmatprep.subr.bf16.mxu0 0
        %3427 = vmatpush1.bf16.msra.mxu0 0
        %3428 = vmatprep.subr.bf16.mxu0 0
        %3429 = vmatpush1.bf16.msra.mxu0 0
        %3430 = vmatprep.subr.bf16.mxu0 0
        %3431 = vmatpush1.bf16.msra.mxu0 0
        %3432 = vmatprep.subr.bf16.mxu0 0
        %3433 = vmatpush1.bf16.msra.mxu0 0
        %3434 = vmatprep.subr.bf16.mxu0 0
        %3435 = vmatpush1.bf16.msra.mxu0 0
        %3436 = vmatprep.subr.bf16.mxu0 0
        %3437 = vmatpush1.bf16.msra.mxu0 0
        %3438 = vmatprep.subr.bf16.mxu0 0
        %3439 = vmatpush1.bf16.msra.mxu0 0
        %3440 = vmatprep.mubr.bf16.mxu0 0
        %3441 = vmatmul.mubr.bf16.gmra.mrb[0].mxu0 %v3397
        %v3442 = vpop.f32.mrb[0].mxu0
        %v3443 = vadd.f32 %v3307, %v3442
        %v3444 = vpop.f32.mrb[0].mxu0
        %v3445 = vpop.f32.mrb[0].mxu0
        %v3446 = vadd.f32 %v3312, %v3445
        %v3447 = vpop.f32.mrb[0].mxu0
        %3448 = vmatprep.mubr.bf16.mxu0 0
        %3449 = vmatmul.mubr.bf16.gmra.mrb[0].mxu0 %v3400
        %v3450 = vpop.f32.mrb[0].mxu0
        %v3451 = vadd.f32 %v3317, %v3450
        %v3452 = vpop.f32.mrb[0].mxu0
        %v3453 = vpop.f32.mrb[0].mxu0
        %v3454 = vadd.f32 %v3322, %v3453
        %v3455 = vpop.f32.mrb[0].mxu0
        %3456 = vmatprep.mubr.bf16.mxu0 0
        %3457 = vmatmul.mubr.bf16.gmra.mrb[0].mxu0 %v3403
        %v3458 = vpop.f32.mrb[0].mxu0
        %v3459 = vadd.f32 %v3327, %v3458
        %v3460 = vpop.f32.mrb[0].mxu0
        %v3461 = vpop.f32.mrb[0].mxu0
        %v3462 = vadd.f32 %v3332, %v3461
        %v3463 = vpop.f32.mrb[0].mxu0
        %3464 = vmatprep.mubr.bf16.mxu0 0
        %3465 = vmatmul.mubr.bf16.gmra.mrb[0].mxu0 %v3406
        %v3466 = vpop.f32.mrb[0].mxu0
        %v3467 = vadd.f32 %v3337, %v3466
        %v3468 = vpop.f32.mrb[0].mxu0
        %v3469 = vpop.f32.mrb[0].mxu0
        %v3470 = vadd.f32 %v3342, %v3469
        %v3471 = vpop.f32.mrb[0].mxu0
        %3472 = vdwg.mxu0
        %v3473 = vxor.u32 %v3443, 2147483648
        %v3474 = vxor.u32 %v3446, 2147483648
        %v3475 = vxor.u32 %v3451, 2147483648
        %v3476 = vxor.u32 %v3454, 2147483648
        %v3477 = vmul.f32 %v3473, 1.442695
        %v3478 = vpow.pop %v3477
        %v3479 = vmul.f32 %v3474, 1.442695
        %v3480 = vpow.pop %v3479
        %v3481 = vmul.f32 %v3475, 1.442695
        %v3482 = vpow.pop %v3481
        %v3483 = vmul.f32 %v3476, 1.442695
        %v3484 = vpow.pop %v3483
        %v3485 = vadd.f32 %v3478, 1.0
        %v3486 = vadd.f32 %v3480, 1.0
        %v3487 = vadd.f32 %v3482, 1.0
        %v3488 = vadd.f32 %v3484, 1.0
        %v3489 = vrcp.pop %v3485
        %v3490 = vmul.f32 1.0, %v3489
        %v3491 = vrcp.pop %v3486
        %v3492 = vmul.f32 1.0, %v3491
        %v3493 = vrcp.pop %v3487
        %v3494 = vmul.f32 1.0, %v3493
        %v3495 = vrcp.pop %v3488
        %v3496 = vmul.f32 1.0, %v3495
        %v3497 = vsub.f32 %v3459, %v3261
        %v3498 = vsub.f32 %v3462, %v3263
        %v3499 = vsub.f32 %v3467, %v3265
        %v3500 = vsub.f32 %v3470, %v3267
        %v3501 = vmul.f32 %v3490, %v3497
        %v3502 = vmul.f32 %v3492, %v3498
        %v3503 = vmul.f32 %v3494, %v3499
        %v3504 = vmul.f32 %v3496, %v3500
        %v3505 = vadd.f32 %v3261, %v3501
        %v3506 = vadd.f32 %v3263, %v3502
        %v3507 = vadd.f32 %v3265, %v3503
        %v3508 = vadd.f32 %v3267, %v3504
        %3509 = vst.msk [vmem:[#allocation3 + $0x8] sm:$0xff] %vm2970, %v3505
        %3510 = vst.msk [vmem:[#allocation3 + $0x18] sm:$0xff] %vm2970, %v3506
        %3511 = vst.msk [vmem:[#allocation3 + $0x28] sm:$0xff] %vm2970, %v3507
        %3512 = vst.msk [vmem:[#allocation3 + $0x38] sm:$0xff] %vm2970, %v3508
        %v3513 = vld [vmem:[%s39] sm:$0xf]
        %v3514 = vld [vmem:[%s39 + $0x4] sm:$0xf]
        %v3515 = vld [vmem:[%s39 + $0x8] sm:$0xf]
        %v3516 = vld [vmem:[%s39 + $0xc] sm:$0xf]
        %v3517 = vld [vmem:[%s39 + $0x10] sm:$0xf]
        %v3518 = vld [vmem:[%s39 + $0x14] sm:$0xf]
        %v3519 = vld [vmem:[%s39 + $0x18] sm:$0xf]
        %v3520 = vld [vmem:[%s39 + $0x1c] sm:$0xf]
        %v3521 = vld [vmem:[%s41] sm:$0xff]
        %v3522 = vld [vmem:[%s41 + $0x8] sm:$0xff]
        %v3523 = vld [vmem:[%s41 + $0x10] sm:$0xff]
        %v3524 = vld [vmem:[%s41 + $0x18] sm:$0xff]
        %v3525 = vld [vmem:[%s41 + $0x20] sm:$0xff]
        %v3526 = vld [vmem:[%s41 + $0x28] sm:$0xff]
        %v3527 = vld [vmem:[%s41 + $0x30] sm:$0xff]
        %v3528 = vld [vmem:[%s41 + $0x38] sm:$0xff]
        %v3529 = vld [vmem:[#allocation3 + $0x8] sm:$0xff]
        %v3530 = vld [vmem:[#allocation3 + $0x18] sm:$0xff]
        %v3531 = vld [vmem:[#allocation3 + $0x28] sm:$0xff]
        %v3532 = vld [vmem:[#allocation3 + $0x38] sm:$0xff]
        %v3533 = vpack.c.bf16 %v3530, %v3529
        %v3534 = vpack.c.bf16 %v3532, %v3531
        %3536 = vset.pattern.permute.xlu0 0
        %3537 = vperm.xlu0 %3536, %v3521
        %v3538 = vpop.permute.xlu0 %3537
        %3541 = vset.pattern.permute.xlu0 0
        %3542 = vperm.xlu0 %3541, %v3522
        %v3543 = vpop.permute.xlu0 %3542
        %3546 = vset.pattern.permute.xlu0 0
        %3547 = vperm.xlu0 %3546, %v3523
        %v3548 = vpop.permute.xlu0 %3547
        %3551 = vset.pattern.permute.xlu0 0
        %3552 = vperm.xlu0 %3551, %v3524
        %v3553 = vpop.permute.xlu0 %3552
        %3556 = vset.pattern.permute.xlu0 0
        %3557 = vperm.xlu0 %3556, %v3525
        %v3558 = vpop.permute.xlu0 %3557
        %3561 = vset.pattern.permute.xlu0 0
        %3562 = vperm.xlu0 %3561, %v3526
        %v3563 = vpop.permute.xlu0 %3562
        %3566 = vset.pattern.permute.xlu0 0
        %3567 = vperm.xlu0 %3566, %v3527
        %v3568 = vpop.permute.xlu0 %3567
        %3571 = vset.pattern.permute.xlu0 0
        %3572 = vperm.xlu0 %3571, %v3528
        %v3573 = vpop.permute.xlu0 %3572
        %v3583 = vunpack.c.l.b16 %v3513
        %v3584 = vunpack.c.l.b16 %v3514
        %v3585 = vunpack.c.l.b16 %v3515
        %v3586 = vunpack.c.l.b16 %v3516
        %v3587 = vunpack.c.l.b16 %v3517
        %v3588 = vunpack.c.l.b16 %v3518
        %v3589 = vunpack.c.l.b16 %v3519
        %v3590 = vunpack.c.l.b16 %v3520
        %v3591 = vpack.c.b16 %v3584, %v3583
        %v3592 = vpack.c.b16 %v3586, %v3585
        %v3593 = vpack.c.b16 %v3588, %v3587
        %v3594 = vpack.c.b16 %v3590, %v3589
        %v3596 = vsel %vm1700, %v3591, 0
        %v3599 = vsel %vm1700, %v3592, 0
        %v3602 = vsel %vm1700, %v3593, 0
        %v3605 = vsel %vm1700, %v3594, 0
        %3607 = vmatprep.subr.bf16.mxu0 0
        %3608 = vmatpush1.bf16.msra.mxu0 %v3533
        %3609 = vmatprep.subr.bf16.mxu0 0
        %3610 = vmatpush1.bf16.msra.mxu0 %v3534
        %3611 = vmatprep.subr.bf16.mxu0 0
        %3612 = vmatpush1.bf16.msra.mxu0 0
        %3613 = vmatprep.subr.bf16.mxu0 0
        %3614 = vmatpush1.bf16.msra.mxu0 0
        %3615 = vmatprep.subr.bf16.mxu0 0
        %3616 = vmatpush1.bf16.msra.mxu0 0
        %3617 = vmatprep.subr.bf16.mxu0 0
        %3618 = vmatpush1.bf16.msra.mxu0 0
        %3619 = vmatprep.subr.bf16.mxu0 0
        %3620 = vmatpush1.bf16.msra.mxu0 0
        %3621 = vmatprep.subr.bf16.mxu0 0
        %3622 = vmatpush1.bf16.msra.mxu0 0
        %3623 = vmatprep.subr.bf16.mxu0 0
        %3624 = vmatpush1.bf16.msra.mxu0 0
        %3625 = vmatprep.subr.bf16.mxu0 0
        %3626 = vmatpush1.bf16.msra.mxu0 0
        %3627 = vmatprep.subr.bf16.mxu0 0
        %3628 = vmatpush1.bf16.msra.mxu0 0
        %3629 = vmatprep.subr.bf16.mxu0 0
        %3630 = vmatpush1.bf16.msra.mxu0 0
        %3631 = vmatprep.subr.bf16.mxu0 0
        %3632 = vmatpush1.bf16.msra.mxu0 0
        %3633 = vmatprep.subr.bf16.mxu0 0
        %3634 = vmatpush1.bf16.msra.mxu0 0
        %3635 = vmatprep.subr.bf16.mxu0 0
        %3636 = vmatpush1.bf16.msra.mxu0 0
        %3637 = vmatprep.subr.bf16.mxu0 0
        %3638 = vmatpush1.bf16.msra.mxu0 0
        %3639 = vmatprep.mubr.bf16.mxu0 0
        %3640 = vmatmul.mubr.bf16.gmra.mrb[0].mxu0 %v3596
        %v3641 = vpop.f32.mrb[0].mxu0
        %v3642 = vadd.f32 %v3538, %v3641
        %v3643 = vpop.f32.mrb[0].mxu0
        %v3644 = vpop.f32.mrb[0].mxu0
        %v3645 = vadd.f32 %v3543, %v3644
        %v3646 = vpop.f32.mrb[0].mxu0
        %3647 = vmatprep.mubr.bf16.mxu0 0
        %3648 = vmatmul.mubr.bf16.gmra.mrb[0].mxu0 %v3599
        %v3649 = vpop.f32.mrb[0].mxu0
        %v3650 = vadd.f32 %v3548, %v3649
        %v3651 = vpop.f32.mrb[0].mxu0
        %v3652 = vpop.f32.mrb[0].mxu0
        %v3653 = vadd.f32 %v3553, %v3652
        %v3654 = vpop.f32.mrb[0].mxu0
        %3655 = vmatprep.mubr.bf16.mxu0 0
        %3656 = vmatmul.mubr.bf16.gmra.mrb[0].mxu0 %v3602
        %v3657 = vpop.f32.mrb[0].mxu0
        %v3658 = vadd.f32 %v3558, %v3657
        %v3659 = vpop.f32.mrb[0].mxu0
        %v3660 = vpop.f32.mrb[0].mxu0
        %v3661 = vadd.f32 %v3563, %v3660
        %v3662 = vpop.f32.mrb[0].mxu0
        %3663 = vmatprep.mubr.bf16.mxu0 0
        %3664 = vmatmul.mubr.bf16.gmra.mrb[0].mxu0 %v3605
        %v3665 = vpop.f32.mrb[0].mxu0
        %v3666 = vadd.f32 %v3568, %v3665
        %v3667 = vpop.f32.mrb[0].mxu0
        %v3668 = vpop.f32.mrb[0].mxu0
        %v3669 = vadd.f32 %v3573, %v3668
        %v3670 = vpop.f32.mrb[0].mxu0
        %3671 = vdwg.mxu0
        %3672 = vst.msk [vmem:[#allocation2 + $0x8] sm:$0xff] %vm2970, %v3642
        %3673 = vst.msk [vmem:[#allocation2 + $0x18] sm:$0xff] %vm2970, %v3645
        %3674 = vst.msk [vmem:[#allocation2 + $0x28] sm:$0xff] %vm2970, %v3650
        %3675 = vst.msk [vmem:[#allocation2 + $0x38] sm:$0xff] %vm2970, %v3653
        %3676 = vst.msk [vmem:[#allocation2 + $0x48] sm:$0xff] %vm2970, %v3658
        %3677 = vst.msk [vmem:[#allocation2 + $0x58] sm:$0xff] %vm2970, %v3661
        %3678 = vst.msk [vmem:[#allocation2 + $0x68] sm:$0xff] %vm2970, %v3666
        %3679 = vst.msk [vmem:[#allocation2 + $0x78] sm:$0xff] %vm2970, %v3669
        %v3680 = vld [vmem:[%s43] sm:$0xff]
        %v3681 = vld [vmem:[%s43 + $0x8] sm:$0xff]
        %v3682 = vld [vmem:[%s43 + $0x10] sm:$0xff]
        %v3683 = vld [vmem:[%s43 + $0x18] sm:$0xff]
        %v3684 = vld [vmem:[%s43 + $0x20] sm:$0xff]
        %v3685 = vld [vmem:[%s43 + $0x28] sm:$0xff]
        %v3686 = vld [vmem:[%s43 + $0x30] sm:$0xff]
        %v3687 = vld [vmem:[%s43 + $0x38] sm:$0xff]
        %v3688 = vld [vmem:[%s43 + $0x40] sm:$0xff]
        %v3689 = vld [vmem:[%s43 + $0x48] sm:$0xff]
        %v3690 = vld [vmem:[%s43 + $0x50] sm:$0xff]
        %v3691 = vld [vmem:[%s43 + $0x58] sm:$0xff]
        %v3692 = vld [vmem:[%s43 + $0x60] sm:$0xff]
        %v3693 = vld [vmem:[%s43 + $0x68] sm:$0xff]
        %v3694 = vld [vmem:[%s43 + $0x70] sm:$0xff]
        %v3695 = vld [vmem:[%s43 + $0x78] sm:$0xff]
        %v3696 = vld [vmem:[%s45] sm:$0xff]
        %v3697 = vld [vmem:[%s45 + $0x8] sm:$0xff]
        %v3698 = vld [vmem:[%s45 + $0x10] sm:$0xff]
        %v3699 = vld [vmem:[%s45 + $0x18] sm:$0xff]
        %v3700 = vld [vmem:[%s45 + $0x20] sm:$0xff]
        %v3701 = vld [vmem:[%s45 + $0x28] sm:$0xff]
        %v3702 = vld [vmem:[%s45 + $0x30] sm:$0xff]
        %v3703 = vld [vmem:[%s45 + $0x38] sm:$0xff]
        %v3704 = vld [vmem:[%s45 + $0x40] sm:$0xff]
        %v3705 = vld [vmem:[%s45 + $0x48] sm:$0xff]
        %v3706 = vld [vmem:[%s45 + $0x50] sm:$0xff]
        %v3707 = vld [vmem:[%s45 + $0x58] sm:$0xff]
        %v3708 = vld [vmem:[%s45 + $0x60] sm:$0xff]
        %v3709 = vld [vmem:[%s45 + $0x68] sm:$0xff]
        %v3710 = vld [vmem:[%s45 + $0x70] sm:$0xff]
        %v3711 = vld [vmem:[%s45 + $0x78] sm:$0xff]
        %v3712 = vld [vmem:[#allocation2] sm:$0xff]
        %v3713 = vld [vmem:[#allocation2 + $0x8] sm:$0xff]
        %v3714 = vld [vmem:[#allocation2 + $0x10] sm:$0xff]
        %v3715 = vld [vmem:[#allocation2 + $0x18] sm:$0xff]
        %v3716 = vld [vmem:[#allocation2 + $0x20] sm:$0xff]
        %v3717 = vld [vmem:[#allocation2 + $0x28] sm:$0xff]
        %v3718 = vld [vmem:[#allocation2 + $0x30] sm:$0xff]
        %v3719 = vld [vmem:[#allocation2 + $0x38] sm:$0xff]
        %v3720 = vld [vmem:[#allocation2 + $0x40] sm:$0xff]
        %v3721 = vld [vmem:[#allocation2 + $0x48] sm:$0xff]
        %v3722 = vld [vmem:[#allocation2 + $0x50] sm:$0xff]
        %v3723 = vld [vmem:[#allocation2 + $0x58] sm:$0xff]
        %v3724 = vld [vmem:[#allocation2 + $0x60] sm:$0xff]
        %v3725 = vld [vmem:[#allocation2 + $0x68] sm:$0xff]
        %v3726 = vld [vmem:[#allocation2 + $0x70] sm:$0xff]
        %v3727 = vld [vmem:[#allocation2 + $0x78] sm:$0xff]
        %3736 = vrot.lane.b32.xlu0 %v3713, 127
        %v3737 = vpop.permute.xlu0 %3736
        %3738 = vrot.lane.b32.xlu0 %v3715, 127
        %v3739 = vpop.permute.xlu0 %3738
        %3740 = vrot.lane.b32.xlu0 %v3717, 127
        %v3741 = vpop.permute.xlu0 %3740
        %3742 = vrot.lane.b32.xlu0 %v3719, 127
        %v3743 = vpop.permute.xlu0 %3742
        %3744 = vrot.lane.b32.xlu0 %v3721, 127
        %v3745 = vpop.permute.xlu0 %3744
        %3746 = vrot.lane.b32.xlu0 %v3723, 127
        %v3747 = vpop.permute.xlu0 %3746
        %3748 = vrot.lane.b32.xlu0 %v3725, 127
        %v3749 = vpop.permute.xlu0 %3748
        %3750 = vrot.lane.b32.xlu0 %v3727, 127
        %v3751 = vpop.permute.xlu0 %3750
        %3760 = vrot.lane.b32.xlu0 %v3713, 126
        %v3761 = vpop.permute.xlu0 %3760
        %3762 = vrot.lane.b32.xlu0 %v3715, 126
        %v3763 = vpop.permute.xlu0 %3762
        %3764 = vrot.lane.b32.xlu0 %v3717, 126
        %v3765 = vpop.permute.xlu0 %3764
        %3766 = vrot.lane.b32.xlu0 %v3719, 126
        %v3767 = vpop.permute.xlu0 %3766
        %3768 = vrot.lane.b32.xlu0 %v3721, 126
        %v3769 = vpop.permute.xlu0 %3768
        %3770 = vrot.lane.b32.xlu0 %v3723, 126
        %v3771 = vpop.permute.xlu0 %3770
        %3772 = vrot.lane.b32.xlu0 %v3725, 126
        %v3773 = vpop.permute.xlu0 %3772
        %3774 = vrot.lane.b32.xlu0 %v3727, 126
        %v3775 = vpop.permute.xlu0 %3774
        %v3784 = vpack.c.bf16 %v3714, %v3712
        %v3785 = vpack.c.bf16 %v3715, %v3713
        %v3786 = vpack.c.bf16 %v3718, %v3716
        %v3787 = vpack.c.bf16 %v3719, %v3717
        %v3788 = vpack.c.bf16 %v3722, %v3720
        %v3789 = vpack.c.bf16 %v3723, %v3721
        %v3790 = vpack.c.bf16 %v3726, %v3724
        %v3791 = vpack.c.bf16 %v3727, %v3725
        %v3792 = vpack.c.bf16 %v3739, %v3737
        %v3793 = vpack.c.bf16 %v3743, %v3741
        %v3794 = vpack.c.bf16 %v3747, %v3745
        %v3795 = vpack.c.bf16 %v3751, %v3749
        %v3796 = vpack.c.bf16 %v3763, %v3761
        %v3797 = vpack.c.bf16 %v3767, %v3765
        %v3798 = vpack.c.bf16 %v3771, %v3769
        %v3799 = vpack.c.bf16 %v3775, %v3773
        %3801 = vset.pattern.permute.xlu0 0
        %3802 = vperm.xlu0 %3801, %v3696
        %v3803 = vpop.permute.xlu0 %3802
        %3806 = vset.pattern.permute.xlu0 0
        %3807 = vperm.xlu0 %3806, %v3697
        %v3808 = vpop.permute.xlu0 %3807
        %3811 = vset.pattern.permute.xlu0 0
        %3812 = vperm.xlu0 %3811, %v3698
        %v3813 = vpop.permute.xlu0 %3812
        %3816 = vset.pattern.permute.xlu0 0
        %3817 = vperm.xlu0 %3816, %v3699
        %v3818 = vpop.permute.xlu0 %3817
        %3821 = vset.pattern.permute.xlu0 0
        %3822 = vperm.xlu0 %3821, %v3700
        %v3823 = vpop.permute.xlu0 %3822
        %3826 = vset.pattern.permute.xlu0 0
        %3827 = vperm.xlu0 %3826, %v3701
        %v3828 = vpop.permute.xlu0 %3827
        %3831 = vset.pattern.permute.xlu0 0
        %3832 = vperm.xlu0 %3831, %v3702
        %v3833 = vpop.permute.xlu0 %3832
        %3836 = vset.pattern.permute.xlu0 0
        %3837 = vperm.xlu0 %3836, %v3703
        %v3838 = vpop.permute.xlu0 %3837
        %3841 = vset.pattern.permute.xlu0 0
        %3842 = vperm.xlu0 %3841, %v3704
        %v3843 = vpop.permute.xlu0 %3842
        %3846 = vset.pattern.permute.xlu0 0
        %3847 = vperm.xlu0 %3846, %v3705
        %v3848 = vpop.permute.xlu0 %3847
        %3851 = vset.pattern.permute.xlu0 0
        %3852 = vperm.xlu0 %3851, %v3706
        %v3853 = vpop.permute.xlu0 %3852
        %3856 = vset.pattern.permute.xlu0 0
        %3857 = vperm.xlu0 %3856, %v3707
        %v3858 = vpop.permute.xlu0 %3857
        %3861 = vset.pattern.permute.xlu0 0
        %3862 = vperm.xlu0 %3861, %v3708
        %v3863 = vpop.permute.xlu0 %3862
        %3866 = vset.pattern.permute.xlu0 0
        %3867 = vperm.xlu0 %3866, %v3709
        %v3868 = vpop.permute.xlu0 %3867
        %3871 = vset.pattern.permute.xlu0 0
        %3872 = vperm.xlu0 %3871, %v3710
        %v3873 = vpop.permute.xlu0 %3872
        %3876 = vset.pattern.permute.xlu0 0
        %3877 = vperm.xlu0 %3876, %v3711
        %v3878 = vpop.permute.xlu0 %3877
        %v3896 = vunpack.c.l.b16 %v3680
        %v3897 = vunpack.c.h.b16 %v3680
        %v3898 = vunpack.c.l.b16 %v3681
        %v3899 = vunpack.c.h.b16 %v3681
        %v3900 = vunpack.c.l.b16 %v3682
        %v3901 = vunpack.c.h.b16 %v3682
        %v3902 = vunpack.c.l.b16 %v3683
        %v3903 = vunpack.c.h.b16 %v3683
        %v3904 = vunpack.c.l.b16 %v3684
        %v3905 = vunpack.c.h.b16 %v3684
        %v3906 = vunpack.c.l.b16 %v3685
        %v3907 = vunpack.c.h.b16 %v3685
        %v3908 = vunpack.c.l.b16 %v3686
        %v3909 = vunpack.c.h.b16 %v3686
        %v3910 = vunpack.c.l.b16 %v3687
        %v3911 = vunpack.c.h.b16 %v3687
        %v3912 = vunpack.c.l.b16 %v3688
        %v3913 = vunpack.c.h.b16 %v3688
        %v3914 = vunpack.c.l.b16 %v3689
        %v3915 = vunpack.c.h.b16 %v3689
        %v3916 = vunpack.c.l.b16 %v3690
        %v3917 = vunpack.c.h.b16 %v3690
        %v3918 = vunpack.c.l.b16 %v3691
        %v3919 = vunpack.c.h.b16 %v3691
        %v3920 = vunpack.c.l.b16 %v3692
        %v3921 = vunpack.c.h.b16 %v3692
        %v3922 = vunpack.c.l.b16 %v3693
        %v3923 = vunpack.c.h.b16 %v3693
        %v3924 = vunpack.c.l.b16 %v3694
        %v3925 = vunpack.c.h.b16 %v3694
        %v3926 = vunpack.c.l.b16 %v3695
        %v3927 = vunpack.c.h.b16 %v3695
        %v3928 = vpack.c.b16 %v3898, %v3896
        %v3929 = vpack.c.b16 %v3899, %v3897
        %v3930 = vpack.c.b16 %v3902, %v3900
        %v3931 = vpack.c.b16 %v3903, %v3901
        %v3932 = vpack.c.b16 %v3906, %v3904
        %v3933 = vpack.c.b16 %v3907, %v3905
        %v3934 = vpack.c.b16 %v3910, %v3908
        %v3935 = vpack.c.b16 %v3911, %v3909
        %v3936 = vpack.c.b16 %v3914, %v3912
        %v3937 = vpack.c.b16 %v3915, %v3913
        %v3938 = vpack.c.b16 %v3918, %v3916
        %v3939 = vpack.c.b16 %v3919, %v3917
        %v3940 = vpack.c.b16 %v3922, %v3920
        %v3941 = vpack.c.b16 %v3923, %v3921
        %v3942 = vpack.c.b16 %v3926, %v3924
        %v3943 = vpack.c.b16 %v3927, %v3925
        %3968 = vrot.lane.b32.xlu0 %v3784, 1
        %v3969 = vpop.permute.xlu0 %3968
        %3970 = vrot.lane.b32.xlu0 %v3785, 1
        %v3971 = vpop.permute.xlu0 %3970
        %3972 = vrot.lane.b32.xlu0 %v3786, 1
        %v3973 = vpop.permute.xlu0 %3972
        %3974 = vrot.lane.b32.xlu0 %v3787, 1
        %v3975 = vpop.permute.xlu0 %3974
        %3976 = vrot.lane.b32.xlu0 %v3788, 1
        %v3977 = vpop.permute.xlu0 %3976
        %3978 = vrot.lane.b32.xlu0 %v3789, 1
        %v3979 = vpop.permute.xlu0 %3978
        %3980 = vrot.lane.b32.xlu0 %v3790, 1
        %v3981 = vpop.permute.xlu0 %3980
        %3982 = vrot.lane.b32.xlu0 %v3791, 1
        %v3983 = vpop.permute.xlu0 %3982
        %3984 = vrot.lane.b32.xlu0 %v3792, 1
        %v3985 = vpop.permute.xlu0 %3984
        %3986 = vrot.lane.b32.xlu0 %v3793, 1
        %v3987 = vpop.permute.xlu0 %3986
        %3988 = vrot.lane.b32.xlu0 %v3794, 1
        %v3989 = vpop.permute.xlu0 %3988
        %3990 = vrot.lane.b32.xlu0 %v3795, 1
        %v3991 = vpop.permute.xlu0 %3990
        %3992 = vrot.lane.b32.xlu0 %v3796, 1
        %v3993 = vpop.permute.xlu0 %3992
        %3994 = vrot.lane.b32.xlu0 %v3797, 1
        %v3995 = vpop.permute.xlu0 %3994
        %3996 = vrot.lane.b32.xlu0 %v3798, 1
        %v3997 = vpop.permute.xlu0 %3996
        %3998 = vrot.lane.b32.xlu0 %v3799, 1
        %v3999 = vpop.permute.xlu0 %3998
        %v4000 = vsel %vm1279, %v3969, %v3971
        %v4001 = vsel %vm1279, %v3973, %v3975
        %v4002 = vsel %vm1279, %v3977, %v3979
        %v4003 = vsel %vm1279, %v3981, %v3983
        %v4017 = vsel %vm2970, %v3929, 0
        %v4020 = vsel %vm2970, %v3931, 0
        %v4023 = vsel %vm2970, %v3933, 0
        %v4026 = vsel %vm2970, %v3935, 0
        %v4029 = vsel %vm2970, %v3937, 0
        %v4032 = vsel %vm2970, %v3939, 0
        %v4035 = vsel %vm2970, %v3941, 0
        %v4038 = vsel %vm2970, %v3943, 0
        %4040 = vmatprep.subr.bf16.mxu0 0
        %4041 = vmatpush1.bf16.msra.mxu0 %v4000
        %4042 = vmatprep.subr.bf16.mxu0 0
        %4043 = vmatpush1.bf16.msra.mxu0 %v4001
        %4044 = vmatprep.subr.bf16.mxu0 0
        %4045 = vmatpush1.bf16.msra.mxu0 %v4002
        %4046 = vmatprep.subr.bf16.mxu0 0
        %4047 = vmatpush1.bf16.msra.mxu0 %v4003
        %4048 = vmatprep.subr.bf16.mxu0 0
        %4049 = vmatpush1.bf16.msra.mxu0 %v3985
        %4050 = vmatprep.subr.bf16.mxu0 0
        %4051 = vmatpush1.bf16.msra.mxu0 %v3987
        %4052 = vmatprep.subr.bf16.mxu0 0
        %4053 = vmatpush1.bf16.msra.mxu0 %v3989
        %4054 = vmatprep.subr.bf16.mxu0 0
        %4055 = vmatpush1.bf16.msra.mxu0 %v3991
        %4056 = vmatprep.subr.bf16.mxu0 0
        %4057 = vmatpush1.bf16.msra.mxu0 %v3993
        %4058 = vmatprep.subr.bf16.mxu0 0
        %4059 = vmatpush1.bf16.msra.mxu0 %v3995
        %4060 = vmatprep.subr.bf16.mxu0 0
        %4061 = vmatpush1.bf16.msra.mxu0 %v3997
        %4062 = vmatprep.subr.bf16.mxu0 0
        %4063 = vmatpush1.bf16.msra.mxu0 %v3999
        %4064 = vmatprep.subr.bf16.mxu0 0
        %4065 = vmatpush1.bf16.msra.mxu0 0
        %4066 = vmatprep.subr.bf16.mxu0 0
        %4067 = vmatpush1.bf16.msra.mxu0 0
        %4068 = vmatprep.subr.bf16.mxu0 0
        %4069 = vmatpush1.bf16.msra.mxu0 0
        %4070 = vmatprep.subr.bf16.mxu0 0
        %4071 = vmatpush1.bf16.msra.mxu0 0
        %4072 = vmatprep.mubr.bf16.mxu0 %v4017
        %4073 = vmatmul.mubr.bf16.gmra.mrb[0].mxu0 %v3928
        %v4074 = vpop.f32.mrb[0].mxu0
        %v4075 = vadd.f32 %v3803, %v4074
        %v4076 = vpop.f32.mrb[0].mxu0
        %v4077 = vpop.f32.mrb[0].mxu0
        %v4078 = vadd.f32 %v3808, %v4077
        %v4079 = vpop.f32.mrb[0].mxu0
        %4080 = vmatprep.mubr.bf16.mxu0 %v4020
        %4081 = vmatmul.mubr.bf16.gmra.mrb[0].mxu0 %v3930
        %v4082 = vpop.f32.mrb[0].mxu0
        %v4083 = vadd.f32 %v3813, %v4082
        %v4084 = vpop.f32.mrb[0].mxu0
        %v4085 = vpop.f32.mrb[0].mxu0
        %v4086 = vadd.f32 %v3818, %v4085
        %v4087 = vpop.f32.mrb[0].mxu0
        %4088 = vmatprep.mubr.bf16.mxu0 %v4023
        %4089 = vmatmul.mubr.bf16.gmra.mrb[0].mxu0 %v3932
        %v4090 = vpop.f32.mrb[0].mxu0
        %v4091 = vadd.f32 %v3823, %v4090
        %v4092 = vpop.f32.mrb[0].mxu0
        %v4093 = vpop.f32.mrb[0].mxu0
        %v4094 = vadd.f32 %v3828, %v4093
        %v4095 = vpop.f32.mrb[0].mxu0
        %4096 = vmatprep.mubr.bf16.mxu0 %v4026
        %4097 = vmatmul.mubr.bf16.gmra.mrb[0].mxu0 %v3934
        %v4098 = vpop.f32.mrb[0].mxu0
        %v4099 = vadd.f32 %v3833, %v4098
        %v4100 = vpop.f32.mrb[0].mxu0
        %v4101 = vpop.f32.mrb[0].mxu0
        %v4102 = vadd.f32 %v3838, %v4101
        %v4103 = vpop.f32.mrb[0].mxu0
        %4104 = vmatprep.mubr.bf16.mxu0 %v4029
        %4105 = vmatmul.mubr.bf16.gmra.mrb[0].mxu0 %v3936
        %v4106 = vpop.f32.mrb[0].mxu0
        %v4107 = vadd.f32 %v3843, %v4106
        %v4108 = vpop.f32.mrb[0].mxu0
        %v4109 = vpop.f32.mrb[0].mxu0
        %v4110 = vadd.f32 %v3848, %v4109
        %v4111 = vpop.f32.mrb[0].mxu0
        %4112 = vmatprep.mubr.bf16.mxu0 %v4032
        %4113 = vmatmul.mubr.bf16.gmra.mrb[0].mxu0 %v3938
        %v4114 = vpop.f32.mrb[0].mxu0
        %v4115 = vadd.f32 %v3853, %v4114
        %v4116 = vpop.f32.mrb[0].mxu0
        %v4117 = vpop.f32.mrb[0].mxu0
        %v4118 = vadd.f32 %v3858, %v4117
        %v4119 = vpop.f32.mrb[0].mxu0
        %4120 = vmatprep.mubr.bf16.mxu0 %v4035
        %4121 = vmatmul.mubr.bf16.gmra.mrb[0].mxu0 %v3940
        %v4122 = vpop.f32.mrb[0].mxu0
        %v4123 = vadd.f32 %v3863, %v4122
        %v4124 = vpop.f32.mrb[0].mxu0
        %v4125 = vpop.f32.mrb[0].mxu0
        %v4126 = vadd.f32 %v3868, %v4125
        %v4127 = vpop.f32.mrb[0].mxu0
        %4128 = vmatprep.mubr.bf16.mxu0 %v4038
        %4129 = vmatmul.mubr.bf16.gmra.mrb[0].mxu0 %v3942
        %v4130 = vpop.f32.mrb[0].mxu0
        %v4131 = vadd.f32 %v3873, %v4130
        %v4132 = vpop.f32.mrb[0].mxu0
        %v4133 = vpop.f32.mrb[0].mxu0
        %v4134 = vadd.f32 %v3878, %v4133
        %v4135 = vpop.f32.mrb[0].mxu0
        %4136 = vdwg.mxu0
        %v4137 = vxor.u32 %v4075, 2147483648
        %v4138 = vxor.u32 %v4078, 2147483648
        %v4139 = vxor.u32 %v4083, 2147483648
        %v4140 = vxor.u32 %v4086, 2147483648
        %v4141 = vxor.u32 %v4091, 2147483648
        %v4142 = vxor.u32 %v4094, 2147483648
        %v4143 = vxor.u32 %v4099, 2147483648
        %v4144 = vxor.u32 %v4102, 2147483648
        %v4145 = vmul.f32 %v4137, 1.442695
        %v4146 = vpow.pop %v4145
        %v4147 = vmul.f32 %v4138, 1.442695
        %v4148 = vpow.pop %v4147
        %v4149 = vmul.f32 %v4139, 1.442695
        %v4150 = vpow.pop %v4149
        %v4151 = vmul.f32 %v4140, 1.442695
        %v4152 = vpow.pop %v4151
        %v4153 = vmul.f32 %v4141, 1.442695
        %v4154 = vpow.pop %v4153
        %v4155 = vmul.f32 %v4142, 1.442695
        %v4156 = vpow.pop %v4155
        %v4157 = vmul.f32 %v4143, 1.442695
        %v4158 = vpow.pop %v4157
        %v4159 = vmul.f32 %v4144, 1.442695
        %v4160 = vpow.pop %v4159
        %v4161 = vadd.f32 %v4146, 1.0
        %v4162 = vadd.f32 %v4148, 1.0
        %v4163 = vadd.f32 %v4150, 1.0
        %v4164 = vadd.f32 %v4152, 1.0
        %v4165 = vadd.f32 %v4154, 1.0
        %v4166 = vadd.f32 %v4156, 1.0
        %v4167 = vadd.f32 %v4158, 1.0
        %v4168 = vadd.f32 %v4160, 1.0
        %v4169 = vrcp.pop %v4161
        %v4170 = vmul.f32 1.0, %v4169
        %v4171 = vrcp.pop %v4162
        %v4172 = vmul.f32 1.0, %v4171
        %v4173 = vrcp.pop %v4163
        %v4174 = vmul.f32 1.0, %v4173
        %v4175 = vrcp.pop %v4164
        %v4176 = vmul.f32 1.0, %v4175
        %v4177 = vrcp.pop %v4165
        %v4178 = vmul.f32 1.0, %v4177
        %v4179 = vrcp.pop %v4166
        %v4180 = vmul.f32 1.0, %v4179
        %v4181 = vrcp.pop %v4167
        %v4182 = vmul.f32 1.0, %v4181
        %v4183 = vrcp.pop %v4168
        %v4184 = vmul.f32 1.0, %v4183
        %v4185 = vsub.f32 %v4107, %v3713
        %v4186 = vsub.f32 %v4110, %v3715
        %v4187 = vsub.f32 %v4115, %v3717
        %v4188 = vsub.f32 %v4118, %v3719
        %v4189 = vsub.f32 %v4123, %v3721
        %v4190 = vsub.f32 %v4126, %v3723
        %v4191 = vsub.f32 %v4131, %v3725
        %v4192 = vsub.f32 %v4134, %v3727
        %v4193 = vmul.f32 %v4170, %v4185
        %v4194 = vmul.f32 %v4172, %v4186
        %v4195 = vmul.f32 %v4174, %v4187
        %v4196 = vmul.f32 %v4176, %v4188
        %v4197 = vmul.f32 %v4178, %v4189
        %v4198 = vmul.f32 %v4180, %v4190
        %v4199 = vmul.f32 %v4182, %v4191
        %v4200 = vmul.f32 %v4184, %v4192
        %v4201 = vadd.f32 %v3713, %v4193
        %v4202 = vadd.f32 %v3715, %v4194
        %v4203 = vadd.f32 %v3717, %v4195
        %v4204 = vadd.f32 %v3719, %v4196
        %v4205 = vadd.f32 %v3721, %v4197
        %v4206 = vadd.f32 %v3723, %v4198
        %v4207 = vadd.f32 %v3725, %v4199
        %v4208 = vadd.f32 %v3727, %v4200
        %4209 = vst.msk [vmem:[#allocation3 + $0x8] sm:$0xff] %vm2970, %v4201
        %4210 = vst.msk [vmem:[#allocation3 + $0x18] sm:$0xff] %vm2970, %v4202
        %4211 = vst.msk [vmem:[#allocation3 + $0x28] sm:$0xff] %vm2970, %v4203
        %4212 = vst.msk [vmem:[#allocation3 + $0x38] sm:$0xff] %vm2970, %v4204
        %4213 = vst.msk [vmem:[#allocation3 + $0x48] sm:$0xff] %vm2970, %v4205
        %4214 = vst.msk [vmem:[#allocation3 + $0x58] sm:$0xff] %vm2970, %v4206
        %4215 = vst.msk [vmem:[#allocation3 + $0x68] sm:$0xff] %vm2970, %v4207
        %4216 = vst.msk [vmem:[#allocation3 + $0x78] sm:$0xff] %vm2970, %v4208
        %v4217 = vld [vmem:[%s47] sm:$0xff]
        %v4218 = vld [vmem:[%s47 + $0x8] sm:$0xff]
        %v4219 = vld [vmem:[%s47 + $0x10] sm:$0xff]
        %v4220 = vld [vmem:[%s47 + $0x18] sm:$0xff]
        %v4221 = vld [vmem:[%s47 + $0x20] sm:$0xff]
        %v4222 = vld [vmem:[%s47 + $0x28] sm:$0xff]
        %v4223 = vld [vmem:[%s47 + $0x30] sm:$0xff]
        %v4224 = vld [vmem:[%s47 + $0x38] sm:$0xff]
        %v4225 = vld [vmem:[%s47 + $0x40] sm:$0xff]
        %v4226 = vld [vmem:[%s47 + $0x48] sm:$0xff]
        %v4227 = vld [vmem:[%s47 + $0x50] sm:$0xff]
        %v4228 = vld [vmem:[%s47 + $0x58] sm:$0xff]
        %v4229 = vld [vmem:[%s47 + $0x60] sm:$0xff]
        %v4230 = vld [vmem:[%s47 + $0x68] sm:$0xff]
        %v4231 = vld [vmem:[%s47 + $0x70] sm:$0xff]
        %v4232 = vld [vmem:[%s47 + $0x78] sm:$0xff]
        %v4233 = vld [vmem:[%s49] sm:$0xff]
        %v4234 = vld [vmem:[%s49 + $0x8] sm:$0xff]
        %v4235 = vld [vmem:[%s49 + $0x10] sm:$0xff]
        %v4236 = vld [vmem:[%s49 + $0x18] sm:$0xff]
        %v4237 = vld [vmem:[%s49 + $0x20] sm:$0xff]
        %v4238 = vld [vmem:[%s49 + $0x28] sm:$0xff]
        %v4239 = vld [vmem:[%s49 + $0x30] sm:$0xff]
        %v4240 = vld [vmem:[%s49 + $0x38] sm:$0xff]
        %v4241 = vld [vmem:[%s49 + $0x40] sm:$0xff]
        %v4242 = vld [vmem:[%s49 + $0x48] sm:$0xff]
        %v4243 = vld [vmem:[%s49 + $0x50] sm:$0xff]
        %v4244 = vld [vmem:[%s49 + $0x58] sm:$0xff]
        %v4245 = vld [vmem:[%s49 + $0x60] sm:$0xff]
        %v4246 = vld [vmem:[%s49 + $0x68] sm:$0xff]
        %v4247 = vld [vmem:[%s49 + $0x70] sm:$0xff]
        %v4248 = vld [vmem:[%s49 + $0x78] sm:$0xff]
        %v4249 = vld [vmem:[#allocation3] sm:$0xff]
        %v4250 = vld [vmem:[#allocation3 + $0x8] sm:$0xff]
        %v4251 = vld [vmem:[#allocation3 + $0x10] sm:$0xff]
        %v4252 = vld [vmem:[#allocation3 + $0x18] sm:$0xff]
        %v4253 = vld [vmem:[#allocation3 + $0x20] sm:$0xff]
        %v4254 = vld [vmem:[#allocation3 + $0x28] sm:$0xff]
        %v4255 = vld [vmem:[#allocation3 + $0x30] sm:$0xff]
        %v4256 = vld [vmem:[#allocation3 + $0x38] sm:$0xff]
        %v4257 = vld [vmem:[#allocation3 + $0x40] sm:$0xff]
        %v4258 = vld [vmem:[#allocation3 + $0x48] sm:$0xff]
        %v4259 = vld [vmem:[#allocation3 + $0x50] sm:$0xff]
        %v4260 = vld [vmem:[#allocation3 + $0x58] sm:$0xff]
        %v4261 = vld [vmem:[#allocation3 + $0x60] sm:$0xff]
        %v4262 = vld [vmem:[#allocation3 + $0x68] sm:$0xff]
        %v4263 = vld [vmem:[#allocation3 + $0x70] sm:$0xff]
        %v4264 = vld [vmem:[#allocation3 + $0x78] sm:$0xff]
        %4273 = vrot.lane.b32.xlu0 %v4250, 127
        %v4274 = vpop.permute.xlu0 %4273
        %4275 = vrot.lane.b32.xlu0 %v4252, 127
        %v4276 = vpop.permute.xlu0 %4275
        %4277 = vrot.lane.b32.xlu0 %v4254, 127
        %v4278 = vpop.permute.xlu0 %4277
        %4279 = vrot.lane.b32.xlu0 %v4256, 127
        %v4280 = vpop.permute.xlu0 %4279
        %4281 = vrot.lane.b32.xlu0 %v4258, 127
        %v4282 = vpop.permute.xlu0 %4281
        %4283 = vrot.lane.b32.xlu0 %v4260, 127
        %v4284 = vpop.permute.xlu0 %4283
        %4285 = vrot.lane.b32.xlu0 %v4262, 127
        %v4286 = vpop.permute.xlu0 %4285
        %4287 = vrot.lane.b32.xlu0 %v4264, 127
        %v4288 = vpop.permute.xlu0 %4287
        %4297 = vrot.lane.b32.xlu0 %v4250, 126
        %v4298 = vpop.permute.xlu0 %4297
        %4299 = vrot.lane.b32.xlu0 %v4252, 126
        %v4300 = vpop.permute.xlu0 %4299
        %4301 = vrot.lane.b32.xlu0 %v4254, 126
        %v4302 = vpop.permute.xlu0 %4301
        %4303 = vrot.lane.b32.xlu0 %v4256, 126
        %v4304 = vpop.permute.xlu0 %4303
        %4305 = vrot.lane.b32.xlu0 %v4258, 126
        %v4306 = vpop.permute.xlu0 %4305
        %4307 = vrot.lane.b32.xlu0 %v4260, 126
        %v4308 = vpop.permute.xlu0 %4307
        %4309 = vrot.lane.b32.xlu0 %v4262, 126
        %v4310 = vpop.permute.xlu0 %4309
        %4311 = vrot.lane.b32.xlu0 %v4264, 126
        %v4312 = vpop.permute.xlu0 %4311
        %v4321 = vpack.c.bf16 %v4251, %v4249
        %v4322 = vpack.c.bf16 %v4252, %v4250
        %v4323 = vpack.c.bf16 %v4255, %v4253
        %v4324 = vpack.c.bf16 %v4256, %v4254
        %v4325 = vpack.c.bf16 %v4259, %v4257
        %v4326 = vpack.c.bf16 %v4260, %v4258
        %v4327 = vpack.c.bf16 %v4263, %v4261
        %v4328 = vpack.c.bf16 %v4264, %v4262
        %v4329 = vpack.c.bf16 %v4276, %v4274
        %v4330 = vpack.c.bf16 %v4280, %v4278
        %v4331 = vpack.c.bf16 %v4284, %v4282
        %v4332 = vpack.c.bf16 %v4288, %v4286
        %v4333 = vpack.c.bf16 %v4300, %v4298
        %v4334 = vpack.c.bf16 %v4304, %v4302
        %v4335 = vpack.c.bf16 %v4308, %v4306
        %v4336 = vpack.c.bf16 %v4312, %v4310
        %4338 = vset.pattern.permute.xlu0 0
        %4339 = vperm.xlu0 %4338, %v4233
        %v4340 = vpop.permute.xlu0 %4339
        %4343 = vset.pattern.permute.xlu0 0
        %4344 = vperm.xlu0 %4343, %v4234
        %v4345 = vpop.permute.xlu0 %4344
        %4348 = vset.pattern.permute.xlu0 0
        %4349 = vperm.xlu0 %4348, %v4235
        %v4350 = vpop.permute.xlu0 %4349
        %4353 = vset.pattern.permute.xlu0 0
        %4354 = vperm.xlu0 %4353, %v4236
        %v4355 = vpop.permute.xlu0 %4354
        %4358 = vset.pattern.permute.xlu0 0
        %4359 = vperm.xlu0 %4358, %v4237
        %v4360 = vpop.permute.xlu0 %4359
        %4363 = vset.pattern.permute.xlu0 0
        %4364 = vperm.xlu0 %4363, %v4238
        %v4365 = vpop.permute.xlu0 %4364
        %4368 = vset.pattern.permute.xlu0 0
        %4369 = vperm.xlu0 %4368, %v4239
        %v4370 = vpop.permute.xlu0 %4369
        %4373 = vset.pattern.permute.xlu0 0
        %4374 = vperm.xlu0 %4373, %v4240
        %v4375 = vpop.permute.xlu0 %4374
        %4378 = vset.pattern.permute.xlu0 0
        %4379 = vperm.xlu0 %4378, %v4241
        %v4380 = vpop.permute.xlu0 %4379
        %4383 = vset.pattern.permute.xlu0 0
        %4384 = vperm.xlu0 %4383, %v4242
        %v4385 = vpop.permute.xlu0 %4384
        %4388 = vset.pattern.permute.xlu0 0
        %4389 = vperm.xlu0 %4388, %v4243
        %v4390 = vpop.permute.xlu0 %4389
        %4393 = vset.pattern.permute.xlu0 0
        %4394 = vperm.xlu0 %4393, %v4244
        %v4395 = vpop.permute.xlu0 %4394
        %4398 = vset.pattern.permute.xlu0 0
        %4399 = vperm.xlu0 %4398, %v4245
        %v4400 = vpop.permute.xlu0 %4399
        %4403 = vset.pattern.permute.xlu0 0
        %4404 = vperm.xlu0 %4403, %v4246
        %v4405 = vpop.permute.xlu0 %4404
        %4408 = vset.pattern.permute.xlu0 0
        %4409 = vperm.xlu0 %4408, %v4247
        %v4410 = vpop.permute.xlu0 %4409
        %4413 = vset.pattern.permute.xlu0 0
        %4414 = vperm.xlu0 %4413, %v4248
        %v4415 = vpop.permute.xlu0 %4414
        %v4433 = vunpack.c.l.b16 %v4217
        %v4434 = vunpack.c.h.b16 %v4217
        %v4435 = vunpack.c.l.b16 %v4218
        %v4436 = vunpack.c.h.b16 %v4218
        %v4437 = vunpack.c.l.b16 %v4219
        %v4438 = vunpack.c.h.b16 %v4219
        %v4439 = vunpack.c.l.b16 %v4220
        %v4440 = vunpack.c.h.b16 %v4220
        %v4441 = vunpack.c.l.b16 %v4221
        %v4442 = vunpack.c.h.b16 %v4221
        %v4443 = vunpack.c.l.b16 %v4222
        %v4444 = vunpack.c.h.b16 %v4222
        %v4445 = vunpack.c.l.b16 %v4223
        %v4446 = vunpack.c.h.b16 %v4223
        %v4447 = vunpack.c.l.b16 %v4224
        %v4448 = vunpack.c.h.b16 %v4224
        %v4449 = vunpack.c.l.b16 %v4225
        %v4450 = vunpack.c.h.b16 %v4225
        %v4451 = vunpack.c.l.b16 %v4226
        %v4452 = vunpack.c.h.b16 %v4226
        %v4453 = vunpack.c.l.b16 %v4227
        %v4454 = vunpack.c.h.b16 %v4227
        %v4455 = vunpack.c.l.b16 %v4228
        %v4456 = vunpack.c.h.b16 %v4228
        %v4457 = vunpack.c.l.b16 %v4229
        %v4458 = vunpack.c.h.b16 %v4229
        %v4459 = vunpack.c.l.b16 %v4230
        %v4460 = vunpack.c.h.b16 %v4230
        %v4461 = vunpack.c.l.b16 %v4231
        %v4462 = vunpack.c.h.b16 %v4231
        %v4463 = vunpack.c.l.b16 %v4232
        %v4464 = vunpack.c.h.b16 %v4232
        %v4465 = vpack.c.b16 %v4435, %v4433
        %v4466 = vpack.c.b16 %v4436, %v4434
        %v4467 = vpack.c.b16 %v4439, %v4437
        %v4468 = vpack.c.b16 %v4440, %v4438
        %v4469 = vpack.c.b16 %v4443, %v4441
        %v4470 = vpack.c.b16 %v4444, %v4442
        %v4471 = vpack.c.b16 %v4447, %v4445
        %v4472 = vpack.c.b16 %v4448, %v4446
        %v4473 = vpack.c.b16 %v4451, %v4449
        %v4474 = vpack.c.b16 %v4452, %v4450
        %v4475 = vpack.c.b16 %v4455, %v4453
        %v4476 = vpack.c.b16 %v4456, %v4454
        %v4477 = vpack.c.b16 %v4459, %v4457
        %v4478 = vpack.c.b16 %v4460, %v4458
        %v4479 = vpack.c.b16 %v4463, %v4461
        %v4480 = vpack.c.b16 %v4464, %v4462
        %4505 = vrot.lane.b32.xlu0 %v4321, 1
        %v4506 = vpop.permute.xlu0 %4505
        %4507 = vrot.lane.b32.xlu0 %v4322, 1
        %v4508 = vpop.permute.xlu0 %4507
        %4509 = vrot.lane.b32.xlu0 %v4323, 1
        %v4510 = vpop.permute.xlu0 %4509
        %4511 = vrot.lane.b32.xlu0 %v4324, 1
        %v4512 = vpop.permute.xlu0 %4511
        %4513 = vrot.lane.b32.xlu0 %v4325, 1
        %v4514 = vpop.permute.xlu0 %4513
        %4515 = vrot.lane.b32.xlu0 %v4326, 1
        %v4516 = vpop.permute.xlu0 %4515
        %4517 = vrot.lane.b32.xlu0 %v4327, 1
        %v4518 = vpop.permute.xlu0 %4517
        %4519 = vrot.lane.b32.xlu0 %v4328, 1
        %v4520 = vpop.permute.xlu0 %4519
        %4521 = vrot.lane.b32.xlu0 %v4329, 1
        %v4522 = vpop.permute.xlu0 %4521
        %4523 = vrot.lane.b32.xlu0 %v4330, 1
        %v4524 = vpop.permute.xlu0 %4523
        %4525 = vrot.lane.b32.xlu0 %v4331, 1
        %v4526 = vpop.permute.xlu0 %4525
        %4527 = vrot.lane.b32.xlu0 %v4332, 1
        %v4528 = vpop.permute.xlu0 %4527
        %4529 = vrot.lane.b32.xlu0 %v4333, 1
        %v4530 = vpop.permute.xlu0 %4529
        %4531 = vrot.lane.b32.xlu0 %v4334, 1
        %v4532 = vpop.permute.xlu0 %4531
        %4533 = vrot.lane.b32.xlu0 %v4335, 1
        %v4534 = vpop.permute.xlu0 %4533
        %4535 = vrot.lane.b32.xlu0 %v4336, 1
        %v4536 = vpop.permute.xlu0 %4535
        %v4537 = vsel %vm1279, %v4506, %v4508
        %v4538 = vsel %vm1279, %v4510, %v4512
        %v4539 = vsel %vm1279, %v4514, %v4516
        %v4540 = vsel %vm1279, %v4518, %v4520
        %v4554 = vsel %vm2970, %v4466, 0
        %v4557 = vsel %vm2970, %v4468, 0
        %v4560 = vsel %vm2970, %v4470, 0
        %v4563 = vsel %vm2970, %v4472, 0
        %v4566 = vsel %vm2970, %v4474, 0
        %v4569 = vsel %vm2970, %v4476, 0
        %v4572 = vsel %vm2970, %v4478, 0
        %v4575 = vsel %vm2970, %v4480, 0
        %4577 = vmatprep.subr.bf16.mxu0 0
        %4578 = vmatpush1.bf16.msra.mxu0 %v4537
        %4579 = vmatprep.subr.bf16.mxu0 0
        %4580 = vmatpush1.bf16.msra.mxu0 %v4538
        %4581 = vmatprep.subr.bf16.mxu0 0
        %4582 = vmatpush1.bf16.msra.mxu0 %v4539
        %4583 = vmatprep.subr.bf16.mxu0 0
        %4584 = vmatpush1.bf16.msra.mxu0 %v4540
        %4585 = vmatprep.subr.bf16.mxu0 0
        %4586 = vmatpush1.bf16.msra.mxu0 %v4522
        %4587 = vmatprep.subr.bf16.mxu0 0
        %4588 = vmatpush1.bf16.msra.mxu0 %v4524
        %4589 = vmatprep.subr.bf16.mxu0 0
        %4590 = vmatpush1.bf16.msra.mxu0 %v4526
        %4591 = vmatprep.subr.bf16.mxu0 0
        %4592 = vmatpush1.bf16.msra.mxu0 %v4528
        %4593 = vmatprep.subr.bf16.mxu0 0
        %4594 = vmatpush1.bf16.msra.mxu0 %v4530
        %4595 = vmatprep.subr.bf16.mxu0 0
        %4596 = vmatpush1.bf16.msra.mxu0 %v4532
        %4597 = vmatprep.subr.bf16.mxu0 0
        %4598 = vmatpush1.bf16.msra.mxu0 %v4534
        %4599 = vmatprep.subr.bf16.mxu0 0
        %4600 = vmatpush1.bf16.msra.mxu0 %v4536
        %4601 = vmatprep.subr.bf16.mxu0 0
        %4602 = vmatpush1.bf16.msra.mxu0 0
        %4603 = vmatprep.subr.bf16.mxu0 0
        %4604 = vmatpush1.bf16.msra.mxu0 0
        %4605 = vmatprep.subr.bf16.mxu0 0
        %4606 = vmatpush1.bf16.msra.mxu0 0
        %4607 = vmatprep.subr.bf16.mxu0 0
        %4608 = vmatpush1.bf16.msra.mxu0 0
        %4609 = vmatprep.mubr.bf16.mxu0 %v4554
        %4610 = vmatmul.mubr.bf16.gmra.mrb[0].mxu0 %v4465
        %v4611 = vpop.f32.mrb[0].mxu0
        %v4612 = vadd.f32 %v4340, %v4611
        %v4613 = vpop.f32.mrb[0].mxu0
        %v4614 = vpop.f32.mrb[0].mxu0
        %v4615 = vadd.f32 %v4345, %v4614
        %v4616 = vpop.f32.mrb[0].mxu0
        %4617 = vmatprep.mubr.bf16.mxu0 %v4557
        %4618 = vmatmul.mubr.bf16.gmra.mrb[0].mxu0 %v4467
        %v4619 = vpop.f32.mrb[0].mxu0
        %v4620 = vadd.f32 %v4350, %v4619
        %v4621 = vpop.f32.mrb[0].mxu0
        %v4622 = vpop.f32.mrb[0].mxu0
        %v4623 = vadd.f32 %v4355, %v4622
        %v4624 = vpop.f32.mrb[0].mxu0
        %4625 = vmatprep.mubr.bf16.mxu0 %v4560
        %4626 = vmatmul.mubr.bf16.gmra.mrb[0].mxu0 %v4469
        %v4627 = vpop.f32.mrb[0].mxu0
        %v4628 = vadd.f32 %v4360, %v4627
        %v4629 = vpop.f32.mrb[0].mxu0
        %v4630 = vpop.f32.mrb[0].mxu0
        %v4631 = vadd.f32 %v4365, %v4630
        %v4632 = vpop.f32.mrb[0].mxu0
        %4633 = vmatprep.mubr.bf16.mxu0 %v4563
        %4634 = vmatmul.mubr.bf16.gmra.mrb[0].mxu0 %v4471
        %v4635 = vpop.f32.mrb[0].mxu0
        %v4636 = vadd.f32 %v4370, %v4635
        %v4637 = vpop.f32.mrb[0].mxu0
        %v4638 = vpop.f32.mrb[0].mxu0
        %v4639 = vadd.f32 %v4375, %v4638
        %v4640 = vpop.f32.mrb[0].mxu0
        %4641 = vmatprep.mubr.bf16.mxu0 %v4566
        %4642 = vmatmul.mubr.bf16.gmra.mrb[0].mxu0 %v4473
        %v4643 = vpop.f32.mrb[0].mxu0
        %v4644 = vadd.f32 %v4380, %v4643
        %v4645 = vpop.f32.mrb[0].mxu0
        %v4646 = vpop.f32.mrb[0].mxu0
        %v4647 = vadd.f32 %v4385, %v4646
        %v4648 = vpop.f32.mrb[0].mxu0
        %4649 = vmatprep.mubr.bf16.mxu0 %v4569
        %4650 = vmatmul.mubr.bf16.gmra.mrb[0].mxu0 %v4475
        %v4651 = vpop.f32.mrb[0].mxu0
        %v4652 = vadd.f32 %v4390, %v4651
        %v4653 = vpop.f32.mrb[0].mxu0
        %v4654 = vpop.f32.mrb[0].mxu0
        %v4655 = vadd.f32 %v4395, %v4654
        %v4656 = vpop.f32.mrb[0].mxu0
        %4657 = vmatprep.mubr.bf16.mxu0 %v4572
        %4658 = vmatmul.mubr.bf16.gmra.mrb[0].mxu0 %v4477
        %v4659 = vpop.f32.mrb[0].mxu0
        %v4660 = vadd.f32 %v4400, %v4659
        %v4661 = vpop.f32.mrb[0].mxu0
        %v4662 = vpop.f32.mrb[0].mxu0
        %v4663 = vadd.f32 %v4405, %v4662
        %v4664 = vpop.f32.mrb[0].mxu0
        %4665 = vmatprep.mubr.bf16.mxu0 %v4575
        %4666 = vmatmul.mubr.bf16.gmra.mrb[0].mxu0 %v4479
        %v4667 = vpop.f32.mrb[0].mxu0
        %v4668 = vadd.f32 %v4410, %v4667
        %v4669 = vpop.f32.mrb[0].mxu0
        %v4670 = vpop.f32.mrb[0].mxu0
        %v4671 = vadd.f32 %v4415, %v4670
        %v4672 = vpop.f32.mrb[0].mxu0
        %4673 = vdwg.mxu0
        %v4674 = vxor.u32 %v4612, 2147483648
        %v4675 = vxor.u32 %v4615, 2147483648
        %v4676 = vxor.u32 %v4620, 2147483648
        %v4677 = vxor.u32 %v4623, 2147483648
        %v4678 = vxor.u32 %v4628, 2147483648
        %v4679 = vxor.u32 %v4631, 2147483648
        %v4680 = vxor.u32 %v4636, 2147483648
        %v4681 = vxor.u32 %v4639, 2147483648
        %v4682 = vmul.f32 %v4674, 1.442695
        %v4683 = vpow.pop %v4682
        %v4684 = vmul.f32 %v4675, 1.442695
        %v4685 = vpow.pop %v4684
        %v4686 = vmul.f32 %v4676, 1.442695
        %v4687 = vpow.pop %v4686
        %v4688 = vmul.f32 %v4677, 1.442695
        %v4689 = vpow.pop %v4688
        %v4690 = vmul.f32 %v4678, 1.442695
        %v4691 = vpow.pop %v4690
        %v4692 = vmul.f32 %v4679, 1.442695
        %v4693 = vpow.pop %v4692
        %v4694 = vmul.f32 %v4680, 1.442695
        %v4695 = vpow.pop %v4694
        %v4696 = vmul.f32 %v4681, 1.442695
        %v4697 = vpow.pop %v4696
        %v4698 = vadd.f32 %v4683, 1.0
        %v4699 = vadd.f32 %v4685, 1.0
        %v4700 = vadd.f32 %v4687, 1.0
        %v4701 = vadd.f32 %v4689, 1.0
        %v4702 = vadd.f32 %v4691, 1.0
        %v4703 = vadd.f32 %v4693, 1.0
        %v4704 = vadd.f32 %v4695, 1.0
        %v4705 = vadd.f32 %v4697, 1.0
        %v4706 = vrcp.pop %v4698
        %v4707 = vmul.f32 1.0, %v4706
        %v4708 = vrcp.pop %v4699
        %v4709 = vmul.f32 1.0, %v4708
        %v4710 = vrcp.pop %v4700
        %v4711 = vmul.f32 1.0, %v4710
        %v4712 = vrcp.pop %v4701
        %v4713 = vmul.f32 1.0, %v4712
        %v4714 = vrcp.pop %v4702
        %v4715 = vmul.f32 1.0, %v4714
        %v4716 = vrcp.pop %v4703
        %v4717 = vmul.f32 1.0, %v4716
        %v4718 = vrcp.pop %v4704
        %v4719 = vmul.f32 1.0, %v4718
        %v4720 = vrcp.pop %v4705
        %v4721 = vmul.f32 1.0, %v4720
        %v4722 = vsub.f32 %v4644, %v4250
        %v4723 = vsub.f32 %v4647, %v4252
        %v4724 = vsub.f32 %v4652, %v4254
        %v4725 = vsub.f32 %v4655, %v4256
        %v4726 = vsub.f32 %v4660, %v4258
        %v4727 = vsub.f32 %v4663, %v4260
        %v4728 = vsub.f32 %v4668, %v4262
        %v4729 = vsub.f32 %v4671, %v4264
        %v4730 = vmul.f32 %v4707, %v4722
        %v4731 = vmul.f32 %v4709, %v4723
        %v4732 = vmul.f32 %v4711, %v4724
        %v4733 = vmul.f32 %v4713, %v4725
        %v4734 = vmul.f32 %v4715, %v4726
        %v4735 = vmul.f32 %v4717, %v4727
        %v4736 = vmul.f32 %v4719, %v4728
        %v4737 = vmul.f32 %v4721, %v4729
        %v4738 = vadd.f32 %v4250, %v4730
        %v4739 = vadd.f32 %v4252, %v4731
        %v4740 = vadd.f32 %v4254, %v4732
        %v4741 = vadd.f32 %v4256, %v4733
        %v4742 = vadd.f32 %v4258, %v4734
        %v4743 = vadd.f32 %v4260, %v4735
        %v4744 = vadd.f32 %v4262, %v4736
        %v4745 = vadd.f32 %v4264, %v4737
        %4746 = vst.msk [vmem:[#allocation2 + $0x8] sm:$0xff] %vm2970, %v4738
        %4747 = vst.msk [vmem:[#allocation2 + $0x18] sm:$0xff] %vm2970, %v4739
        %4748 = vst.msk [vmem:[#allocation2 + $0x28] sm:$0xff] %vm2970, %v4740
        %4749 = vst.msk [vmem:[#allocation2 + $0x38] sm:$0xff] %vm2970, %v4741
        %4750 = vst.msk [vmem:[#allocation2 + $0x48] sm:$0xff] %vm2970, %v4742
        %4751 = vst.msk [vmem:[#allocation2 + $0x58] sm:$0xff] %vm2970, %v4743
        %4752 = vst.msk [vmem:[#allocation2 + $0x68] sm:$0xff] %vm2970, %v4744
        %4753 = vst.msk [vmem:[#allocation2 + $0x78] sm:$0xff] %vm2970, %v4745
        %v4754 = vld [vmem:[%s51] sm:$0xf]
        %v4755 = vld [vmem:[%s51 + $0x4] sm:$0xf]
        %v4756 = vld [vmem:[%s51 + $0x8] sm:$0xf]
        %v4757 = vld [vmem:[%s51 + $0xc] sm:$0xf]
        %v4758 = vld [vmem:[%s51 + $0x10] sm:$0xf]
        %v4759 = vld [vmem:[%s51 + $0x14] sm:$0xf]
        %v4760 = vld [vmem:[%s51 + $0x18] sm:$0xf]
        %v4761 = vld [vmem:[%s51 + $0x1c] sm:$0xf]
        %v4762 = vld [vmem:[%s53] sm:$0xff]
        %v4763 = vld [vmem:[%s53 + $0x8] sm:$0xff]
        %v4764 = vld [vmem:[%s53 + $0x10] sm:$0xff]
        %v4765 = vld [vmem:[%s53 + $0x18] sm:$0xff]
        %v4766 = vld [vmem:[%s53 + $0x20] sm:$0xff]
        %v4767 = vld [vmem:[%s53 + $0x28] sm:$0xff]
        %v4768 = vld [vmem:[%s53 + $0x30] sm:$0xff]
        %v4769 = vld [vmem:[%s53 + $0x38] sm:$0xff]
        %v4770 = vld [vmem:[#allocation2 + $0x8] sm:$0xff]
        %v4771 = vld [vmem:[#allocation2 + $0x18] sm:$0xff]
        %v4772 = vld [vmem:[#allocation2 + $0x28] sm:$0xff]
        %v4773 = vld [vmem:[#allocation2 + $0x38] sm:$0xff]
        %v4774 = vld [vmem:[#allocation2 + $0x48] sm:$0xff]
        %v4775 = vld [vmem:[#allocation2 + $0x58] sm:$0xff]
        %v4776 = vld [vmem:[#allocation2 + $0x68] sm:$0xff]
        %v4777 = vld [vmem:[#allocation2 + $0x78] sm:$0xff]
        %v4778 = vpack.c.bf16 %v4771, %v4770
        %v4779 = vpack.c.bf16 %v4773, %v4772
        %v4780 = vpack.c.bf16 %v4775, %v4774
        %v4781 = vpack.c.bf16 %v4777, %v4776
        %4783 = vset.pattern.permute.xlu0 0
        %4784 = vperm.xlu0 %4783, %v4762
        %v4785 = vpop.permute.xlu0 %4784
        %4788 = vset.pattern.permute.xlu0 0
        %4789 = vperm.xlu0 %4788, %v4763
        %v4790 = vpop.permute.xlu0 %4789
        %4793 = vset.pattern.permute.xlu0 0
        %4794 = vperm.xlu0 %4793, %v4764
        %v4795 = vpop.permute.xlu0 %4794
        %4798 = vset.pattern.permute.xlu0 0
        %4799 = vperm.xlu0 %4798, %v4765
        %v4800 = vpop.permute.xlu0 %4799
        %4803 = vset.pattern.permute.xlu0 0
        %4804 = vperm.xlu0 %4803, %v4766
        %v4805 = vpop.permute.xlu0 %4804
        %4808 = vset.pattern.permute.xlu0 0
        %4809 = vperm.xlu0 %4808, %v4767
        %v4810 = vpop.permute.xlu0 %4809
        %4813 = vset.pattern.permute.xlu0 0
        %4814 = vperm.xlu0 %4813, %v4768
        %v4815 = vpop.permute.xlu0 %4814
        %4818 = vset.pattern.permute.xlu0 0
        %4819 = vperm.xlu0 %4818, %v4769
        %v4820 = vpop.permute.xlu0 %4819
        %v4830 = vunpack.c.l.b16 %v4754
        %v4831 = vunpack.c.l.b16 %v4755
        %v4832 = vunpack.c.l.b16 %v4756
        %v4833 = vunpack.c.l.b16 %v4757
        %v4834 = vunpack.c.l.b16 %v4758
        %v4835 = vunpack.c.l.b16 %v4759
        %v4836 = vunpack.c.l.b16 %v4760
        %v4837 = vunpack.c.l.b16 %v4761
        %v4838 = vpack.c.b16 %v4831, %v4830
        %v4839 = vpack.c.b16 %v4833, %v4832
        %v4840 = vpack.c.b16 %v4835, %v4834
        %v4841 = vpack.c.b16 %v4837, %v4836
        %v4843 = vsel %vm2970, %v4838, 0
        %v4846 = vsel %vm2970, %v4839, 0
        %v4849 = vsel %vm2970, %v4840, 0
        %v4852 = vsel %vm2970, %v4841, 0
        %4854 = vmatprep.subr.bf16.mxu0 0
        %4855 = vmatpush1.bf16.msra.mxu0 %v4778
        %4856 = vmatprep.subr.bf16.mxu0 0
        %4857 = vmatpush1.bf16.msra.mxu0 %v4779
        %4858 = vmatprep.subr.bf16.mxu0 0
        %4859 = vmatpush1.bf16.msra.mxu0 %v4780
        %4860 = vmatprep.subr.bf16.mxu0 0
        %4861 = vmatpush1.bf16.msra.mxu0 %v4781
        %4862 = vmatprep.subr.bf16.mxu0 0
        %4863 = vmatpush1.bf16.msra.mxu0 0
        %4864 = vmatprep.subr.bf16.mxu0 0
        %4865 = vmatpush1.bf16.msra.mxu0 0
        %4866 = vmatprep.subr.bf16.mxu0 0
        %4867 = vmatpush1.bf16.msra.mxu0 0
        %4868 = vmatprep.subr.bf16.mxu0 0
        %4869 = vmatpush1.bf16.msra.mxu0 0
        %4870 = vmatprep.subr.bf16.mxu0 0
        %4871 = vmatpush1.bf16.msra.mxu0 0
        %4872 = vmatprep.subr.bf16.mxu0 0
        %4873 = vmatpush1.bf16.msra.mxu0 0
        %4874 = vmatprep.subr.bf16.mxu0 0
        %4875 = vmatpush1.bf16.msra.mxu0 0
        %4876 = vmatprep.subr.bf16.mxu0 0
        %4877 = vmatpush1.bf16.msra.mxu0 0
        %4878 = vmatprep.subr.bf16.mxu0 0
        %4879 = vmatpush1.bf16.msra.mxu0 0
        %4880 = vmatprep.subr.bf16.mxu0 0
        %4881 = vmatpush1.bf16.msra.mxu0 0
        %4882 = vmatprep.subr.bf16.mxu0 0
        %4883 = vmatpush1.bf16.msra.mxu0 0
        %4884 = vmatprep.subr.bf16.mxu0 0
        %4885 = vmatpush1.bf16.msra.mxu0 0
        %4886 = vmatprep.mubr.bf16.mxu0 0
        %4887 = vmatmul.mubr.bf16.gmra.mrb[0].mxu0 %v4843
        %v4888 = vpop.f32.mrb[0].mxu0
        %v4889 = vadd.f32 %v4785, %v4888
        %v4890 = vpop.f32.mrb[0].mxu0
        %v4891 = vpop.f32.mrb[0].mxu0
        %v4892 = vadd.f32 %v4790, %v4891
        %v4893 = vpop.f32.mrb[0].mxu0
        %4894 = vmatprep.mubr.bf16.mxu0 0
        %4895 = vmatmul.mubr.bf16.gmra.mrb[0].mxu0 %v4846
        %v4896 = vpop.f32.mrb[0].mxu0
        %v4897 = vadd.f32 %v4795, %v4896
        %v4898 = vpop.f32.mrb[0].mxu0
        %v4899 = vpop.f32.mrb[0].mxu0
        %v4900 = vadd.f32 %v4800, %v4899
        %v4901 = vpop.f32.mrb[0].mxu0
        %4902 = vmatprep.mubr.bf16.mxu0 0
        %4903 = vmatmul.mubr.bf16.gmra.mrb[0].mxu0 %v4849
        %v4904 = vpop.f32.mrb[0].mxu0
        %v4905 = vadd.f32 %v4805, %v4904
        %v4906 = vpop.f32.mrb[0].mxu0
        %v4907 = vpop.f32.mrb[0].mxu0
        %v4908 = vadd.f32 %v4810, %v4907
        %v4909 = vpop.f32.mrb[0].mxu0
        %4910 = vmatprep.mubr.bf16.mxu0 0
        %4911 = vmatmul.mubr.bf16.gmra.mrb[0].mxu0 %v4852
        %v4912 = vpop.f32.mrb[0].mxu0
        %v4913 = vadd.f32 %v4815, %v4912
        %v4914 = vpop.f32.mrb[0].mxu0
        %v4915 = vpop.f32.mrb[0].mxu0
        %v4916 = vadd.f32 %v4820, %v4915
        %v4917 = vpop.f32.mrb[0].mxu0
        %4918 = vdwg.mxu0
        %4919 = vst.msk [vmem:[#allocation3 + $0x8] sm:$0xff] %vm2970, %v4889
        %4920 = vst.msk [vmem:[#allocation3 + $0x18] sm:$0xff] %vm2970, %v4892
        %4921 = vst.msk [vmem:[#allocation3 + $0x28] sm:$0xff] %vm2970, %v4897
        %4922 = vst.msk [vmem:[#allocation3 + $0x38] sm:$0xff] %vm2970, %v4900
        %4923 = vst.msk [vmem:[#allocation3 + $0x48] sm:$0xff] %vm2970, %v4905
        %4924 = vst.msk [vmem:[#allocation3 + $0x58] sm:$0xff] %vm2970, %v4908
        %4925 = vst.msk [vmem:[#allocation3 + $0x68] sm:$0xff] %vm2970, %v4913
        %4926 = vst.msk [vmem:[#allocation3 + $0x78] sm:$0xff] %vm2970, %v4916
        %v4927 = vld [vmem:[%s55] sm:$0xf]
        %v4928 = vld [vmem:[%s55 + $0x4] sm:$0xf]
        %v4929 = vld [vmem:[%s55 + $0x8] sm:$0xf]
        %v4930 = vld [vmem:[%s55 + $0xc] sm:$0xf]
        %v4931 = vld [vmem:[%s55 + $0x10] sm:$0xf]
        %v4932 = vld [vmem:[%s55 + $0x14] sm:$0xf]
        %v4933 = vld [vmem:[%s55 + $0x18] sm:$0xf]
        %v4934 = vld [vmem:[%s55 + $0x1c] sm:$0xf]
        %v4935 = vld [vmem:[%s55 + $0x20] sm:$0xf]
        %v4936 = vld [vmem:[%s55 + $0x24] sm:$0xf]
        %v4937 = vld [vmem:[%s55 + $0x28] sm:$0xf]
        %v4938 = vld [vmem:[%s55 + $0x2c] sm:$0xf]
        %v4939 = vld [vmem:[%s55 + $0x30] sm:$0xf]
        %v4940 = vld [vmem:[%s55 + $0x34] sm:$0xf]
        %v4941 = vld [vmem:[%s55 + $0x38] sm:$0xf]
        %v4942 = vld [vmem:[%s55 + $0x3c] sm:$0xf]
        %v4943 = vld [vmem:[%s57] sm:$0xff]
        %v4944 = vld [vmem:[%s57 + $0x8] sm:$0xff]
        %v4945 = vld [vmem:[%s57 + $0x10] sm:$0xff]
        %v4946 = vld [vmem:[%s57 + $0x18] sm:$0xff]
        %v4947 = vld [vmem:[%s57 + $0x20] sm:$0xff]
        %v4948 = vld [vmem:[%s57 + $0x28] sm:$0xff]
        %v4949 = vld [vmem:[%s57 + $0x30] sm:$0xff]
        %v4950 = vld [vmem:[%s57 + $0x38] sm:$0xff]
        %v4951 = vld [vmem:[%s57 + $0x40] sm:$0xff]
        %v4952 = vld [vmem:[%s57 + $0x48] sm:$0xff]
        %v4953 = vld [vmem:[%s57 + $0x50] sm:$0xff]
        %v4954 = vld [vmem:[%s57 + $0x58] sm:$0xff]
        %v4955 = vld [vmem:[%s57 + $0x60] sm:$0xff]
        %v4956 = vld [vmem:[%s57 + $0x68] sm:$0xff]
        %v4957 = vld [vmem:[%s57 + $0x70] sm:$0xff]
        %v4958 = vld [vmem:[%s57 + $0x78] sm:$0xff]
        %v4959 = vld [vmem:[#allocation3 + $0x8] sm:$0xff]
        %v4960 = vld [vmem:[#allocation3 + $0x18] sm:$0xff]
        %v4961 = vld [vmem:[#allocation3 + $0x28] sm:$0xff]
        %v4962 = vld [vmem:[#allocation3 + $0x38] sm:$0xff]
        %v4963 = vld [vmem:[#allocation3 + $0x48] sm:$0xff]
        %v4964 = vld [vmem:[#allocation3 + $0x58] sm:$0xff]
        %v4965 = vld [vmem:[#allocation3 + $0x68] sm:$0xff]
        %v4966 = vld [vmem:[#allocation3 + $0x78] sm:$0xff]
        %v4967 = vpack.c.bf16 %v4960, %v4959
        %v4968 = vpack.c.bf16 %v4962, %v4961
        %v4969 = vpack.c.bf16 %v4964, %v4963
        %v4970 = vpack.c.bf16 %v4966, %v4965
        %4972 = vset.pattern.permute.xlu0 0
        %4973 = vperm.xlu0 %4972, %v4943
        %v4974 = vpop.permute.xlu0 %4973
        %4977 = vset.pattern.permute.xlu0 0
        %4978 = vperm.xlu0 %4977, %v4944
        %v4979 = vpop.permute.xlu0 %4978
        %4982 = vset.pattern.permute.xlu0 0
        %4983 = vperm.xlu0 %4982, %v4945
        %v4984 = vpop.permute.xlu0 %4983
        %4987 = vset.pattern.permute.xlu0 0
        %4988 = vperm.xlu0 %4987, %v4946
        %v4989 = vpop.permute.xlu0 %4988
        %4992 = vset.pattern.permute.xlu0 0
        %4993 = vperm.xlu0 %4992, %v4947
        %v4994 = vpop.permute.xlu0 %4993
        %4997 = vset.pattern.permute.xlu0 0
        %4998 = vperm.xlu0 %4997, %v4948
        %v4999 = vpop.permute.xlu0 %4998
        %5002 = vset.pattern.permute.xlu0 0
        %5003 = vperm.xlu0 %5002, %v4949
        %v5004 = vpop.permute.xlu0 %5003
        %5007 = vset.pattern.permute.xlu0 0
        %5008 = vperm.xlu0 %5007, %v4950
        %v5009 = vpop.permute.xlu0 %5008
        %5012 = vset.pattern.permute.xlu0 0
        %5013 = vperm.xlu0 %5012, %v4951
        %v5014 = vpop.permute.xlu0 %5013
        %5017 = vset.pattern.permute.xlu0 0
        %5018 = vperm.xlu0 %5017, %v4952
        %v5019 = vpop.permute.xlu0 %5018
        %5022 = vset.pattern.permute.xlu0 0
        %5023 = vperm.xlu0 %5022, %v4953
        %v5024 = vpop.permute.xlu0 %5023
        %5027 = vset.pattern.permute.xlu0 0
        %5028 = vperm.xlu0 %5027, %v4954
        %v5029 = vpop.permute.xlu0 %5028
        %5032 = vset.pattern.permute.xlu0 0
        %5033 = vperm.xlu0 %5032, %v4955
        %v5034 = vpop.permute.xlu0 %5033
        %5037 = vset.pattern.permute.xlu0 0
        %5038 = vperm.xlu0 %5037, %v4956
        %v5039 = vpop.permute.xlu0 %5038
        %5042 = vset.pattern.permute.xlu0 0
        %5043 = vperm.xlu0 %5042, %v4957
        %v5044 = vpop.permute.xlu0 %5043
        %5047 = vset.pattern.permute.xlu0 0
        %5048 = vperm.xlu0 %5047, %v4958
        %v5049 = vpop.permute.xlu0 %5048
        %v5067 = vunpack.c.l.b16 %v4927
        %v5068 = vunpack.c.l.b16 %v4928
        %v5069 = vunpack.c.l.b16 %v4929
        %v5070 = vunpack.c.l.b16 %v4930
        %v5071 = vunpack.c.l.b16 %v4931
        %v5072 = vunpack.c.l.b16 %v4932
        %v5073 = vunpack.c.l.b16 %v4933
        %v5074 = vunpack.c.l.b16 %v4934
        %v5075 = vunpack.c.l.b16 %v4935
        %v5076 = vunpack.c.l.b16 %v4936
        %v5077 = vunpack.c.l.b16 %v4937
        %v5078 = vunpack.c.l.b16 %v4938
        %v5079 = vunpack.c.l.b16 %v4939
        %v5080 = vunpack.c.l.b16 %v4940
        %v5081 = vunpack.c.l.b16 %v4941
        %v5082 = vunpack.c.l.b16 %v4942
        %v5083 = vpack.c.b16 %v5068, %v5067
        %v5084 = vpack.c.b16 %v5070, %v5069
        %v5085 = vpack.c.b16 %v5072, %v5071
        %v5086 = vpack.c.b16 %v5074, %v5073
        %v5087 = vpack.c.b16 %v5076, %v5075
        %v5088 = vpack.c.b16 %v5078, %v5077
        %v5089 = vpack.c.b16 %v5080, %v5079
        %v5090 = vpack.c.b16 %v5082, %v5081
        %v5092 = vsel %vm2970, %v5083, 0
        %v5095 = vsel %vm2970, %v5084, 0
        %v5098 = vsel %vm2970, %v5085, 0
        %v5101 = vsel %vm2970, %v5086, 0
        %v5104 = vsel %vm2970, %v5087, 0
        %v5107 = vsel %vm2970, %v5088, 0
        %v5110 = vsel %vm2970, %v5089, 0
        %v5113 = vsel %vm2970, %v5090, 0
        %5115 = vmatprep.subr.bf16.mxu0 0
        %5116 = vmatpush1.bf16.msra.mxu0 %v4967
        %5117 = vmatprep.subr.bf16.mxu0 0
        %5118 = vmatpush1.bf16.msra.mxu0 %v4968
        %5119 = vmatprep.subr.bf16.mxu0 0
        %5120 = vmatpush1.bf16.msra.mxu0 %v4969
        %5121 = vmatprep.subr.bf16.mxu0 0
        %5122 = vmatpush1.bf16.msra.mxu0 %v4970
        %5123 = vmatprep.subr.bf16.mxu0 0
        %5124 = vmatpush1.bf16.msra.mxu0 0
        %5125 = vmatprep.subr.bf16.mxu0 0
        %5126 = vmatpush1.bf16.msra.mxu0 0
        %5127 = vmatprep.subr.bf16.mxu0 0
        %5128 = vmatpush1.bf16.msra.mxu0 0
        %5129 = vmatprep.subr.bf16.mxu0 0
        %5130 = vmatpush1.bf16.msra.mxu0 0
        %5131 = vmatprep.subr.bf16.mxu0 0
        %5132 = vmatpush1.bf16.msra.mxu0 0
        %5133 = vmatprep.subr.bf16.mxu0 0
        %5134 = vmatpush1.bf16.msra.mxu0 0
        %5135 = vmatprep.subr.bf16.mxu0 0
        %5136 = vmatpush1.bf16.msra.mxu0 0
        %5137 = vmatprep.subr.bf16.mxu0 0
        %5138 = vmatpush1.bf16.msra.mxu0 0
        %5139 = vmatprep.subr.bf16.mxu0 0
        %5140 = vmatpush1.bf16.msra.mxu0 0
        %5141 = vmatprep.subr.bf16.mxu0 0
        %5142 = vmatpush1.bf16.msra.mxu0 0
        %5143 = vmatprep.subr.bf16.mxu0 0
        %5144 = vmatpush1.bf16.msra.mxu0 0
        %5145 = vmatprep.subr.bf16.mxu0 0
        %5146 = vmatpush1.bf16.msra.mxu0 0
        %5147 = vmatprep.mubr.bf16.mxu0 0
        %5148 = vmatmul.mubr.bf16.gmra.mrb[0].mxu0 %v5092
        %v5149 = vpop.f32.mrb[0].mxu0
        %v5150 = vadd.f32 %v4974, %v5149
        %v5151 = vpop.f32.mrb[0].mxu0
        %v5152 = vpop.f32.mrb[0].mxu0
        %v5153 = vadd.f32 %v4979, %v5152
        %v5154 = vpop.f32.mrb[0].mxu0
        %5155 = vmatprep.mubr.bf16.mxu0 0
        %5156 = vmatmul.mubr.bf16.gmra.mrb[0].mxu0 %v5095
        %v5157 = vpop.f32.mrb[0].mxu0
        %v5158 = vadd.f32 %v4984, %v5157
        %v5159 = vpop.f32.mrb[0].mxu0
        %v5160 = vpop.f32.mrb[0].mxu0
        %v5161 = vadd.f32 %v4989, %v5160
        %v5162 = vpop.f32.mrb[0].mxu0
        %5163 = vmatprep.mubr.bf16.mxu0 0
        %5164 = vmatmul.mubr.bf16.gmra.mrb[0].mxu0 %v5098
        %v5165 = vpop.f32.mrb[0].mxu0
        %v5166 = vadd.f32 %v4994, %v5165
        %v5167 = vpop.f32.mrb[0].mxu0
        %v5168 = vpop.f32.mrb[0].mxu0
        %v5169 = vadd.f32 %v4999, %v5168
        %v5170 = vpop.f32.mrb[0].mxu0
        %5171 = vmatprep.mubr.bf16.mxu0 0
        %5172 = vmatmul.mubr.bf16.gmra.mrb[0].mxu0 %v5101
        %v5173 = vpop.f32.mrb[0].mxu0
        %v5174 = vadd.f32 %v5004, %v5173
        %v5175 = vpop.f32.mrb[0].mxu0
        %v5176 = vpop.f32.mrb[0].mxu0
        %v5177 = vadd.f32 %v5009, %v5176
        %v5178 = vpop.f32.mrb[0].mxu0
        %5179 = vmatprep.mubr.bf16.mxu0 0
        %5180 = vmatmul.mubr.bf16.gmra.mrb[0].mxu0 %v5104
        %v5181 = vpop.f32.mrb[0].mxu0
        %v5182 = vadd.f32 %v5014, %v5181
        %v5183 = vpop.f32.mrb[0].mxu0
        %v5184 = vpop.f32.mrb[0].mxu0
        %v5185 = vadd.f32 %v5019, %v5184
        %v5186 = vpop.f32.mrb[0].mxu0
        %5187 = vmatprep.mubr.bf16.mxu0 0
        %5188 = vmatmul.mubr.bf16.gmra.mrb[0].mxu0 %v5107
        %v5189 = vpop.f32.mrb[0].mxu0
        %v5190 = vadd.f32 %v5024, %v5189
        %v5191 = vpop.f32.mrb[0].mxu0
        %v5192 = vpop.f32.mrb[0].mxu0
        %v5193 = vadd.f32 %v5029, %v5192
        %v5194 = vpop.f32.mrb[0].mxu0
        %5195 = vmatprep.mubr.bf16.mxu0 0
        %5196 = vmatmul.mubr.bf16.gmra.mrb[0].mxu0 %v5110
        %v5197 = vpop.f32.mrb[0].mxu0
        %v5198 = vadd.f32 %v5034, %v5197
        %v5199 = vpop.f32.mrb[0].mxu0
        %v5200 = vpop.f32.mrb[0].mxu0
        %v5201 = vadd.f32 %v5039, %v5200
        %v5202 = vpop.f32.mrb[0].mxu0
        %5203 = vmatprep.mubr.bf16.mxu0 0
        %5204 = vmatmul.mubr.bf16.gmra.mrb[0].mxu0 %v5113
        %v5205 = vpop.f32.mrb[0].mxu0
        %v5206 = vadd.f32 %v5044, %v5205
        %v5207 = vpop.f32.mrb[0].mxu0
        %v5208 = vpop.f32.mrb[0].mxu0
        %v5209 = vadd.f32 %v5049, %v5208
        %v5210 = vpop.f32.mrb[0].mxu0
        %5211 = vdwg.mxu0
        %v5212 = vxor.u32 %v5150, 2147483648
        %v5213 = vxor.u32 %v5153, 2147483648
        %v5214 = vxor.u32 %v5158, 2147483648
        %v5215 = vxor.u32 %v5161, 2147483648
        %v5216 = vxor.u32 %v5166, 2147483648
        %v5217 = vxor.u32 %v5169, 2147483648
        %v5218 = vxor.u32 %v5174, 2147483648
        %v5219 = vxor.u32 %v5177, 2147483648
        %v5220 = vmul.f32 %v5212, 1.442695
        %v5221 = vpow.pop %v5220
        %v5222 = vmul.f32 %v5213, 1.442695
        %v5223 = vpow.pop %v5222
        %v5224 = vmul.f32 %v5214, 1.442695
        %v5225 = vpow.pop %v5224
        %v5226 = vmul.f32 %v5215, 1.442695
        %v5227 = vpow.pop %v5226
        %v5228 = vmul.f32 %v5216, 1.442695
        %v5229 = vpow.pop %v5228
        %v5230 = vmul.f32 %v5217, 1.442695
        %v5231 = vpow.pop %v5230
        %v5232 = vmul.f32 %v5218, 1.442695
        %v5233 = vpow.pop %v5232
        %v5234 = vmul.f32 %v5219, 1.442695
        %v5235 = vpow.pop %v5234
        %v5236 = vadd.f32 %v5221, 1.0
        %v5237 = vadd.f32 %v5223, 1.0
        %v5238 = vadd.f32 %v5225, 1.0
        %v5239 = vadd.f32 %v5227, 1.0
        %v5240 = vadd.f32 %v5229, 1.0
        %v5241 = vadd.f32 %v5231, 1.0
        %v5242 = vadd.f32 %v5233, 1.0
        %v5243 = vadd.f32 %v5235, 1.0
        %v5244 = vrcp.pop %v5236
        %v5245 = vmul.f32 1.0, %v5244
        %v5246 = vrcp.pop %v5237
        %v5247 = vmul.f32 1.0, %v5246
        %v5248 = vrcp.pop %v5238
        %v5249 = vmul.f32 1.0, %v5248
        %v5250 = vrcp.pop %v5239
        %v5251 = vmul.f32 1.0, %v5250
        %v5252 = vrcp.pop %v5240
        %v5253 = vmul.f32 1.0, %v5252
        %v5254 = vrcp.pop %v5241
        %v5255 = vmul.f32 1.0, %v5254
        %v5256 = vrcp.pop %v5242
        %v5257 = vmul.f32 1.0, %v5256
        %v5258 = vrcp.pop %v5243
        %v5259 = vmul.f32 1.0, %v5258
        %v5260 = vsub.f32 %v5182, %v4959
        %v5261 = vsub.f32 %v5185, %v4960
        %v5262 = vsub.f32 %v5190, %v4961
        %v5263 = vsub.f32 %v5193, %v4962
        %v5264 = vsub.f32 %v5198, %v4963
        %v5265 = vsub.f32 %v5201, %v4964
        %v5266 = vsub.f32 %v5206, %v4965
        %v5267 = vsub.f32 %v5209, %v4966
        %v5268 = vmul.f32 %v5245, %v5260
        %v5269 = vmul.f32 %v5247, %v5261
        %v5270 = vmul.f32 %v5249, %v5262
        %v5271 = vmul.f32 %v5251, %v5263
        %v5272 = vmul.f32 %v5253, %v5264
        %v5273 = vmul.f32 %v5255, %v5265
        %v5274 = vmul.f32 %v5257, %v5266
        %v5275 = vmul.f32 %v5259, %v5267
        %v5276 = vadd.f32 %v4959, %v5268
        %v5277 = vadd.f32 %v4960, %v5269
        %v5278 = vadd.f32 %v4961, %v5270
        %v5279 = vadd.f32 %v4962, %v5271
        %v5280 = vadd.f32 %v4963, %v5272
        %v5281 = vadd.f32 %v4964, %v5273
        %v5282 = vadd.f32 %v4965, %v5274
        %v5283 = vadd.f32 %v4966, %v5275
        %5284 = vst.msk [vmem:[#allocation2 + $0x8] sm:$0xff] %vm2970, %v5276
        %5285 = vst.msk [vmem:[#allocation2 + $0x18] sm:$0xff] %vm2970, %v5277
        %5286 = vst.msk [vmem:[#allocation2 + $0x28] sm:$0xff] %vm2970, %v5278
        %5287 = vst.msk [vmem:[#allocation2 + $0x38] sm:$0xff] %vm2970, %v5279
        %5288 = vst.msk [vmem:[#allocation2 + $0x48] sm:$0xff] %vm2970, %v5280
        %5289 = vst.msk [vmem:[#allocation2 + $0x58] sm:$0xff] %vm2970, %v5281
        %5290 = vst.msk [vmem:[#allocation2 + $0x68] sm:$0xff] %vm2970, %v5282
        %5291 = vst.msk [vmem:[#allocation2 + $0x78] sm:$0xff] %vm2970, %v5283
        %v5292 = vld [vmem:[%s59] sm:$0xf]
        %v5293 = vld [vmem:[%s59 + $0x4] sm:$0xf]
        %v5294 = vld [vmem:[%s59 + $0x8] sm:$0xf]
        %v5295 = vld [vmem:[%s59 + $0xc] sm:$0xf]
        %v5296 = vld [vmem:[%s59 + $0x10] sm:$0xf]
        %v5297 = vld [vmem:[%s59 + $0x14] sm:$0xf]
        %v5298 = vld [vmem:[%s59 + $0x18] sm:$0xf]
        %v5299 = vld [vmem:[%s59 + $0x1c] sm:$0xf]
        %v5300 = vld [vmem:[%s61] sm:$0xff]
        %v5301 = vld [vmem:[%s61 + $0x8] sm:$0xff]
        %v5302 = vld [vmem:[%s61 + $0x10] sm:$0xff]
        %v5303 = vld [vmem:[%s61 + $0x18] sm:$0xff]
        %v5304 = vld [vmem:[%s61 + $0x20] sm:$0xff]
        %v5305 = vld [vmem:[%s61 + $0x28] sm:$0xff]
        %v5306 = vld [vmem:[%s61 + $0x30] sm:$0xff]
        %v5307 = vld [vmem:[%s61 + $0x38] sm:$0xff]
        %v5308 = vld [vmem:[#allocation2 + $0x8] sm:$0xff]
        %v5309 = vld [vmem:[#allocation2 + $0x18] sm:$0xff]
        %v5310 = vld [vmem:[#allocation2 + $0x28] sm:$0xff]
        %v5311 = vld [vmem:[#allocation2 + $0x38] sm:$0xff]
        %v5312 = vld [vmem:[#allocation2 + $0x48] sm:$0xff]
        %v5313 = vld [vmem:[#allocation2 + $0x58] sm:$0xff]
        %v5314 = vld [vmem:[#allocation2 + $0x68] sm:$0xff]
        %v5315 = vld [vmem:[#allocation2 + $0x78] sm:$0xff]
        %v5316 = vpack.c.bf16 %v5309, %v5308
        %v5317 = vpack.c.bf16 %v5311, %v5310
        %v5318 = vpack.c.bf16 %v5313, %v5312
        %v5319 = vpack.c.bf16 %v5315, %v5314
        %5321 = vset.pattern.permute.xlu0 0
        %5322 = vperm.xlu0 %5321, %v5300
        %v5323 = vpop.permute.xlu0 %5322
        %5326 = vset.pattern.permute.xlu0 0
        %5327 = vperm.xlu0 %5326, %v5301
        %v5328 = vpop.permute.xlu0 %5327
        %5331 = vset.pattern.permute.xlu0 0
        %5332 = vperm.xlu0 %5331, %v5302
        %v5333 = vpop.permute.xlu0 %5332
        %5336 = vset.pattern.permute.xlu0 0
        %5337 = vperm.xlu0 %5336, %v5303
        %v5338 = vpop.permute.xlu0 %5337
        %5341 = vset.pattern.permute.xlu0 0
        %5342 = vperm.xlu0 %5341, %v5304
        %v5343 = vpop.permute.xlu0 %5342
        %5346 = vset.pattern.permute.xlu0 0
        %5347 = vperm.xlu0 %5346, %v5305
        %v5348 = vpop.permute.xlu0 %5347
        %5351 = vset.pattern.permute.xlu0 0
        %5352 = vperm.xlu0 %5351, %v5306
        %v5353 = vpop.permute.xlu0 %5352
        %5356 = vset.pattern.permute.xlu0 0
        %5357 = vperm.xlu0 %5356, %v5307
        %v5358 = vpop.permute.xlu0 %5357
        %v5368 = vunpack.c.l.b16 %v5292
        %v5369 = vunpack.c.l.b16 %v5293
        %v5370 = vunpack.c.l.b16 %v5294
        %v5371 = vunpack.c.l.b16 %v5295
        %v5372 = vunpack.c.l.b16 %v5296
        %v5373 = vunpack.c.l.b16 %v5297
        %v5374 = vunpack.c.l.b16 %v5298
        %v5375 = vunpack.c.l.b16 %v5299
        %v5376 = vpack.c.b16 %v5369, %v5368
        %v5377 = vpack.c.b16 %v5371, %v5370
        %v5378 = vpack.c.b16 %v5373, %v5372
        %v5379 = vpack.c.b16 %v5375, %v5374
        %v5381 = vsel %vm2970, %v5376, 0
        %v5384 = vsel %vm2970, %v5377, 0
        %v5387 = vsel %vm2970, %v5378, 0
        %v5390 = vsel %vm2970, %v5379, 0
        %5392 = vmatprep.subr.bf16.mxu0 0
        %5393 = vmatpush1.bf16.msra.mxu0 %v5316
        %5394 = vmatprep.subr.bf16.mxu0 0
        %5395 = vmatpush1.bf16.msra.mxu0 %v5317
        %5396 = vmatprep.subr.bf16.mxu0 0
        %5397 = vmatpush1.bf16.msra.mxu0 %v5318
        %5398 = vmatprep.subr.bf16.mxu0 0
        %5399 = vmatpush1.bf16.msra.mxu0 %v5319
        %5400 = vmatprep.subr.bf16.mxu0 0
        %5401 = vmatpush1.bf16.msra.mxu0 0
        %5402 = vmatprep.subr.bf16.mxu0 0
        %5403 = vmatpush1.bf16.msra.mxu0 0
        %5404 = vmatprep.subr.bf16.mxu0 0
        %5405 = vmatpush1.bf16.msra.mxu0 0
        %5406 = vmatprep.subr.bf16.mxu0 0
        %5407 = vmatpush1.bf16.msra.mxu0 0
        %5408 = vmatprep.subr.bf16.mxu0 0
        %5409 = vmatpush1.bf16.msra.mxu0 0
        %5410 = vmatprep.subr.bf16.mxu0 0
        %5411 = vmatpush1.bf16.msra.mxu0 0
        %5412 = vmatprep.subr.bf16.mxu0 0
        %5413 = vmatpush1.bf16.msra.mxu0 0
        %5414 = vmatprep.subr.bf16.mxu0 0
        %5415 = vmatpush1.bf16.msra.mxu0 0
        %5416 = vmatprep.subr.bf16.mxu0 0
        %5417 = vmatpush1.bf16.msra.mxu0 0
        %5418 = vmatprep.subr.bf16.mxu0 0
        %5419 = vmatpush1.bf16.msra.mxu0 0
        %5420 = vmatprep.subr.bf16.mxu0 0
        %5421 = vmatpush1.bf16.msra.mxu0 0
        %5422 = vmatprep.subr.bf16.mxu0 0
        %5423 = vmatpush1.bf16.msra.mxu0 0
        %5424 = vmatprep.mubr.bf16.mxu0 0
        %5425 = vmatmul.mubr.bf16.gmra.mrb[0].mxu0 %v5381
        %v5426 = vpop.f32.mrb[0].mxu0
        %v5427 = vadd.f32 %v5323, %v5426
        %v5428 = vpop.f32.mrb[0].mxu0
        %v5429 = vpop.f32.mrb[0].mxu0
        %v5430 = vadd.f32 %v5328, %v5429
        %v5431 = vpop.f32.mrb[0].mxu0
        %5432 = vmatprep.mubr.bf16.mxu0 0
        %5433 = vmatmul.mubr.bf16.gmra.mrb[0].mxu0 %v5384
        %v5434 = vpop.f32.mrb[0].mxu0
        %v5435 = vadd.f32 %v5333, %v5434
        %v5436 = vpop.f32.mrb[0].mxu0
        %v5437 = vpop.f32.mrb[0].mxu0
        %v5438 = vadd.f32 %v5338, %v5437
        %v5439 = vpop.f32.mrb[0].mxu0
        %5440 = vmatprep.mubr.bf16.mxu0 0
        %5441 = vmatmul.mubr.bf16.gmra.mrb[0].mxu0 %v5387
        %v5442 = vpop.f32.mrb[0].mxu0
        %v5443 = vadd.f32 %v5343, %v5442
        %v5444 = vpop.f32.mrb[0].mxu0
        %v5445 = vpop.f32.mrb[0].mxu0
        %v5446 = vadd.f32 %v5348, %v5445
        %v5447 = vpop.f32.mrb[0].mxu0
        %5448 = vmatprep.mubr.bf16.mxu0 0
        %5449 = vmatmul.mubr.bf16.gmra.mrb[0].mxu0 %v5390
        %v5450 = vpop.f32.mrb[0].mxu0
        %v5451 = vadd.f32 %v5353, %v5450
        %v5452 = vpop.f32.mrb[0].mxu0
        %v5453 = vpop.f32.mrb[0].mxu0
        %v5454 = vadd.f32 %v5358, %v5453
        %v5455 = vpop.f32.mrb[0].mxu0
        %5456 = vdwg.mxu0
        %5457 = vst.msk [vmem:[%s983] sm:$0xff] %vm2970, %v5427
        %5458 = vst.msk [vmem:[%s983 + $0x8] sm:$0xff] %vm2970, %v5430
        %5459 = vst.msk [vmem:[%s983 + $0x10] sm:$0xff] %vm2970, %v5435
        %5460 = vst.msk [vmem:[%s983 + $0x18] sm:$0xff] %vm2970, %v5438
        %5461 = vst.msk [vmem:[%s983 + $0x20] sm:$0xff] %vm2970, %v5443
        %5462 = vst.msk [vmem:[%s983 + $0x28] sm:$0xff] %vm2970, %v5446
        %5463 = vst.msk [vmem:[%s983 + $0x30] sm:$0xff] %vm2970, %v5451
        %5464 = vst.msk [vmem:[%s983 + $0x38] sm:$0xff] %vm2970, %v5454
        %v5465 = vxor.u32 %v5427, 2147483648
        %v5466 = vxor.u32 %v5430, 2147483648
        %v5467 = vxor.u32 %v5435, 2147483648
        %v5468 = vxor.u32 %v5438, 2147483648
        %v5469 = vxor.u32 %v5443, 2147483648
        %v5470 = vxor.u32 %v5446, 2147483648
        %v5471 = vxor.u32 %v5451, 2147483648
        %v5472 = vxor.u32 %v5454, 2147483648
        %v5473 = vmul.f32 %v5465, 1.442695
        %v5474 = vpow.pop %v5473
        %v5475 = vmul.f32 %v5466, 1.442695
        %v5476 = vpow.pop %v5475
        %v5477 = vmul.f32 %v5467, 1.442695
        %v5478 = vpow.pop %v5477
        %v5479 = vmul.f32 %v5468, 1.442695
        %v5480 = vpow.pop %v5479
        %v5481 = vmul.f32 %v5469, 1.442695
        %v5482 = vpow.pop %v5481
        %v5483 = vmul.f32 %v5470, 1.442695
        %v5484 = vpow.pop %v5483
        %v5485 = vmul.f32 %v5471, 1.442695
        %v5486 = vpow.pop %v5485
        %v5487 = vmul.f32 %v5472, 1.442695
        %v5488 = vpow.pop %v5487
        %v5489 = vadd.f32 %v5474, 1.0
        %v5490 = vadd.f32 %v5476, 1.0
        %v5491 = vadd.f32 %v5478, 1.0
        %v5492 = vadd.f32 %v5480, 1.0
        %v5493 = vadd.f32 %v5482, 1.0
        %v5494 = vadd.f32 %v5484, 1.0
        %v5495 = vadd.f32 %v5486, 1.0
        %v5496 = vadd.f32 %v5488, 1.0
        %v5497 = vrcp.pop %v5489
        %v5498 = vmul.f32 1.0, %v5497
        %v5499 = vrcp.pop %v5490
        %v5500 = vmul.f32 1.0, %v5499
        %v5501 = vrcp.pop %v5491
        %v5502 = vmul.f32 1.0, %v5501
        %v5503 = vrcp.pop %v5492
        %v5504 = vmul.f32 1.0, %v5503
        %v5505 = vrcp.pop %v5493
        %v5506 = vmul.f32 1.0, %v5505
        %v5507 = vrcp.pop %v5494
        %v5508 = vmul.f32 1.0, %v5507
        %v5509 = vrcp.pop %v5495
        %v5510 = vmul.f32 1.0, %v5509
        %v5511 = vrcp.pop %v5496
        %v5512 = vmul.f32 1.0, %v5511
        %5513 = vst.msk [vmem:[%s990] sm:$0xff] %vm2970, %v5498
        %5514 = vst.msk [vmem:[%s990 + $0x8] sm:$0xff] %vm2970, %v5500
        %5515 = vst.msk [vmem:[%s990 + $0x10] sm:$0xff] %vm2970, %v5502
        %5516 = vst.msk [vmem:[%s990 + $0x18] sm:$0xff] %vm2970, %v5504
        %5517 = vst.msk [vmem:[%s990 + $0x20] sm:$0xff] %vm2970, %v5506
        %5518 = vst.msk [vmem:[%s990 + $0x28] sm:$0xff] %vm2970, %v5508
        %5519 = vst.msk [vmem:[%s990 + $0x30] sm:$0xff] %vm2970, %v5510
        %5520 = vst.msk [vmem:[%s990 + $0x38] sm:$0xff] %vm2970, %v5512
        %s5521 = sand.u32 %s747, 1
        %s5522 = scalar_lea.sflag [#allocation5], %s5521
        %s5523 = sand.u32 %s747, 1
        %s5524 = smul.addr %s5523, 64
        %s5525 = scalar_lea.vmem [#allocation4], %s5524
        %s5526 = sand.u32 %s773, 1
        %s5527 = scalar_lea.sflag [#allocation7], %s5526
        %s5528 = sand.u32 %s773, 1
        %s5529 = smul.addr %s5528, 64
        %s5530 = scalar_lea.vmem [#allocation6], %s5529
        // Predicated region
        $region145: #{tpu_custom_call.1} parent=143 // pred_check
          %p5531 = pneg %p757
        $region146: #{tpu_custom_call.1} parent=143 // pred_check_branch
          %5533 = sbr.rel (%p5531) target = $region148
        $region147: #{tpu_custom_call.1} parent=143 // pred_region
          %s5535 = ssub.s32 1024, 1024
          %5536 = vsyncadd %s5522, %s5535
          %s5537 = smul.addr %s83, 8
          %s5538 = smul.addr %s5537, 128
          %s5539 = scalar_lea.hbm %s63, %s5538
          %s5540 = sshll.u32 %s5525, 4
          %s5541 = int_to_ptr.vmem [resolvable:$true] %s5540
          %5546 = dma.vmem_to_hbm [thread:$0]  %s5541, 1024, %s5539, %s5522, 128, 128, 8
        $region148: #{tpu_custom_call.1} parent=143 // pred_fallthru
          _
        // Predicated region
        $region149: #{tpu_custom_call.1} parent=143 // pred_check
          %p5547 = pneg %p783
        $region150: #{tpu_custom_call.1} parent=143 // pred_check_branch
          %5549 = sbr.rel (%p5547) target = $region152
        $region151: #{tpu_custom_call.1} parent=143 // pred_region
          %s5551 = ssub.s32 1024, 1024
          %5552 = vsyncadd %s5527, %s5551
          %s5553 = smul.addr %s83, 8
          %s5554 = smul.addr %s5553, 128
          %s5555 = scalar_lea.hbm %s65, %s5554
          %s5556 = sshll.u32 %s5530, 4
          %s5557 = int_to_ptr.vmem [resolvable:$true] %s5556
          %5562 = dma.vmem_to_hbm [thread:$0]  %s5557, 1024, %s5555, %s5527, 128, 128, 8
        $region152: #{tpu_custom_call.1} parent=143 // pred_fallthru
          _
      $region144: #{tpu_custom_call.1} parent=5 // pred_fallthru
        _
      %p5563 = scmp.le.s32.totalorder 2, %s78
      // Predicated region
      $region153: #{tpu_custom_call.1} parent=5 // pred_check
        %p5564 = pneg %p5563
      $region154: #{tpu_custom_call.1} parent=5 // pred_check_branch
        %5566 = sbr.rel (%p5564) target = $region156
      $region155: #{tpu_custom_call.1} parent=5 // pred_region
        %s5567 = ssub.s32 %s78, 2
        // Predicated region
        $region157: #{tpu_custom_call.1} parent=155 // pred_check
          %p5568 = pneg %p763
        $region158: #{tpu_custom_call.1} parent=155 // pred_check_branch
          %5570 = sbr.rel (%p5568) target = $region160
        $region159: #{tpu_custom_call.1} parent=155 // pred_region
          %s5571 = sand.u32 %s748, 1
          %s5572 = scalar_lea.sflag [#allocation5], %s5571
          %s5573 = sand.u32 %s748, 1
          %s5574 = smul.addr %s5573, 64
          %s5575 = scalar_lea.vmem [#allocation4], %s5574
          %5576 = dma.done %s5572, 1024
        $region160: #{tpu_custom_call.1} parent=155 // pred_fallthru
          _
        // Predicated region
        $region161: #{tpu_custom_call.1} parent=155 // pred_check
          %p5577 = pneg %p789
        $region162: #{tpu_custom_call.1} parent=155 // pred_check_branch
          %5579 = sbr.rel (%p5577) target = $region164
        $region163: #{tpu_custom_call.1} parent=155 // pred_region
          %s5580 = sand.u32 %s774, 1
          %s5581 = scalar_lea.sflag [#allocation7], %s5580
          %s5582 = sand.u32 %s774, 1
          %s5583 = smul.addr %s5582, 64
          %s5584 = scalar_lea.vmem [#allocation6], %s5583
          %5585 = dma.done %s5581, 1024
        $region164: #{tpu_custom_call.1} parent=155 // pred_fallthru
          _
      $region156: #{tpu_custom_call.1} parent=5 // pred_fallthru
        _
    $region6: #{tpu_custom_call.1} parent=1 // loop_footer
      %s82 = sadd.s32 1, %s78
    $region7: #{tpu_custom_call.1} parent=1 // loop_footer_branch
      %77 = sbr.rel target = $region3
    $region8: #{tpu_custom_call.1} parent=1 // loop_exit
      _
    %5586 = vsyncpa [#allocation5], 1
    %s5587 = scalar_lea.sflag [#allocation5], 1
    %5588 = vsyncpa %s5587, 1
    %5589 = vsyncpa [#allocation7], 1
    %s5590 = scalar_lea.sflag [#allocation7], 1
    %5591 = vsyncpa %s5590, 1

</llo_original>
